<compile_context>
chip_gen: v6e
topology: v6e:2x2x1
jax: 0.10.0
libtpu: 0.0.40
codegen_flags: <defaults>
</compile_context>

<pallas_src>
import functools

import jax
import jax.numpy as jnp
from jax.experimental import pallas as pl
from jax.experimental.pallas import tpu as pltpu

EXPANSION = 4
BN_EPS = 1e-5


def _bottleneck_kernel(*refs, stride, has_proj, off, split_ky):
    if has_proj:
        (x_ref, w1_ref, b1_ref, w2_ref, b2_ref, w3_ref, b3_ref,
         wsc_ref, bsc_ref, o_ref, pad_ref) = refs
    else:
        (x_ref, w1_ref, b1_ref, w2_ref, b2_ref, w3_ref, b3_ref,
         o_ref, pad_ref) = refs
        wsc_ref = bsc_ref = None

    _, H, W, Cin = x_ref.shape
    P = w1_ref.shape[1]
    Cout = w3_ref.shape[1]
    _, Ho, Wo, _ = o_ref.shape
    HW = H * W
    M = Ho * Wo
    cdt = x_ref.dtype                                   # bf16 compute dtype
    pad_rows = pad_ref.shape[0]

    # ---- conv1 (1x1, BN scale pre-folded) + bias + relu ------------------
    h1 = jnp.dot(x_ref[0].reshape(HW, Cin), w1_ref[...],
                 preferred_element_type=jnp.float32)    # (HW, P) f32
    out1 = jnp.maximum(h1 + b1_ref[...], 0.0).astype(cdt)

    # ---- conv2 (3x3, pad=1) via flat-shift im2col ------------------------
    # Zero the scratch border rows (cheap; re-zeroed every step so the kernel
    # stays correct when the batch grid axis is split across TensorCores),
    # then store the flat activation at an 8-aligned sublane offset.  Each of
    # the 9 taps is a contiguous shifted window of the scratch; out-of-image
    # rows read the zeroed border, so only the 6 column (dx) taps need a
    # select, driven by a single (M, 1) iota predicate.
    pad_ref[pl.ds(0, off), :] = jnp.zeros((off, P), pad_ref.dtype)
    tail = pad_rows - (off + HW)
    pad_ref[pl.ds(off + HW, tail), :] = jnp.zeros((tail, P), pad_ref.dtype)
    pad_ref[pl.ds(off, HW), :] = out1

    col = jax.lax.broadcasted_iota(jnp.int32, (Ho, Wo, 1), 1).reshape(M, 1)
    if stride != 1:
        col = col * stride                              # original column index

    def tap(dy, dx):
        if stride == 1 and dy == 0 and dx == 0:
            t = out1
        else:
            t = pad_ref[pl.ds(off + dy * W + dx, HW), :]        # (HW, P) bf16
            if stride != 1:
                # decimate to output resolution before masking / concat
                t = jax.lax.slice(
                    t.reshape(H, W, P), (0, 0, 0),
                    (stride * (Ho - 1) + 1, stride * (Wo - 1) + 1, P),
                    (stride, stride, 1)).reshape(M, P)
        if dx < 0:
            t = jnp.where(col >= -dx, t, jnp.zeros_like(t))
        elif dx > 0:
            t = jnp.where(col < W - dx, t, jnp.zeros_like(t))
        return t

    if split_ky:
        # 3 accumulating K=3P matmuls -> 3x smaller im2col live buffer (v7x).
        h2 = None
        for ky in range(3):
            lhs = jnp.concatenate([tap(ky - 1, dx) for dx in (-1, 0, 1)],
                                  axis=-1)                       # (M, 3P)
            part = jnp.dot(lhs, w2_ref[pl.ds(ky * 3 * P, 3 * P), :],
                           preferred_element_type=jnp.float32)
            h2 = part if h2 is None else h2 + part
    else:
        patches = jnp.concatenate(
            [tap(ky - 1, dx) for ky in range(3) for dx in (-1, 0, 1)],
            axis=-1)                                             # (M, 9P)
        h2 = jnp.dot(patches, w2_ref[...],
                     preferred_element_type=jnp.float32)         # (M, P) f32
    out2 = jnp.maximum(h2 + b2_ref[...], 0.0).astype(cdt)

    # ---- conv3 (1x1) + bias, shortcut (late), residual add, relu ---------
    main = jnp.dot(out2, w3_ref[...],
                   preferred_element_type=jnp.float32) + b3_ref[...]
    if has_proj:
        if stride == 1:
            xs = x_ref[0].reshape(HW, Cin)
        else:
            xs = jax.lax.slice(
                x_ref[0], (0, 0, 0),
                (stride * (Ho - 1) + 1, stride * (Wo - 1) + 1, Cin),
                (stride, stride, 1)).reshape(M, Cin)
        sc = jnp.dot(xs, wsc_ref[...],
                     preferred_element_type=jnp.float32) + bsc_ref[...]
    else:
        # identity: wrapper asserts stride == 1 and Cin == Cout
        sc = x_ref[0].reshape(HW, Cin).astype(jnp.float32)
    out = jnp.maximum(main + sc, 0.0)
    o_ref[0] = out.reshape(Ho, Wo, Cout).astype(o_ref.dtype)


def _vmem_limit_bytes():
    # Never hand Mosaic the entire per-core VMEM (64 MiB on v7x); derive a
    # limit from the device and leave headroom for internal scratch.
    try:
        cap = pltpu.get_tpu_info().vmem_capacity_bytes
        return min(64 * 1024 * 1024, (cap * 3) // 4)
    except Exception:
        return None   # fall back to the compiler default


def bottleneck_forward_nhwc(x_nhwc, params, *, stride, has_proj, split_ky=None):
    """NHWC in -> NHWC bf16 out.  Chain this across blocks to avoid relayouts."""
    x = x_nhwc.astype(jnp.bfloat16)
    N, H, W, Cin = x.shape
    P = params["w1"].shape[1]
    Cout = params["w3"].shape[1]
    Ho = (H + 2 - 3) // stride + 1
    Wo = (W + 2 - 3) // stride + 1

    if not has_proj:
        assert stride == 1 and Cin == Cout, (
            "identity shortcut requires stride == 1 and Cin == Cout")
    if split_ky is None:
        split_ky = P >= 128     # K=3P still feeds the MXU; big VMEM win on v7x

    HW = H * W
    OFF = -(-(W + 1) // 8) * 8                     # 8-aligned interior offset
    PAD_ROWS = -(-(OFF + HW + W + 1) // 8) * 8     # covers all shifted reads

    def full_spec(a):
        nd = a.ndim
        return pl.BlockSpec(a.shape, lambda n, _nd=nd: (0,) * _nd)

    args = [x, params["w1"], params["b1"], params["w2"], params["b2"],
            params["w3"], params["b3"]]
    in_specs = ([pl.BlockSpec((1, H, W, Cin), lambda n: (n, 0, 0, 0))]
                + [full_spec(a) for a in args[1:]])
    if has_proj:
        extra = [params["wsc"], params["bsc"]]
        args += extra
        in_specs += [full_spec(a) for a in extra]

    kernel = functools.partial(_bottleneck_kernel, stride=stride,
                               has_proj=has_proj, off=OFF, split_ky=split_ky)

    return pl.pallas_call(
        kernel,
        out_shape=jax.ShapeDtypeStruct((N, Ho, Wo, Cout), jnp.bfloat16),
        grid_spec=pltpu.PrefetchScalarGridSpec(
            num_scalar_prefetch=0,
            grid=(N,),
            in_specs=in_specs,
            out_specs=pl.BlockSpec((1, Ho, Wo, Cout), lambda n: (n, 0, 0, 0)),
            scratch_shapes=[pltpu.VMEM((PAD_ROWS, P), jnp.bfloat16)],
        ),
        compiler_params=pltpu.CompilerParams(
            dimension_semantics=("parallel",),
            vmem_limit_bytes=_vmem_limit_bytes()),
    )(*args)


def bottleneck_forward(x_nchw, params, *, stride, has_proj, split_ky=None):
    """PyTorch-layout compat wrapper: (N,Cin,H,W) f32 -> (N,Cout,Ho,Wo) f32."""
    x = jnp.transpose(x_nchw, (0, 2, 3, 1))
    out = bottleneck_forward_nhwc(x, params, stride=stride, has_proj=has_proj,
                                  split_ky=split_ky)
    return jnp.transpose(out, (0, 3, 1, 2)).astype(jnp.float32)


# -------------------------- parameter construction --------------------------

def _fold_bn(gamma, beta, mean, var):
    scale = gamma / jnp.sqrt(var + BN_EPS)
    bias = beta - mean * scale
    return scale.reshape(1, -1), bias.reshape(1, -1)


def make_params(key, in_planes, planes, stride):
    cout = EXPANSION * planes
    keys = jax.random.split(key, 8)

    def bn_raw(k, c):
        k1, k2, k3, k4 = jax.random.split(k, 4)
        gamma = jax.random.uniform(k1, (c,), minval=0.5, maxval=1.5)
        beta = 0.1 * jax.random.normal(k2, (c,))
        mean = 0.1 * jax.random.normal(k3, (c,))
        var = jax.random.uniform(k4, (c,), minval=0.5, maxval=1.5)
        return gamma, beta, mean, var

    # Conv weights in PyTorch OIHW layout (reference uses these directly).
    w1_oihw = 0.1 * jax.random.normal(keys[0], (planes, in_planes, 1, 1))
    w2_oihw = 0.1 * jax.random.normal(keys[1], (planes, planes, 3, 3))
    w3_oihw = 0.1 * jax.random.normal(keys[2], (cout, planes, 1, 1))
    wsc_oihw = 0.1 * jax.random.normal(keys[3], (cout, in_planes, 1, 1))

    s1, b1 = _fold_bn(*bn_raw(keys[4], planes))
    s2, b2 = _fold_bn(*bn_raw(keys[5], planes))
    s3, b3 = _fold_bn(*bn_raw(keys[6], cout))
    ssc, bsc = _fold_bn(*bn_raw(keys[7], cout))

    bf16 = jnp.bfloat16
    # im2col weight for the 3x3 conv: (ky, kx, cin, cout) -> (9*cin, cout)
    w2_im2col = jnp.transpose(w2_oihw, (2, 3, 1, 0)).reshape(9 * planes, planes)

    # BN scale folded into the weight columns (output channels); only the f32
    # bias add stays in-kernel.
    kernel_params = dict(
        w1=(jnp.transpose(w1_oihw[:, :, 0, 0]) * s1).astype(bf16),     # (Cin, P)
        w2=(w2_im2col * s2).astype(bf16),                              # (9P, P)
        w3=(jnp.transpose(w3_oihw[:, :, 0, 0]) * s3).astype(bf16),     # (P, Cout)
        wsc=(jnp.transpose(wsc_oihw[:, :, 0, 0]) * ssc).astype(bf16),  # (Cin, Cout)
        b1=b1, b2=b2, b3=b3, bsc=bsc,
    )
    ref_params = dict(w1=w1_oihw, w2=w2_oihw, w3=w3_oihw, wsc=wsc_oihw,
                      s1=s1, b1=b1, s2=s2, b2=b2, s3=s3, b3=b3,
                      ssc=ssc, bsc=bsc)
    return kernel_params, ref_params


# ----------------------------- pure-JAX reference ----------------------------
# Mirrors the kernel's precision policy: BN scale folded into bf16 weights,
# bf16 conv inputs, f32 accumulation, bias / relu / residual add in f32.

def reference_forward(x_f32, p, *, stride, has_proj):
    bf16 = jnp.bfloat16
    x = x_f32.astype(bf16)

    def conv_bn(h, w_oihw, scale, bias, stride=1, padding=0):
        w = (w_oihw * scale.reshape(-1, 1, 1, 1)).astype(bf16)
        y = jax.lax.conv_general_dilated(
            h.astype(bf16), w, window_strides=(stride, stride),
            padding=[(padding, padding), (padding, padding)],
            dimension_numbers=("NCHW", "OIHW", "NCHW"),
            preferred_element_type=jnp.float32)
        return y + bias.reshape(1, -1, 1, 1)

    out = jax.nn.relu(conv_bn(x, p["w1"], p["s1"], p["b1"]))
    out = jax.nn.relu(conv_bn(out, p["w2"], p["s2"], p["b2"],
                              stride=stride, padding=1))
    out = conv_bn(out, p["w3"], p["s3"], p["b3"])
    if has_proj:
        sc = conv_bn(x, p["wsc"], p["ssc"], p["bsc"], stride=stride)
    else:
        sc = x.astype(jnp.float32)
    return jax.nn.relu(out + sc)


# ------------------------------------ main -----------------------------------

if __name__ == "__main__":
    key = jax.random.PRNGKey(0)

    # (n, in_planes, planes, h, w, stride, split_ky)
    cases = [
        (2, 4, 4, 16, 16, 1, False),   # projection shortcut, fused K=9P conv2
        (2, 4, 4, 16, 16, 1, True),    # projection shortcut, split-ky conv2 (v7x path)
        (2, 16, 4, 16, 16, 1, False),  # identity shortcut
    ]
    for idx, (n, in_planes, planes, h, w, stride, split_ky) in enumerate(cases):
        has_proj = (stride != 1) or (in_planes != EXPANSION * planes)
        kx, kp = jax.random.split(jax.random.fold_in(key, idx))
        x = jax.random.normal(kx, (n, in_planes, h, w), dtype=jnp.float32)
        kernel_params, ref_params = make_params(kp, in_planes, planes, stride)

        out = bottleneck_forward(x, kernel_params, stride=stride,
                                 has_proj=has_proj, split_ky=split_ky)
        out = jax.block_until_ready(out)

        ref = reference_forward(x, ref_params, stride=stride, has_proj=has_proj)
        ref = jax.block_until_ready(ref)

        ho = (h + 2 - 3) // stride + 1
        wo = (w + 2 - 3) // stride + 1
        assert out.shape == (n, EXPANSION * planes, ho, wo)
        assert jnp.allclose(out, ref, atol=3e-2, rtol=3e-2), (
            f"case {idx}: max abs diff = {jnp.max(jnp.abs(out - ref))}")

    print("KERNEL_OK")
</pallas_src>

<mosaic_0001>
module attributes {stable_mosaic.version = 11 : i64} {
  func.func @_bottleneck_kernel(%arg0: i32, %arg1: memref<1x16x16x4xbf16, #tpu.memory_space<vmem>>, %arg2: memref<4x4xbf16, #tpu.memory_space<vmem>>, %arg3: memref<1x4xf32, #tpu.memory_space<vmem>>, %arg4: memref<36x4xbf16, #tpu.memory_space<vmem>>, %arg5: memref<1x4xf32, #tpu.memory_space<vmem>>, %arg6: memref<4x16xbf16, #tpu.memory_space<vmem>>, %arg7: memref<1x16xf32, #tpu.memory_space<vmem>>, %arg8: memref<4x16xbf16, #tpu.memory_space<vmem>>, %arg9: memref<1x16xf32, #tpu.memory_space<vmem>>, %arg10: memref<1x16x16x16xbf16, #tpu.memory_space<vmem>>, %arg11: memref<304x4xbf16, #tpu.memory_space<vmem>>) attributes {dimension_semantics = [#tpu.dimension_semantics<parallel>], iteration_bounds = array<i64: 2>, scalar_prefetch = 0 : i64, scratch_operands = 1 : i64, tpu.core_type = #tpu.core_type<tc>, window_params = [{transform_indices = @transform_0, window_bounds = array<i64: 1, 16, 16, 4>}, {pipeline_mode = #tpu.pipeline_mode<synchronous>, transform_indices = @transform_1, window_bounds = array<i64: 4, 4>}, {pipeline_mode = #tpu.pipeline_mode<synchronous>, transform_indices = @transform_2, window_bounds = array<i64: 1, 4>}, {pipeline_mode = #tpu.pipeline_mode<synchronous>, transform_indices = @transform_3, window_bounds = array<i64: 36, 4>}, {pipeline_mode = #tpu.pipeline_mode<synchronous>, transform_indices = @transform_4, window_bounds = array<i64: 1, 4>}, {pipeline_mode = #tpu.pipeline_mode<synchronous>, transform_indices = @transform_5, window_bounds = array<i64: 4, 16>}, {pipeline_mode = #tpu.pipeline_mode<synchronous>, transform_indices = @transform_6, window_bounds = array<i64: 1, 16>}, {pipeline_mode = #tpu.pipeline_mode<synchronous>, transform_indices = @transform_7, window_bounds = array<i64: 4, 16>}, {pipeline_mode = #tpu.pipeline_mode<synchronous>, transform_indices = @transform_8, window_bounds = array<i64: 1, 16>}, {transform_indices = @transform_9, window_bounds = array<i64: 1, 16, 16, 16>}]} {
    %c0 = arith.constant 0 : index
    %c0_0 = arith.constant 0 : index
    %c0_1 = arith.constant 0 : index
    %c0_2 = arith.constant 0 : index
    %0 = vector.load %arg1[%c0, %c0_0, %c0_1, %c0_2] : memref<1x16x16x4xbf16, #tpu.memory_space<vmem>>, vector<1x16x16x4xbf16>
    %1 = vector.shape_cast %0 : vector<1x16x16x4xbf16> to vector<16x16x4xbf16>
    %2 = vector.shape_cast %1 : vector<16x16x4xbf16> to vector<256x4xbf16>
    %c0_3 = arith.constant 0 : index
    %c0_4 = arith.constant 0 : index
    %3 = vector.load %arg2[%c0_3, %c0_4] : memref<4x4xbf16, #tpu.memory_space<vmem>>, vector<4x4xbf16>
    %cst = arith.constant dense<0.000000e+00> : vector<256x4xf32>
    %4 = tpu.matmul %2, %3, %cst {dimension_numbers = #tpu.dot_dimension_numbers<[1], [0], [0], [1], [0, 0, 1, 1], [], []>} : vector<256x4xbf16>, vector<4x4xbf16>, vector<256x4xf32> -> vector<256x4xf32>
    %c0_5 = arith.constant 0 : index
    %c0_6 = arith.constant 0 : index
    %5 = vector.load %arg3[%c0_5, %c0_6] : memref<1x4xf32, #tpu.memory_space<vmem>>, vector<1x4xf32>
    %6 = vector.broadcast %5 : vector<1x4xf32> to vector<256x4xf32>
    %7 = arith.addf %4, %6 : vector<256x4xf32>
    %cst_7 = arith.constant 0.000000e+00 : f32
    %8 = vector.broadcast %cst_7 : f32 to vector<256x4xf32>
    %9 = arith.maximumf %7, %8 : vector<256x4xf32>
    %10 = arith.truncf %9 : vector<256x4xf32> to vector<256x4xbf16>
    %cst_8 = arith.constant 0.000000e+00 : bf16
    %11 = vector.broadcast %cst_8 : bf16 to vector<24x4xbf16>
    %c0_9 = arith.constant 0 : index
    %c0_10 = arith.constant 0 : index
    %12 = vector.load %arg11[%c0_9, %c0_10] : memref<304x4xbf16, #tpu.memory_space<vmem>>, vector<24x4xbf16>
    tpu.vector_store %arg11[%c0_9, %c0_10], %11 {strides = array<i32>} : memref<304x4xbf16, #tpu.memory_space<vmem>>, vector<24x4xbf16>,
    %cst_11 = arith.constant 0.000000e+00 : bf16
    %13 = vector.broadcast %cst_11 : bf16 to vector<24x4xbf16>
    %c280 = arith.constant 280 : index
    %c0_12 = arith.constant 0 : index
    %14 = vector.load %arg11[%c280, %c0_12] : memref<304x4xbf16, #tpu.memory_space<vmem>>, vector<24x4xbf16>
    tpu.vector_store %arg11[%c280, %c0_12], %13 {strides = array<i32>} : memref<304x4xbf16, #tpu.memory_space<vmem>>, vector<24x4xbf16>,
    %c24 = arith.constant 24 : index
    %c0_13 = arith.constant 0 : index
    %15 = vector.load %arg11[%c24, %c0_13] : memref<304x4xbf16, #tpu.memory_space<vmem>>, vector<256x4xbf16>
    tpu.vector_store %arg11[%c24, %c0_13], %10 {strides = array<i32>} : memref<304x4xbf16, #tpu.memory_space<vmem>>, vector<256x4xbf16>,
    %16 = tpu.iota {dimensions = array<i32: 1>} : vector<16x16x1xi32>
    %17 = vector.shape_cast %16 : vector<16x16x1xi32> to vector<256x1xi32>
    %c7 = arith.constant 7 : index
    %c0_14 = arith.constant 0 : index
    %18 = vector.load %arg11[%c7, %c0_14] : memref<304x4xbf16, #tpu.memory_space<vmem>>, vector<256x4xbf16>
    %c1_i32 = arith.constant 1 : i32
    %19 = vector.broadcast %c1_i32 : i32 to vector<256x1xi32>
    %20 = arith.cmpi sge, %17, %19 : vector<256x1xi32>
    %cst_15 = arith.constant 0.000000e+00 : bf16
    %21 = vector.broadcast %cst_15 : bf16 to vector<256x4xbf16>
    %22 = vector.shape_cast %20 : vector<256x1xi1> to vector<256x1xi1>
    %23 = vector.broadcast %22 : vector<256x1xi1> to vector<256x4xi1>
    %24 = arith.select %23, %18, %21 : vector<256x4xi1>, vector<256x4xbf16>
    %c8 = arith.constant 8 : index
    %c0_16 = arith.constant 0 : index
    %25 = vector.load %arg11[%c8, %c0_16] : memref<304x4xbf16, #tpu.memory_space<vmem>>, vector<256x4xbf16>
    %c9 = arith.constant 9 : index
    %c0_17 = arith.constant 0 : index
    %26 = vector.load %arg11[%c9, %c0_17] : memref<304x4xbf16, #tpu.memory_space<vmem>>, vector<256x4xbf16>
    %c15_i32 = arith.constant 15 : i32
    %27 = vector.broadcast %c15_i32 : i32 to vector<256x1xi32>
    %28 = arith.cmpi slt, %17, %27 : vector<256x1xi32>
    %cst_18 = arith.constant 0.000000e+00 : bf16
    %29 = vector.broadcast %cst_18 : bf16 to vector<256x4xbf16>
    %30 = vector.shape_cast %28 : vector<256x1xi1> to vector<256x1xi1>
    %31 = vector.broadcast %30 : vector<256x1xi1> to vector<256x4xi1>
    %32 = arith.select %31, %26, %29 : vector<256x4xi1>, vector<256x4xbf16>
    %c23 = arith.constant 23 : index
    %c0_19 = arith.constant 0 : index
    %33 = vector.load %arg11[%c23, %c0_19] : memref<304x4xbf16, #tpu.memory_space<vmem>>, vector<256x4xbf16>
    %c1_i32_20 = arith.constant 1 : i32
    %34 = vector.broadcast %c1_i32_20 : i32 to vector<256x1xi32>
    %35 = arith.cmpi sge, %17, %34 : vector<256x1xi32>
    %cst_21 = arith.constant 0.000000e+00 : bf16
    %36 = vector.broadcast %cst_21 : bf16 to vector<256x4xbf16>
    %37 = vector.shape_cast %35 : vector<256x1xi1> to vector<256x1xi1>
    %38 = vector.broadcast %37 : vector<256x1xi1> to vector<256x4xi1>
    %39 = arith.select %38, %33, %36 : vector<256x4xi1>, vector<256x4xbf16>
    %c25 = arith.constant 25 : index
    %c0_22 = arith.constant 0 : index
    %40 = vector.load %arg11[%c25, %c0_22] : memref<304x4xbf16, #tpu.memory_space<vmem>>, vector<256x4xbf16>
    %c15_i32_23 = arith.constant 15 : i32
    %41 = vector.broadcast %c15_i32_23 : i32 to vector<256x1xi32>
    %42 = arith.cmpi slt, %17, %41 : vector<256x1xi32>
    %cst_24 = arith.constant 0.000000e+00 : bf16
    %43 = vector.broadcast %cst_24 : bf16 to vector<256x4xbf16>
    %44 = vector.shape_cast %42 : vector<256x1xi1> to vector<256x1xi1>
    %45 = vector.broadcast %44 : vector<256x1xi1> to vector<256x4xi1>
    %46 = arith.select %45, %40, %43 : vector<256x4xi1>, vector<256x4xbf16>
    %c39 = arith.constant 39 : index
    %c0_25 = arith.constant 0 : index
    %47 = vector.load %arg11[%c39, %c0_25] : memref<304x4xbf16, #tpu.memory_space<vmem>>, vector<256x4xbf16>
    %c1_i32_26 = arith.constant 1 : i32
    %48 = vector.broadcast %c1_i32_26 : i32 to vector<256x1xi32>
    %49 = arith.cmpi sge, %17, %48 : vector<256x1xi32>
    %cst_27 = arith.constant 0.000000e+00 : bf16
    %50 = vector.broadcast %cst_27 : bf16 to vector<256x4xbf16>
    %51 = vector.shape_cast %49 : vector<256x1xi1> to vector<256x1xi1>
    %52 = vector.broadcast %51 : vector<256x1xi1> to vector<256x4xi1>
    %53 = arith.select %52, %47, %50 : vector<256x4xi1>, vector<256x4xbf16>
    %c40 = arith.constant 40 : index
    %c0_28 = arith.constant 0 : index
    %54 = vector.load %arg11[%c40, %c0_28] : memref<304x4xbf16, #tpu.memory_space<vmem>>, vector<256x4xbf16>
    %c41 = arith.constant 41 : index
    %c0_29 = arith.constant 0 : index
    %55 = vector.load %arg11[%c41, %c0_29] : memref<304x4xbf16, #tpu.memory_space<vmem>>, vector<256x4xbf16>
    %c15_i32_30 = arith.constant 15 : i32
    %56 = vector.broadcast %c15_i32_30 : i32 to vector<256x1xi32>
    %57 = arith.cmpi slt, %17, %56 : vector<256x1xi32>
    %cst_31 = arith.constant 0.000000e+00 : bf16
    %58 = vector.broadcast %cst_31 : bf16 to vector<256x4xbf16>
    %59 = vector.shape_cast %57 : vector<256x1xi1> to vector<256x1xi1>
    %60 = vector.broadcast %59 : vector<256x1xi1> to vector<256x4xi1>
    %61 = arith.select %60, %55, %58 : vector<256x4xi1>, vector<256x4xbf16>
    %62 = tpu.concatenate %24, %25, %32, %39, %10, %46, %53, %54, %61 in 1 : vector<256x4xbf16>, vector<256x4xbf16>, vector<256x4xbf16>, vector<256x4xbf16>, vector<256x4xbf16>, vector<256x4xbf16>, vector<256x4xbf16>, vector<256x4xbf16>, vector<256x4xbf16> -> vector<256x36xbf16>
    %c0_32 = arith.constant 0 : index
    %c0_33 = arith.constant 0 : index
    %63 = vector.load %arg4[%c0_32, %c0_33] : memref<36x4xbf16, #tpu.memory_space<vmem>>, vector<36x4xbf16>
    %cst_34 = arith.constant dense<0.000000e+00> : vector<256x4xf32>
    %64 = tpu.matmul %62, %63, %cst_34 {dimension_numbers = #tpu.dot_dimension_numbers<[1], [0], [0], [1], [0, 0, 1, 1], [], []>} : vector<256x36xbf16>, vector<36x4xbf16>, vector<256x4xf32> -> vector<256x4xf32>
    %c0_35 = arith.constant 0 : index
    %c0_36 = arith.constant 0 : index
    %65 = vector.load %arg5[%c0_35, %c0_36] : memref<1x4xf32, #tpu.memory_space<vmem>>, vector<1x4xf32>
    %66 = vector.broadcast %65 : vector<1x4xf32> to vector<256x4xf32>
    %67 = arith.addf %64, %66 : vector<256x4xf32>
    %cst_37 = arith.constant 0.000000e+00 : f32
    %68 = vector.broadcast %cst_37 : f32 to vector<256x4xf32>
    %69 = arith.maximumf %67, %68 : vector<256x4xf32>
    %70 = arith.truncf %69 : vector<256x4xf32> to vector<256x4xbf16>
    %c0_38 = arith.constant 0 : index
    %c0_39 = arith.constant 0 : index
    %71 = vector.load %arg6[%c0_38, %c0_39] : memref<4x16xbf16, #tpu.memory_space<vmem>>, vector<4x16xbf16>
    %cst_40 = arith.constant dense<0.000000e+00> : vector<256x16xf32>
    %72 = tpu.matmul %70, %71, %cst_40 {dimension_numbers = #tpu.dot_dimension_numbers<[1], [0], [0], [1], [0, 0, 1, 1], [], []>} : vector<256x4xbf16>, vector<4x16xbf16>, vector<256x16xf32> -> vector<256x16xf32>
    %c0_41 = arith.constant 0 : index
    %c0_42 = arith.constant 0 : index
    %73 = vector.load %arg7[%c0_41, %c0_42] : memref<1x16xf32, #tpu.memory_space<vmem>>, vector<1x16xf32>
    %74 = vector.broadcast %73 : vector<1x16xf32> to vector<256x16xf32>
    %75 = arith.addf %72, %74 : vector<256x16xf32>
    %c0_43 = arith.constant 0 : index
    %c0_44 = arith.constant 0 : index
    %c0_45 = arith.constant 0 : index
    %c0_46 = arith.constant 0 : index
    %76 = vector.load %arg1[%c0_43, %c0_44, %c0_45, %c0_46] : memref<1x16x16x4xbf16, #tpu.memory_space<vmem>>, vector<1x16x16x4xbf16>
    %77 = vector.shape_cast %76 : vector<1x16x16x4xbf16> to vector<16x16x4xbf16>
    %78 = vector.shape_cast %77 : vector<16x16x4xbf16> to vector<256x4xbf16>
    %c0_47 = arith.constant 0 : index
    %c0_48 = arith.constant 0 : index
    %79 = vector.load %arg8[%c0_47, %c0_48] : memref<4x16xbf16, #tpu.memory_space<vmem>>, vector<4x16xbf16>
    %cst_49 = arith.constant dense<0.000000e+00> : vector<256x16xf32>
    %80 = tpu.matmul %78, %79, %cst_49 {dimension_numbers = #tpu.dot_dimension_numbers<[1], [0], [0], [1], [0, 0, 1, 1], [], []>} : vector<256x4xbf16>, vector<4x16xbf16>, vector<256x16xf32> -> vector<256x16xf32>
    %c0_50 = arith.constant 0 : index
    %c0_51 = arith.constant 0 : index
    %81 = vector.load %arg9[%c0_50, %c0_51] : memref<1x16xf32, #tpu.memory_space<vmem>>, vector<1x16xf32>
    %82 = vector.broadcast %81 : vector<1x16xf32> to vector<256x16xf32>
    %83 = arith.addf %80, %82 : vector<256x16xf32>
    %84 = arith.addf %75, %83 : vector<256x16xf32>
    %cst_52 = arith.constant 0.000000e+00 : f32
    %85 = vector.broadcast %cst_52 : f32 to vector<256x16xf32>
    %86 = arith.maximumf %84, %85 : vector<256x16xf32>
    %87 = vector.shape_cast %86 : vector<256x16xf32> to vector<16x16x16xf32>
    %88 = arith.truncf %87 : vector<16x16x16xf32> to vector<16x16x16xbf16>
    %c0_53 = arith.constant 0 : index
    %c0_54 = arith.constant 0 : index
    %c0_55 = arith.constant 0 : index
    %c0_56 = arith.constant 0 : index
    %89 = vector.load %arg10[%c0_53, %c0_54, %c0_55, %c0_56] : memref<1x16x16x16xbf16, #tpu.memory_space<vmem>>, vector<1x16x16x16xbf16>
    %90 = vector.shape_cast %89 : vector<1x16x16x16xbf16> to vector<16x16x16xbf16>
    %91 = vector.shape_cast %88 : vector<16x16x16xbf16> to vector<1x16x16x16xbf16>
    tpu.vector_store %arg10[%c0_53, %c0_54, %c0_55, %c0_56], %91 {strides = array<i32>} : memref<1x16x16x16xbf16, #tpu.memory_space<vmem>>, vector<1x16x16x16xbf16>,
    return
  }
  func.func @transform_0(%arg0: i32) -> (i32, i32, i32, i32) {
    %c0_i32 = arith.constant 0 : i32
    %c0_i32_0 = arith.constant 0 : i32
    %c0_i32_1 = arith.constant 0 : i32
    %c0_i32_2 = arith.constant 0 : i32
    return %arg0, %c0_i32, %c0_i32_0, %c0_i32_1 : i32, i32, i32, i32
  }
  func.func @transform_1(%arg0: i32) -> (i32, i32) {
    %c0_i32 = arith.constant 0 : i32
    %c0_i32_0 = arith.constant 0 : i32
    %c0_i32_1 = arith.constant 0 : i32
    return %c0_i32, %c0_i32_0 : i32, i32
  }
  func.func @transform_2(%arg0: i32) -> (i32, i32) {
    %c0_i32 = arith.constant 0 : i32
    %c0_i32_0 = arith.constant 0 : i32
    %c0_i32_1 = arith.constant 0 : i32
    return %c0_i32, %c0_i32_0 : i32, i32
  }
  func.func @transform_3(%arg0: i32) -> (i32, i32) {
    %c0_i32 = arith.constant 0 : i32
    %c0_i32_0 = arith.constant 0 : i32
    %c0_i32_1 = arith.constant 0 : i32
    return %c0_i32, %c0_i32_0 : i32, i32
  }
  func.func @transform_4(%arg0: i32) -> (i32, i32) {
    %c0_i32 = arith.constant 0 : i32
    %c0_i32_0 = arith.constant 0 : i32
    %c0_i32_1 = arith.constant 0 : i32
    return %c0_i32, %c0_i32_0 : i32, i32
  }
  func.func @transform_5(%arg0: i32) -> (i32, i32) {
    %c0_i32 = arith.constant 0 : i32
    %c0_i32_0 = arith.constant 0 : i32
    %c0_i32_1 = arith.constant 0 : i32
    return %c0_i32, %c0_i32_0 : i32, i32
  }
  func.func @transform_6(%arg0: i32) -> (i32, i32) {
    %c0_i32 = arith.constant 0 : i32
    %c0_i32_0 = arith.constant 0 : i32
    %c0_i32_1 = arith.constant 0 : i32
    return %c0_i32, %c0_i32_0 : i32, i32
  }
  func.func @transform_7(%arg0: i32) -> (i32, i32) {
    %c0_i32 = arith.constant 0 : i32
    %c0_i32_0 = arith.constant 0 : i32
    %c0_i32_1 = arith.constant 0 : i32
    return %c0_i32, %c0_i32_0 : i32, i32
  }
  func.func @transform_8(%arg0: i32) -> (i32, i32) {
    %c0_i32 = arith.constant 0 : i32
    %c0_i32_0 = arith.constant 0 : i32
    %c0_i32_1 = arith.constant 0 : i32
    return %c0_i32, %c0_i32_0 : i32, i32
  }
  func.func @transform_9(%arg0: i32) -> (i32, i32, i32, i32) {
    %c0_i32 = arith.constant 0 : i32
    %c0_i32_0 = arith.constant 0 : i32
    %c0_i32_1 = arith.constant 0 : i32
    %c0_i32_2 = arith.constant 0 : i32
    return %arg0, %c0_i32, %c0_i32_0, %c0_i32_1 : i32, i32, i32, i32
  }
}

</mosaic_0001>

<llo_original>
// kernel: tpu_custom_call.1
$region0: #{tpu_custom_call.1}
  #allocation0 [shape = 'u32[]', space=smem, size = 0x4, offset = 0x4, fixed_abs, tag = 'smem constant byte address 0x4 - core index']
  #allocation1 [shape = 'u32[144,128]{1,0:T(1,128)}', space=vmem, size = 0x12000, scoped, tag = 'internal scratch']
  #allocation2 [shape = 'bf16[304,4]{1,0:T(8,128)(2,1)}', space=vmem, size = 0x13000, scoped, tag = 'scratch operand']
  %s0 = inlined_call_operand.vmem [shape: bf16[2,16,16,4], index: 0, kind: input, shape index: {}]
  %s1 = inlined_call_operand.vmem [shape: bf16[4,4], index: 1, kind: input, shape index: {}]
  %s2 = inlined_call_operand.vmem [shape: f32[1,4], index: 2, kind: input, shape index: {}]
  %s3 = inlined_call_operand.vmem [shape: bf16[36,4], index: 3, kind: input, shape index: {}]
  %s4 = inlined_call_operand.vmem [shape: f32[1,4], index: 4, kind: input, shape index: {}]
  %s5 = inlined_call_operand.vmem [shape: bf16[4,16], index: 5, kind: input, shape index: {}]
  %s6 = inlined_call_operand.vmem [shape: f32[1,16], index: 6, kind: input, shape index: {}]
  %s7 = inlined_call_operand.vmem [shape: bf16[4,16], index: 7, kind: input, shape index: {}]
  %s8 = inlined_call_operand.vmem [shape: f32[1,16], index: 8, kind: input, shape index: {}]
  %s9 = inlined_call_operand.hbm [shape: bf16[2,16,16,16], index: 9, kind: output, shape index: {}]
  %s10 = sld [smem:[#allocation0]]
  $region69: #{tpu_custom_call.1} parent=0
    _
  %s12 = ssub.s32 1, %s10
  %s13 = scalar_select 0, %s12, %s10
  $region1: #{tpu_custom_call.1} parent=0
    #allocation3 [shape = 'u8[131072]{0}', space=vmem, size = 0x20000, scoped, tag = 'output window, operand 0']
    #allocation4 [shape = 's32[2]{0}', space=sflag, size = 0x8, scoped, tag = 'scoped memory for tpu_custom_call.1']
    %14 = vsyncpa [#allocation4], 0
    %s15 = scalar_lea.sflag [#allocation4], 1
    %16 = vsyncpa %s15, 0
    loop: start=0, step=1, limit=4
    $region2: #{tpu_custom_call.1} parent=1 // loop_pre_header
      _
    $region3: #{tpu_custom_call.1} parent=1 // loop_header
      %s18 = sphi 0, %s22
      %p19 = scmp.ge.s32.totalorder %s18, 4
      %s28 = sphi 0, %s30
      %s31 = sphi 0, %s28
      %s32 = sphi 0, %s31
      %s48 = sphi 0, %s32
      %s52 = sphi 0, %s52
      %s54 = sphi 0, %s52
      %s55 = sphi 0, %s54
      %s69 = sphi 0, %s55
      %s73 = sphi 0, %s73
      %s75 = sphi 0, %s73
      %s76 = sphi 0, %s75
      %s90 = sphi 0, %s76
      %s94 = sphi 0, %s94
      %s96 = sphi 0, %s94
      %s97 = sphi 0, %s96
      %s111 = sphi 0, %s97
      %s115 = sphi 0, %s115
      %s117 = sphi 0, %s115
      %s118 = sphi 0, %s117
      %s132 = sphi 0, %s118
      %s136 = sphi 0, %s136
      %s138 = sphi 0, %s136
      %s139 = sphi 0, %s138
      %s153 = sphi 0, %s139
      %s157 = sphi 0, %s157
      %s159 = sphi 0, %s157
      %s160 = sphi 0, %s159
      %s174 = sphi 0, %s160
      %s178 = sphi 0, %s178
      %s180 = sphi 0, %s178
      %s181 = sphi 0, %s180
      %s195 = sphi 0, %s181
      %s199 = sphi 0, %s199
      %s201 = sphi 0, %s199
      %s202 = sphi 0, %s201
      %s216 = sphi 0, %s202
      %s222 = sphi 0, %s224
      %s225 = sphi 0, %s222
      %s226 = sphi 0, %s225
      %s242 = sphi 0, %s226
    $region4: #{tpu_custom_call.1} parent=1 // loop_header_branch
      %21 = sbr.rel (%p19) target = $region8
    $region5: #{tpu_custom_call.1} parent=1 // loop_body
      %s23 = ssub.s32 %s18, 1
      %s24 = ssub.s32 %s18, 2
      %s25 = sadd.s32 %s18, 1
      %s26 = ssub.s32 %s18, %s25
      %p27 = scmp.eq.s32.totalorder %s26, 0
      %s29 = sadd.s32 %s28, 1
      %s30 = scalar_select %p27, %s28, %s29
      %p33 = pneg %p27
      %p34 = scmp.eq.s32.totalorder %s18, 1
      %p35 = por %p33, %p34
      %p36 = scmp.ne.s32.totalorder %s28, %s31
      %p37 = scmp.eq.s32.totalorder %s18, 0
      %p38 = por %p36, %p37
      %p39 = scmp.ne.s32.totalorder %s28, %s31
      %p40 = scmp.eq.s32.totalorder %s23, 1
      %p41 = por %p39, %p40
      %p42 = scmp.ne.s32.totalorder %s31, %s32
      %p43 = scmp.eq.s32.totalorder %s23, 0
      %p44 = por %p42, %p43
      %p45 = scmp.ne.s32.totalorder %s31, %s32
      %p46 = scmp.eq.s32.totalorder %s24, 1
      %p47 = por %p45, %p46
      %p49 = scmp.ne.s32.totalorder %s32, %s48
      %p50 = scmp.eq.s32.totalorder %s24, 0
      %p51 = por %p49, %p50
      %s53 = sadd.s32 %s52, 1
      %p56 = scmp.eq.s32.totalorder %s18, 1
      %p57 = scmp.ne.s32.totalorder %s52, %s54
      %p58 = scmp.eq.s32.totalorder %s18, 0
      %p59 = por %p57, %p58
      %p60 = scmp.ne.s32.totalorder %s52, %s54
      %p61 = scmp.eq.s32.totalorder %s23, 1
      %p62 = por %p60, %p61
      %p63 = scmp.ne.s32.totalorder %s54, %s55
      %p64 = scmp.eq.s32.totalorder %s23, 0
      %p65 = por %p63, %p64
      %p66 = scmp.ne.s32.totalorder %s54, %s55
      %p67 = scmp.eq.s32.totalorder %s24, 1
      %p68 = por %p66, %p67
      %p70 = scmp.ne.s32.totalorder %s55, %s69
      %p71 = scmp.eq.s32.totalorder %s24, 0
      %p72 = por %p70, %p71
      %s74 = sadd.s32 %s73, 1
      %p77 = scmp.eq.s32.totalorder %s18, 1
      %p78 = scmp.ne.s32.totalorder %s73, %s75
      %p79 = scmp.eq.s32.totalorder %s18, 0
      %p80 = por %p78, %p79
      %p81 = scmp.ne.s32.totalorder %s73, %s75
      %p82 = scmp.eq.s32.totalorder %s23, 1
      %p83 = por %p81, %p82
      %p84 = scmp.ne.s32.totalorder %s75, %s76
      %p85 = scmp.eq.s32.totalorder %s23, 0
      %p86 = por %p84, %p85
      %p87 = scmp.ne.s32.totalorder %s75, %s76
      %p88 = scmp.eq.s32.totalorder %s24, 1
      %p89 = por %p87, %p88
      %p91 = scmp.ne.s32.totalorder %s76, %s90
      %p92 = scmp.eq.s32.totalorder %s24, 0
      %p93 = por %p91, %p92
      %s95 = sadd.s32 %s94, 1
      %p98 = scmp.eq.s32.totalorder %s18, 1
      %p99 = scmp.ne.s32.totalorder %s94, %s96
      %p100 = scmp.eq.s32.totalorder %s18, 0
      %p101 = por %p99, %p100
      %p102 = scmp.ne.s32.totalorder %s94, %s96
      %p103 = scmp.eq.s32.totalorder %s23, 1
      %p104 = por %p102, %p103
      %p105 = scmp.ne.s32.totalorder %s96, %s97
      %p106 = scmp.eq.s32.totalorder %s23, 0
      %p107 = por %p105, %p106
      %p108 = scmp.ne.s32.totalorder %s96, %s97
      %p109 = scmp.eq.s32.totalorder %s24, 1
      %p110 = por %p108, %p109
      %p112 = scmp.ne.s32.totalorder %s97, %s111
      %p113 = scmp.eq.s32.totalorder %s24, 0
      %p114 = por %p112, %p113
      %s116 = sadd.s32 %s115, 1
      %p119 = scmp.eq.s32.totalorder %s18, 1
      %p120 = scmp.ne.s32.totalorder %s115, %s117
      %p121 = scmp.eq.s32.totalorder %s18, 0
      %p122 = por %p120, %p121
      %p123 = scmp.ne.s32.totalorder %s115, %s117
      %p124 = scmp.eq.s32.totalorder %s23, 1
      %p125 = por %p123, %p124
      %p126 = scmp.ne.s32.totalorder %s117, %s118
      %p127 = scmp.eq.s32.totalorder %s23, 0
      %p128 = por %p126, %p127
      %p129 = scmp.ne.s32.totalorder %s117, %s118
      %p130 = scmp.eq.s32.totalorder %s24, 1
      %p131 = por %p129, %p130
      %p133 = scmp.ne.s32.totalorder %s118, %s132
      %p134 = scmp.eq.s32.totalorder %s24, 0
      %p135 = por %p133, %p134
      %s137 = sadd.s32 %s136, 1
      %p140 = scmp.eq.s32.totalorder %s18, 1
      %p141 = scmp.ne.s32.totalorder %s136, %s138
      %p142 = scmp.eq.s32.totalorder %s18, 0
      %p143 = por %p141, %p142
      %p144 = scmp.ne.s32.totalorder %s136, %s138
      %p145 = scmp.eq.s32.totalorder %s23, 1
      %p146 = por %p144, %p145
      %p147 = scmp.ne.s32.totalorder %s138, %s139
      %p148 = scmp.eq.s32.totalorder %s23, 0
      %p149 = por %p147, %p148
      %p150 = scmp.ne.s32.totalorder %s138, %s139
      %p151 = scmp.eq.s32.totalorder %s24, 1
      %p152 = por %p150, %p151
      %p154 = scmp.ne.s32.totalorder %s139, %s153
      %p155 = scmp.eq.s32.totalorder %s24, 0
      %p156 = por %p154, %p155
      %s158 = sadd.s32 %s157, 1
      %p161 = scmp.eq.s32.totalorder %s18, 1
      %p162 = scmp.ne.s32.totalorder %s157, %s159
      %p163 = scmp.eq.s32.totalorder %s18, 0
      %p164 = por %p162, %p163
      %p165 = scmp.ne.s32.totalorder %s157, %s159
      %p166 = scmp.eq.s32.totalorder %s23, 1
      %p167 = por %p165, %p166
      %p168 = scmp.ne.s32.totalorder %s159, %s160
      %p169 = scmp.eq.s32.totalorder %s23, 0
      %p170 = por %p168, %p169
      %p171 = scmp.ne.s32.totalorder %s159, %s160
      %p172 = scmp.eq.s32.totalorder %s24, 1
      %p173 = por %p171, %p172
      %p175 = scmp.ne.s32.totalorder %s160, %s174
      %p176 = scmp.eq.s32.totalorder %s24, 0
      %p177 = por %p175, %p176
      %s179 = sadd.s32 %s178, 1
      %p182 = scmp.eq.s32.totalorder %s18, 1
      %p183 = scmp.ne.s32.totalorder %s178, %s180
      %p184 = scmp.eq.s32.totalorder %s18, 0
      %p185 = por %p183, %p184
      %p186 = scmp.ne.s32.totalorder %s178, %s180
      %p187 = scmp.eq.s32.totalorder %s23, 1
      %p188 = por %p186, %p187
      %p189 = scmp.ne.s32.totalorder %s180, %s181
      %p190 = scmp.eq.s32.totalorder %s23, 0
      %p191 = por %p189, %p190
      %p192 = scmp.ne.s32.totalorder %s180, %s181
      %p193 = scmp.eq.s32.totalorder %s24, 1
      %p194 = por %p192, %p193
      %p196 = scmp.ne.s32.totalorder %s181, %s195
      %p197 = scmp.eq.s32.totalorder %s24, 0
      %p198 = por %p196, %p197
      %s200 = sadd.s32 %s199, 1
      %p203 = scmp.eq.s32.totalorder %s18, 1
      %p204 = scmp.ne.s32.totalorder %s199, %s201
      %p205 = scmp.eq.s32.totalorder %s18, 0
      %p206 = por %p204, %p205
      %p207 = scmp.ne.s32.totalorder %s199, %s201
      %p208 = scmp.eq.s32.totalorder %s23, 1
      %p209 = por %p207, %p208
      %p210 = scmp.ne.s32.totalorder %s201, %s202
      %p211 = scmp.eq.s32.totalorder %s23, 0
      %p212 = por %p210, %p211
      %p213 = scmp.ne.s32.totalorder %s201, %s202
      %p214 = scmp.eq.s32.totalorder %s24, 1
      %p215 = por %p213, %p214
      %p217 = scmp.ne.s32.totalorder %s202, %s216
      %p218 = scmp.eq.s32.totalorder %s24, 0
      %p219 = por %p217, %p218
      %s220 = ssub.s32 %s18, %s25
      %p221 = scmp.eq.s32.totalorder %s220, 0
      %s223 = sadd.s32 %s222, 1
      %s224 = scalar_select %p221, %s222, %s223
      %p227 = pneg %p221
      %p228 = scmp.eq.s32.totalorder %s18, 1
      %p229 = por %p227, %p228
      %p230 = scmp.ne.s32.totalorder %s222, %s225
      %p231 = scmp.eq.s32.totalorder %s18, 0
      %p232 = por %p230, %p231
      %p233 = scmp.ne.s32.totalorder %s222, %s225
      %p234 = scmp.eq.s32.totalorder %s23, 1
      %p235 = por %p233, %p234
      %p236 = scmp.ne.s32.totalorder %s225, %s226
      %p237 = scmp.eq.s32.totalorder %s23, 0
      %p238 = por %p236, %p237
      %p239 = scmp.ne.s32.totalorder %s225, %s226
      %p240 = scmp.eq.s32.totalorder %s24, 1
      %p241 = por %p239, %p240
      %p243 = scmp.ne.s32.totalorder %s226, %s242
      %p244 = scmp.eq.s32.totalorder %s24, 0
      %p245 = por %p243, %p244
      %p246 = scmp.le.s32.totalorder 1, %s18
      %p247 = scmp.lt.s32.totalorder %s18, 3
      %p248 = pnand %p246, %p247
      %p249 = pneg %p248
      // Predicated region
      $region9: #{tpu_custom_call.1} parent=5 // pred_check
        _
      $region10: #{tpu_custom_call.1} parent=5 // pred_check_branch
        %251 = sbr.rel (%p248) target = $region12
      $region11: #{tpu_custom_call.1} parent=5 // pred_region
        %s252 = ssub.s32 %s18, 1
        // Predicated region
        $region13: #{tpu_custom_call.1} parent=11 // pred_check
          %p253 = pneg %p65
        $region14: #{tpu_custom_call.1} parent=11 // pred_check_branch
          %255 = sbr.rel (%p253) target = $region16
        $region15: #{tpu_custom_call.1} parent=11 // pred_region
          _
        $region16: #{tpu_custom_call.1} parent=11 // pred_fallthru
          _
        // Predicated region
        $region17: #{tpu_custom_call.1} parent=11 // pred_check
          %p256 = pneg %p86
        $region18: #{tpu_custom_call.1} parent=11 // pred_check_branch
          %258 = sbr.rel (%p256) target = $region20
        $region19: #{tpu_custom_call.1} parent=11 // pred_region
          _
        $region20: #{tpu_custom_call.1} parent=11 // pred_fallthru
          _
        // Predicated region
        $region21: #{tpu_custom_call.1} parent=11 // pred_check
          %p259 = pneg %p107
        $region22: #{tpu_custom_call.1} parent=11 // pred_check_branch
          %261 = sbr.rel (%p259) target = $region24
        $region23: #{tpu_custom_call.1} parent=11 // pred_region
          _
        $region24: #{tpu_custom_call.1} parent=11 // pred_fallthru
          _
        // Predicated region
        $region25: #{tpu_custom_call.1} parent=11 // pred_check
          %p262 = pneg %p128
        $region26: #{tpu_custom_call.1} parent=11 // pred_check_branch
          %264 = sbr.rel (%p262) target = $region28
        $region27: #{tpu_custom_call.1} parent=11 // pred_region
          _
        $region28: #{tpu_custom_call.1} parent=11 // pred_fallthru
          _
        // Predicated region
        $region29: #{tpu_custom_call.1} parent=11 // pred_check
          %p265 = pneg %p149
        $region30: #{tpu_custom_call.1} parent=11 // pred_check_branch
          %267 = sbr.rel (%p265) target = $region32
        $region31: #{tpu_custom_call.1} parent=11 // pred_region
          _
        $region32: #{tpu_custom_call.1} parent=11 // pred_fallthru
          _
        // Predicated region
        $region33: #{tpu_custom_call.1} parent=11 // pred_check
          %p268 = pneg %p170
        $region34: #{tpu_custom_call.1} parent=11 // pred_check_branch
          %270 = sbr.rel (%p268) target = $region36
        $region35: #{tpu_custom_call.1} parent=11 // pred_region
          _
        $region36: #{tpu_custom_call.1} parent=11 // pred_fallthru
          _
        // Predicated region
        $region37: #{tpu_custom_call.1} parent=11 // pred_check
          %p271 = pneg %p191
        $region38: #{tpu_custom_call.1} parent=11 // pred_check_branch
          %273 = sbr.rel (%p271) target = $region40
        $region39: #{tpu_custom_call.1} parent=11 // pred_region
          _
        $region40: #{tpu_custom_call.1} parent=11 // pred_fallthru
          _
        // Predicated region
        $region41: #{tpu_custom_call.1} parent=11 // pred_check
          %p274 = pneg %p212
        $region42: #{tpu_custom_call.1} parent=11 // pred_check_branch
          %276 = sbr.rel (%p274) target = $region44
        $region43: #{tpu_custom_call.1} parent=11 // pred_region
          _
        $region44: #{tpu_custom_call.1} parent=11 // pred_fallthru
          _
      $region12: #{tpu_custom_call.1} parent=5 // pred_fallthru
        _
      %p277 = scmp.lt.s32.totalorder %s18, 2
      // Predicated region
      $region45: #{tpu_custom_call.1} parent=5 // pred_check
        %p278 = pneg %p277
      $region46: #{tpu_custom_call.1} parent=5 // pred_check_branch
        %280 = sbr.rel (%p278) target = $region48
      $region47: #{tpu_custom_call.1} parent=5 // pred_region
        // Predicated region
        $region49: #{tpu_custom_call.1} parent=47 // pred_check
          %p281 = pneg %p38
        $region50: #{tpu_custom_call.1} parent=47 // pred_check_branch
          %283 = sbr.rel (%p281) target = $region52
        $region51: #{tpu_custom_call.1} parent=47 // pred_region
          %p284 = scmp.lt.s32.totalorder %s18, 1
          %s285 = scalar_select %p284, %s18, 1
          %s286 = smul.addr %s285, 32
          %s287 = smul.addr %s286, 4
          %s288 = scalar_lea.vmem %s0, %s287
        $region52: #{tpu_custom_call.1} parent=47 // pred_fallthru
          _
      $region48: #{tpu_custom_call.1} parent=5 // pred_fallthru
        _
      %p289 = scmp.le.s32.totalorder 1, %s18
      %p290 = scmp.lt.s32.totalorder %s18, 3
      %p291 = pnand %p289, %p290
      %p292 = pneg %p291
      // Predicated region
      $region53: #{tpu_custom_call.1} parent=5 // pred_check
        _
      $region54: #{tpu_custom_call.1} parent=5 // pred_check_branch
        %294 = sbr.rel (%p291) target = $region56
      $region55: #{tpu_custom_call.1} parent=5 // pred_region
        %s295 = ssub.s32 %s18, 1
        %p296 = scmp.lt.s32.totalorder %s23, 1
        %s297 = scalar_select %p296, %s23, 1
        %s298 = smul.addr %s297, 32
        %s299 = smul.addr %s298, 4
        %s300 = scalar_lea.vmem %s0, %s299
        %p301 = pneg %p44
        %p302 = pneg %p41
        %p303 = pneg %p65
        %p304 = pneg %p62
        %p305 = pneg %p86
        %p306 = pneg %p83
        %p307 = pneg %p107
        %p308 = pneg %p104
        %p309 = pneg %p128
        %p310 = pneg %p125
        %p311 = pneg %p149
        %p312 = pneg %p146
        %p313 = pneg %p170
        %p314 = pneg %p167
        %p315 = pneg %p191
        %p316 = pneg %p188
        %p317 = pneg %p212
        %p318 = pneg %p209
        %p319 = pneg %p238
        %p320 = pneg %p235
        %s321 = sand.u32 %s225, 1
        %s322 = scalar_lea.sflag [#allocation4], %s321
        %s323 = sand.u32 %s225, 1
        %s324 = smul.addr %s323, 128
        %s325 = scalar_lea.vmem [#allocation3], %s324
        %p326 = scmp.lt.s32.totalorder %s23, 1
        %s327 = scalar_select %p326, %s23, 1
        %s328 = smul.addr %s327, 32
        %s329 = smul.addr %s328, 4
        %s330 = scalar_lea.vmem %s0, %s329
        %v334 = vld [vmem:[%s330] sm:$0xf]
        %v335 = vld [vmem:[%s330 + $0x4] sm:$0xf]
        %v336 = vld [vmem:[%s330 + $0x8] sm:$0xf]
        %v337 = vld [vmem:[%s330 + $0xc] sm:$0xf]
        %v338 = vld [vmem:[%s330 + $0x10] sm:$0xf]
        %v339 = vld [vmem:[%s330 + $0x14] sm:$0xf]
        %v340 = vld [vmem:[%s330 + $0x18] sm:$0xf]
        %v341 = vld [vmem:[%s330 + $0x1c] sm:$0xf]
        %v342 = vld [vmem:[%s330 + $0x20] sm:$0xf]
        %v343 = vld [vmem:[%s330 + $0x24] sm:$0xf]
        %v344 = vld [vmem:[%s330 + $0x28] sm:$0xf]
        %v345 = vld [vmem:[%s330 + $0x2c] sm:$0xf]
        %v346 = vld [vmem:[%s330 + $0x30] sm:$0xf]
        %v347 = vld [vmem:[%s330 + $0x34] sm:$0xf]
        %v348 = vld [vmem:[%s330 + $0x38] sm:$0xf]
        %v349 = vld [vmem:[%s330 + $0x3c] sm:$0xf]
        %v350 = vld [vmem:[%s330 + $0x40] sm:$0xf]
        %v351 = vld [vmem:[%s330 + $0x44] sm:$0xf]
        %v352 = vld [vmem:[%s330 + $0x48] sm:$0xf]
        %v353 = vld [vmem:[%s330 + $0x4c] sm:$0xf]
        %v354 = vld [vmem:[%s330 + $0x50] sm:$0xf]
        %v355 = vld [vmem:[%s330 + $0x54] sm:$0xf]
        %v356 = vld [vmem:[%s330 + $0x58] sm:$0xf]
        %v357 = vld [vmem:[%s330 + $0x5c] sm:$0xf]
        %v358 = vld [vmem:[%s330 + $0x60] sm:$0xf]
        %v359 = vld [vmem:[%s330 + $0x64] sm:$0xf]
        %v360 = vld [vmem:[%s330 + $0x68] sm:$0xf]
        %v361 = vld [vmem:[%s330 + $0x6c] sm:$0xf]
        %v362 = vld [vmem:[%s330 + $0x70] sm:$0xf]
        %v363 = vld [vmem:[%s330 + $0x74] sm:$0xf]
        %v364 = vld [vmem:[%s330 + $0x78] sm:$0xf]
        %v365 = vld [vmem:[%s330 + $0x7c] sm:$0xf]
        %v366 = vld [vmem:[%s1] sm:$0x3]
        %v367 = vld [vmem:[%s2] sm:$0x1]
        %v369 = vlaneseq
        %v370 = vshrl.u32 %v369, 7
        %v371 = vsub.s32 0, %v370
        %v372 = vrot.slane %v367, %v371
        %v406 = vunpack.c.l.b16 %v334
        %v407 = vunpack.c.l.b16 %v335
        %v408 = vunpack.c.l.b16 %v336
        %v409 = vunpack.c.l.b16 %v337
        %v410 = vunpack.c.l.b16 %v338
        %v411 = vunpack.c.l.b16 %v339
        %v412 = vunpack.c.l.b16 %v340
        %v413 = vunpack.c.l.b16 %v341
        %v414 = vunpack.c.l.b16 %v342
        %v415 = vunpack.c.l.b16 %v343
        %v416 = vunpack.c.l.b16 %v344
        %v417 = vunpack.c.l.b16 %v345
        %v418 = vunpack.c.l.b16 %v346
        %v419 = vunpack.c.l.b16 %v347
        %v420 = vunpack.c.l.b16 %v348
        %v421 = vunpack.c.l.b16 %v349
        %v422 = vunpack.c.l.b16 %v350
        %v423 = vunpack.c.l.b16 %v351
        %v424 = vunpack.c.l.b16 %v352
        %v425 = vunpack.c.l.b16 %v353
        %v426 = vunpack.c.l.b16 %v354
        %v427 = vunpack.c.l.b16 %v355
        %v428 = vunpack.c.l.b16 %v356
        %v429 = vunpack.c.l.b16 %v357
        %v430 = vunpack.c.l.b16 %v358
        %v431 = vunpack.c.l.b16 %v359
        %v432 = vunpack.c.l.b16 %v360
        %v433 = vunpack.c.l.b16 %v361
        %v434 = vunpack.c.l.b16 %v362
        %v435 = vunpack.c.l.b16 %v363
        %v436 = vunpack.c.l.b16 %v364
        %v437 = vunpack.c.l.b16 %v365
        %v438 = vpack.c.b16 %v407, %v406
        %v439 = vpack.c.b16 %v409, %v408
        %v440 = vpack.c.b16 %v411, %v410
        %v441 = vpack.c.b16 %v413, %v412
        %v442 = vpack.c.b16 %v415, %v414
        %v443 = vpack.c.b16 %v417, %v416
        %v444 = vpack.c.b16 %v419, %v418
        %v445 = vpack.c.b16 %v421, %v420
        %v446 = vpack.c.b16 %v423, %v422
        %v447 = vpack.c.b16 %v425, %v424
        %v448 = vpack.c.b16 %v427, %v426
        %v449 = vpack.c.b16 %v429, %v428
        %v450 = vpack.c.b16 %v431, %v430
        %v451 = vpack.c.b16 %v433, %v432
        %v452 = vpack.c.b16 %v435, %v434
        %v453 = vpack.c.b16 %v437, %v436
        %vm454 = vcmask 31744
        %v456 = vsel %vm454, %v438, 0
        %v459 = vsel %vm454, %v439, 0
        %v462 = vsel %vm454, %v440, 0
        %v465 = vsel %vm454, %v441, 0
        %v468 = vsel %vm454, %v442, 0
        %v471 = vsel %vm454, %v443, 0
        %v474 = vsel %vm454, %v444, 0
        %v477 = vsel %vm454, %v445, 0
        %v480 = vsel %vm454, %v446, 0
        %v483 = vsel %vm454, %v447, 0
        %v486 = vsel %vm454, %v448, 0
        %v489 = vsel %vm454, %v449, 0
        %v492 = vsel %vm454, %v450, 0
        %v495 = vsel %vm454, %v451, 0
        %v498 = vsel %vm454, %v452, 0
        %v501 = vsel %vm454, %v453, 0
        %vm503 = vcmask 1041408
        %v505 = vsel %vm503, %v366, 0
        %507 = vmatprep.subr.bf16.mxu0 0
        %508 = vmatpush1.bf16.msra.mxu0 0
        %509 = vmatprep.subr.bf16.mxu0 0
        %510 = vmatpush1.bf16.msra.mxu0 0
        %511 = vmatprep.subr.bf16.mxu0 0
        %512 = vmatpush1.bf16.msra.mxu0 0
        %513 = vmatprep.subr.bf16.mxu0 0
        %514 = vmatpush1.bf16.msra.mxu0 0
        %515 = vmatprep.subr.bf16.mxu0 0
        %516 = vmatpush1.bf16.msra.mxu0 0
        %517 = vmatprep.subr.bf16.mxu0 0
        %518 = vmatpush1.bf16.msra.mxu0 0
        %519 = vmatprep.subr.bf16.mxu0 0
        %520 = vmatpush1.bf16.msra.mxu0 0
        %521 = vmatprep.subr.bf16.mxu0 0
        %522 = vmatpush1.bf16.msra.mxu0 %v505
        %523 = vmatprep.subr.bf16.mxu0 0
        %524 = vmatpush2.bf16.msra.mxu0 0
        %525 = vmatprep.subr.bf16.mxu0 0
        %526 = vmatpush2.bf16.msra.mxu0 0
        %527 = vmatprep.subr.bf16.mxu0 0
        %528 = vmatpush2.bf16.msra.mxu0 0
        %529 = vmatprep.subr.bf16.mxu0 0
        %530 = vmatpush2.bf16.msra.mxu0 0
        %531 = vmatprep.subr.bf16.mxu0 0
        %532 = vmatpush2.bf16.msra.mxu0 0
        %533 = vmatprep.subr.bf16.mxu0 0
        %534 = vmatpush2.bf16.msra.mxu0 0
        %535 = vmatprep.subr.bf16.mxu0 0
        %536 = vmatpush2.bf16.msra.mxu0 0
        %537 = vmatprep.subr.bf16.mxu0 0
        %538 = vmatpush2.bf16.msra.mxu0 0
        %539 = vmatprep.mubr.bf16.mxu0 0
        %540 = vmatmul.mubr.bf16.gmra.mxu0 %v456
        %v541 = vpop.f32.mrf.mxu0
        %v542 = vadd.f32 %v372, %v541
        %v543 = vpop.f32.mrf.mxu0
        %v544 = vpop.f32.mrf.mxu0
        %v545 = vadd.f32 %v372, %v544
        %v546 = vpop.f32.mrf.mxu0
        %547 = vmatprep.mubr.bf16.mxu0 0
        %548 = vmatmul.mubr.bf16.gmra.mxu0 %v459
        %v549 = vpop.f32.mrf.mxu0
        %v550 = vadd.f32 %v372, %v549
        %v551 = vpop.f32.mrf.mxu0
        %v552 = vpop.f32.mrf.mxu0
        %v553 = vadd.f32 %v372, %v552
        %v554 = vpop.f32.mrf.mxu0
        %555 = vmatprep.mubr.bf16.mxu0 0
        %556 = vmatmul.mubr.bf16.gmra.mxu0 %v462
        %v557 = vpop.f32.mrf.mxu0
        %v558 = vadd.f32 %v372, %v557
        %v559 = vpop.f32.mrf.mxu0
        %v560 = vpop.f32.mrf.mxu0
        %v561 = vadd.f32 %v372, %v560
        %v562 = vpop.f32.mrf.mxu0
        %563 = vmatprep.mubr.bf16.mxu0 0
        %564 = vmatmul.mubr.bf16.gmra.mxu0 %v465
        %v565 = vpop.f32.mrf.mxu0
        %v566 = vadd.f32 %v372, %v565
        %v567 = vpop.f32.mrf.mxu0
        %v568 = vpop.f32.mrf.mxu0
        %v569 = vadd.f32 %v372, %v568
        %v570 = vpop.f32.mrf.mxu0
        %571 = vmatprep.mubr.bf16.mxu0 0
        %572 = vmatmul.mubr.bf16.gmra.mxu0 %v468
        %v573 = vpop.f32.mrf.mxu0
        %v574 = vadd.f32 %v372, %v573
        %v575 = vpop.f32.mrf.mxu0
        %v576 = vpop.f32.mrf.mxu0
        %v577 = vadd.f32 %v372, %v576
        %v578 = vpop.f32.mrf.mxu0
        %579 = vmatprep.mubr.bf16.mxu0 0
        %580 = vmatmul.mubr.bf16.gmra.mxu0 %v471
        %v581 = vpop.f32.mrf.mxu0
        %v582 = vadd.f32 %v372, %v581
        %v583 = vpop.f32.mrf.mxu0
        %v584 = vpop.f32.mrf.mxu0
        %v585 = vadd.f32 %v372, %v584
        %v586 = vpop.f32.mrf.mxu0
        %587 = vmatprep.mubr.bf16.mxu0 0
        %588 = vmatmul.mubr.bf16.gmra.mxu0 %v474
        %v589 = vpop.f32.mrf.mxu0
        %v590 = vadd.f32 %v372, %v589
        %v591 = vpop.f32.mrf.mxu0
        %v592 = vpop.f32.mrf.mxu0
        %v593 = vadd.f32 %v372, %v592
        %v594 = vpop.f32.mrf.mxu0
        %595 = vmatprep.mubr.bf16.mxu0 0
        %596 = vmatmul.mubr.bf16.gmra.mxu0 %v477
        %v597 = vpop.f32.mrf.mxu0
        %v598 = vadd.f32 %v372, %v597
        %v599 = vpop.f32.mrf.mxu0
        %v600 = vpop.f32.mrf.mxu0
        %v601 = vadd.f32 %v372, %v600
        %v602 = vpop.f32.mrf.mxu0
        %603 = vmatprep.mubr.bf16.mxu0 0
        %604 = vmatmul.mubr.bf16.gmra.mxu0 %v480
        %v605 = vpop.f32.mrf.mxu0
        %v606 = vadd.f32 %v372, %v605
        %v607 = vpop.f32.mrf.mxu0
        %v608 = vpop.f32.mrf.mxu0
        %v609 = vadd.f32 %v372, %v608
        %v610 = vpop.f32.mrf.mxu0
        %611 = vmatprep.mubr.bf16.mxu0 0
        %612 = vmatmul.mubr.bf16.gmra.mxu0 %v483
        %v613 = vpop.f32.mrf.mxu0
        %v614 = vadd.f32 %v372, %v613
        %v615 = vpop.f32.mrf.mxu0
        %v616 = vpop.f32.mrf.mxu0
        %v617 = vadd.f32 %v372, %v616
        %v618 = vpop.f32.mrf.mxu0
        %619 = vmatprep.mubr.bf16.mxu0 0
        %620 = vmatmul.mubr.bf16.gmra.mxu0 %v486
        %v621 = vpop.f32.mrf.mxu0
        %v622 = vadd.f32 %v372, %v621
        %v623 = vpop.f32.mrf.mxu0
        %v624 = vpop.f32.mrf.mxu0
        %v625 = vadd.f32 %v372, %v624
        %v626 = vpop.f32.mrf.mxu0
        %627 = vmatprep.mubr.bf16.mxu0 0
        %628 = vmatmul.mubr.bf16.gmra.mxu0 %v489
        %v629 = vpop.f32.mrf.mxu0
        %v630 = vadd.f32 %v372, %v629
        %v631 = vpop.f32.mrf.mxu0
        %v632 = vpop.f32.mrf.mxu0
        %v633 = vadd.f32 %v372, %v632
        %v634 = vpop.f32.mrf.mxu0
        %635 = vmatprep.mubr.bf16.mxu0 0
        %636 = vmatmul.mubr.bf16.gmra.mxu0 %v492
        %v637 = vpop.f32.mrf.mxu0
        %v638 = vadd.f32 %v372, %v637
        %v639 = vpop.f32.mrf.mxu0
        %v640 = vpop.f32.mrf.mxu0
        %v641 = vadd.f32 %v372, %v640
        %v642 = vpop.f32.mrf.mxu0
        %643 = vmatprep.mubr.bf16.mxu0 0
        %644 = vmatmul.mubr.bf16.gmra.mxu0 %v495
        %v645 = vpop.f32.mrf.mxu0
        %v646 = vadd.f32 %v372, %v645
        %v647 = vpop.f32.mrf.mxu0
        %v648 = vpop.f32.mrf.mxu0
        %v649 = vadd.f32 %v372, %v648
        %v650 = vpop.f32.mrf.mxu0
        %651 = vmatprep.mubr.bf16.mxu0 0
        %652 = vmatmul.mubr.bf16.gmra.mxu0 %v498
        %v653 = vpop.f32.mrf.mxu0
        %v654 = vadd.f32 %v372, %v653
        %v655 = vpop.f32.mrf.mxu0
        %v656 = vpop.f32.mrf.mxu0
        %v657 = vadd.f32 %v372, %v656
        %v658 = vpop.f32.mrf.mxu0
        %659 = vmatprep.mubr.bf16.mxu0 0
        %660 = vmatmul.mubr.bf16.gmra.mxu0 %v501
        %v661 = vpop.f32.mrf.mxu0
        %v662 = vadd.f32 %v372, %v661
        %v663 = vpop.f32.mrf.mxu0
        %v664 = vpop.f32.mrf.mxu0
        %v665 = vadd.f32 %v372, %v664
        %v666 = vpop.f32.mrf.mxu0
        %667 = vdwg.mxu0
        %v668 = vmax.f32 %v542, 0.0
        %v669 = vmax.f32 %v545, 0.0
        %v670 = vmax.f32 %v550, 0.0
        %v671 = vmax.f32 %v553, 0.0
        %v672 = vmax.f32 %v558, 0.0
        %v673 = vmax.f32 %v561, 0.0
        %v674 = vmax.f32 %v566, 0.0
        %v675 = vmax.f32 %v569, 0.0
        %v676 = vmax.f32 %v574, 0.0
        %v677 = vmax.f32 %v577, 0.0
        %v678 = vmax.f32 %v582, 0.0
        %v679 = vmax.f32 %v585, 0.0
        %v680 = vmax.f32 %v590, 0.0
        %v681 = vmax.f32 %v593, 0.0
        %v682 = vmax.f32 %v598, 0.0
        %v683 = vmax.f32 %v601, 0.0
        %v684 = vmax.f32 %v606, 0.0
        %v685 = vmax.f32 %v609, 0.0
        %v686 = vmax.f32 %v614, 0.0
        %v687 = vmax.f32 %v617, 0.0
        %v688 = vmax.f32 %v622, 0.0
        %v689 = vmax.f32 %v625, 0.0
        %v690 = vmax.f32 %v630, 0.0
        %v691 = vmax.f32 %v633, 0.0
        %v692 = vmax.f32 %v638, 0.0
        %v693 = vmax.f32 %v641, 0.0
        %v694 = vmax.f32 %v646, 0.0
        %v695 = vmax.f32 %v649, 0.0
        %v696 = vmax.f32 %v654, 0.0
        %v697 = vmax.f32 %v657, 0.0
        %v698 = vmax.f32 %v662, 0.0
        %v699 = vmax.f32 %v665, 0.0
        %v700 = vpack.c.bf16 %v669, %v668
        %v701 = vpack.c.bf16 %v671, %v670
        %v702 = vpack.c.bf16 %v673, %v672
        %v703 = vpack.c.bf16 %v675, %v674
        %v704 = vpack.c.bf16 %v677, %v676
        %v705 = vpack.c.bf16 %v679, %v678
        %v706 = vpack.c.bf16 %v681, %v680
        %v707 = vpack.c.bf16 %v683, %v682
        %v708 = vpack.c.bf16 %v685, %v684
        %v709 = vpack.c.bf16 %v687, %v686
        %v710 = vpack.c.bf16 %v689, %v688
        %v711 = vpack.c.bf16 %v691, %v690
        %v712 = vpack.c.bf16 %v693, %v692
        %v713 = vpack.c.bf16 %v695, %v694
        %v714 = vpack.c.bf16 %v697, %v696
        %v715 = vpack.c.bf16 %v699, %v698
        %vm716 = vcmask 27648
        %717 = vst.msk [vmem:[#allocation2] sm:$0xf] %vm716, 0
        %718 = vst.msk [vmem:[#allocation2 + $0x4] sm:$0xf] %vm716, 0
        %719 = vst.msk [vmem:[#allocation2 + $0x8] sm:$0xf] %vm716, 0
        %720 = vst.msk [vmem:[#allocation2 + $0x8c] sm:$0xf] %vm716, 0
        %721 = vst.msk [vmem:[#allocation2 + $0x90] sm:$0xf] %vm716, 0
        %722 = vst.msk [vmem:[#allocation2 + $0x94] sm:$0xf] %vm716, 0
        %v739 = vunpack.c.l.b16 %v700
        %v740 = vunpack.c.h.b16 %v700
        %v741 = vunpack.c.l.b16 %v701
        %v742 = vunpack.c.h.b16 %v701
        %v743 = vunpack.c.l.b16 %v702
        %v744 = vunpack.c.h.b16 %v702
        %v745 = vunpack.c.l.b16 %v703
        %v746 = vunpack.c.h.b16 %v703
        %v747 = vunpack.c.l.b16 %v704
        %v748 = vunpack.c.h.b16 %v704
        %v749 = vunpack.c.l.b16 %v705
        %v750 = vunpack.c.h.b16 %v705
        %v751 = vunpack.c.l.b16 %v706
        %v752 = vunpack.c.h.b16 %v706
        %v753 = vunpack.c.l.b16 %v707
        %v754 = vunpack.c.h.b16 %v707
        %v755 = vunpack.c.l.b16 %v708
        %v756 = vunpack.c.h.b16 %v708
        %v757 = vunpack.c.l.b16 %v709
        %v758 = vunpack.c.h.b16 %v709
        %v759 = vunpack.c.l.b16 %v710
        %v760 = vunpack.c.h.b16 %v710
        %v761 = vunpack.c.l.b16 %v711
        %v762 = vunpack.c.h.b16 %v711
        %v763 = vunpack.c.l.b16 %v712
        %v764 = vunpack.c.h.b16 %v712
        %v765 = vunpack.c.l.b16 %v713
        %v766 = vunpack.c.h.b16 %v713
        %v767 = vunpack.c.l.b16 %v714
        %v768 = vunpack.c.h.b16 %v714
        %v769 = vunpack.c.l.b16 %v715
        %v770 = vunpack.c.h.b16 %v715
        %v771 = vpack.c.b16 %v739, %v739
        %v772 = vpack.c.b16 %v740, %v740
        %v773 = vpack.c.b16 %v741, %v741
        %v774 = vpack.c.b16 %v742, %v742
        %v775 = vpack.c.b16 %v743, %v743
        %v776 = vpack.c.b16 %v744, %v744
        %v777 = vpack.c.b16 %v745, %v745
        %v778 = vpack.c.b16 %v746, %v746
        %v779 = vpack.c.b16 %v747, %v747
        %v780 = vpack.c.b16 %v748, %v748
        %v781 = vpack.c.b16 %v749, %v749
        %v782 = vpack.c.b16 %v750, %v750
        %v783 = vpack.c.b16 %v751, %v751
        %v784 = vpack.c.b16 %v752, %v752
        %v785 = vpack.c.b16 %v753, %v753
        %v786 = vpack.c.b16 %v754, %v754
        %v787 = vpack.c.b16 %v755, %v755
        %v788 = vpack.c.b16 %v756, %v756
        %v789 = vpack.c.b16 %v757, %v757
        %v790 = vpack.c.b16 %v758, %v758
        %v791 = vpack.c.b16 %v759, %v759
        %v792 = vpack.c.b16 %v760, %v760
        %v793 = vpack.c.b16 %v761, %v761
        %v794 = vpack.c.b16 %v762, %v762
        %v795 = vpack.c.b16 %v763, %v763
        %v796 = vpack.c.b16 %v764, %v764
        %v797 = vpack.c.b16 %v765, %v765
        %v798 = vpack.c.b16 %v766, %v766
        %v799 = vpack.c.b16 %v767, %v767
        %v800 = vpack.c.b16 %v768, %v768
        %v801 = vpack.c.b16 %v769, %v769
        %v802 = vpack.c.b16 %v770, %v770
        %835 = vst.msk [vmem:[#allocation2 + $0xc] sm:$0xf] %vm716, %v771
        %836 = vst.msk [vmem:[#allocation2 + $0x10] sm:$0xf] %vm716, %v772
        %837 = vst.msk [vmem:[#allocation2 + $0x14] sm:$0xf] %vm716, %v773
        %838 = vst.msk [vmem:[#allocation2 + $0x18] sm:$0xf] %vm716, %v774
        %839 = vst.msk [vmem:[#allocation2 + $0x1c] sm:$0xf] %vm716, %v775
        %840 = vst.msk [vmem:[#allocation2 + $0x20] sm:$0xf] %vm716, %v776
        %841 = vst.msk [vmem:[#allocation2 + $0x24] sm:$0xf] %vm716, %v777
        %842 = vst.msk [vmem:[#allocation2 + $0x28] sm:$0xf] %vm716, %v778
        %843 = vst.msk [vmem:[#allocation2 + $0x2c] sm:$0xf] %vm716, %v779
        %844 = vst.msk [vmem:[#allocation2 + $0x30] sm:$0xf] %vm716, %v780
        %845 = vst.msk [vmem:[#allocation2 + $0x34] sm:$0xf] %vm716, %v781
        %846 = vst.msk [vmem:[#allocation2 + $0x38] sm:$0xf] %vm716, %v782
        %847 = vst.msk [vmem:[#allocation2 + $0x3c] sm:$0xf] %vm716, %v783
        %848 = vst.msk [vmem:[#allocation2 + $0x40] sm:$0xf] %vm716, %v784
        %849 = vst.msk [vmem:[#allocation2 + $0x44] sm:$0xf] %vm716, %v785
        %850 = vst.msk [vmem:[#allocation2 + $0x48] sm:$0xf] %vm716, %v786
        %851 = vst.msk [vmem:[#allocation2 + $0x4c] sm:$0xf] %vm716, %v787
        %852 = vst.msk [vmem:[#allocation2 + $0x50] sm:$0xf] %vm716, %v788
        %853 = vst.msk [vmem:[#allocation2 + $0x54] sm:$0xf] %vm716, %v789
        %854 = vst.msk [vmem:[#allocation2 + $0x58] sm:$0xf] %vm716, %v790
        %855 = vst.msk [vmem:[#allocation2 + $0x5c] sm:$0xf] %vm716, %v791
        %856 = vst.msk [vmem:[#allocation2 + $0x60] sm:$0xf] %vm716, %v792
        %857 = vst.msk [vmem:[#allocation2 + $0x64] sm:$0xf] %vm716, %v793
        %858 = vst.msk [vmem:[#allocation2 + $0x68] sm:$0xf] %vm716, %v794
        %859 = vst.msk [vmem:[#allocation2 + $0x6c] sm:$0xf] %vm716, %v795
        %860 = vst.msk [vmem:[#allocation2 + $0x70] sm:$0xf] %vm716, %v796
        %861 = vst.msk [vmem:[#allocation2 + $0x74] sm:$0xf] %vm716, %v797
        %862 = vst.msk [vmem:[#allocation2 + $0x78] sm:$0xf] %vm716, %v798
        %863 = vst.msk [vmem:[#allocation2 + $0x7c] sm:$0xf] %vm716, %v799
        %864 = vst.msk [vmem:[#allocation2 + $0x80] sm:$0xf] %vm716, %v800
        %865 = vst.msk [vmem:[#allocation2 + $0x84] sm:$0xf] %vm716, %v801
        %866 = vst.msk [vmem:[#allocation2 + $0x88] sm:$0xf] %vm716, %v802
        %v867 = vlaneseq
        %v868 = vshrl.u32 %v867, 7
        %v869 = vadd.s32 %v868, 8
        %v870 = vld [vmem:[#allocation2] sm:$0x8]
        %v871 = vld [vmem:[#allocation2 + $0x4] sm:$0xf]
        %v872 = vld [vmem:[#allocation2 + $0x8] sm:$0xf]
        %v873 = vld [vmem:[#allocation2 + $0xc] sm:$0xf]
        %v874 = vld [vmem:[#allocation2 + $0x10] sm:$0xf]
        %v875 = vld [vmem:[#allocation2 + $0x14] sm:$0xf]
        %v876 = vld [vmem:[#allocation2 + $0x18] sm:$0xf]
        %v877 = vld [vmem:[#allocation2 + $0x1c] sm:$0xf]
        %v878 = vld [vmem:[#allocation2 + $0x20] sm:$0xf]
        %v879 = vld [vmem:[#allocation2 + $0x24] sm:$0xf]
        %v880 = vld [vmem:[#allocation2 + $0x28] sm:$0xf]
        %v881 = vld [vmem:[#allocation2 + $0x2c] sm:$0xf]
        %v882 = vld [vmem:[#allocation2 + $0x30] sm:$0xf]
        %v883 = vld [vmem:[#allocation2 + $0x34] sm:$0xf]
        %v884 = vld [vmem:[#allocation2 + $0x38] sm:$0xf]
        %v885 = vld [vmem:[#allocation2 + $0x3c] sm:$0xf]
        %v886 = vld [vmem:[#allocation2 + $0x40] sm:$0xf]
        %v887 = vld [vmem:[#allocation2 + $0x44] sm:$0xf]
        %v888 = vld [vmem:[#allocation2 + $0x48] sm:$0xf]
        %v889 = vld [vmem:[#allocation2 + $0x4c] sm:$0xf]
        %v890 = vld [vmem:[#allocation2 + $0x50] sm:$0xf]
        %v891 = vld [vmem:[#allocation2 + $0x54] sm:$0xf]
        %v892 = vld [vmem:[#allocation2 + $0x58] sm:$0xf]
        %v893 = vld [vmem:[#allocation2 + $0x5c] sm:$0xf]
        %v894 = vld [vmem:[#allocation2 + $0x60] sm:$0xf]
        %v895 = vld [vmem:[#allocation2 + $0x64] sm:$0xf]
        %v896 = vld [vmem:[#allocation2 + $0x68] sm:$0xf]
        %v897 = vld [vmem:[#allocation2 + $0x6c] sm:$0xf]
        %v898 = vld [vmem:[#allocation2 + $0x70] sm:$0xf]
        %v899 = vld [vmem:[#allocation2 + $0x74] sm:$0xf]
        %v900 = vld [vmem:[#allocation2 + $0x78] sm:$0xf]
        %v901 = vld [vmem:[#allocation2 + $0x7c] sm:$0xf]
        %v902 = vld [vmem:[#allocation2 + $0x80] sm:$0xf]
        %vm903 = vcmp.ge.s32.totalorder %v868, 1
        %vm904 = vcmp.ge.s32.totalorder %v869, 1
        %v905 = vsel %vm903, 1, 0
        %v906 = vsel %vm904, 1, 0
        %vm907 = vcmp.eq.s32.totalorder %v905, 1
        %vm908 = vcmp.eq.s32.totalorder %v906, 1
        %vm909 = vmpackc.low %vm907, %vm907
        %vm910 = vmpackc.low %vm908, %vm908
        %v911 = vsel %vm909, 65537, 0
        %v912 = vsel %vm910, 65537, 0
        %vm913 = vsmask.f32 3328
        %vm914 = vsmask.f32 7440
        %vm915 = vmor %vm913, %vm914
        %v917 = vshll.u32 %v911, 16
        %v919 = vrot.slane %v917, 5
        %v920 = vshrl.u32 %v911, 16
        %v922 = vrot.slane %v920, 4
        %v923 = vor.u32 %v922, %v919
        %v924 = vrot.slane %v923, 4
        %v926 = vshll.u32 %v912, 16
        %v928 = vrot.slane %v926, 5
        %v929 = vsel %vm915, %v924, %v928
        %v930 = vshrl.u32 %v912, 16
        %v932 = vrot.slane %v930, 4
        %v933 = vor.u32 %v932, %v928
        %v934 = vrot.slane %v933, 4
        %v935 = vsel %vm915, %v934, %v919
        %vm936 = vcmp.ne.s16.totalorder %v919, 0
        %vm937 = vcmp.ne.s16.totalorder %v929, 0
        %vm938 = vcmp.ne.s16.totalorder %v935, 0
        %vm939 = vcmp.ne.s16.totalorder %v934, 0
        %v940 = vsel %vm936, %v870, 0
        %v941 = vsel %vm937, %v871, 0
        %v942 = vsel %vm938, %v872, 0
        %v943 = vsel %vm937, %v873, 0
        %v944 = vsel %vm938, %v874, 0
        %v945 = vsel %vm937, %v875, 0
        %v946 = vsel %vm938, %v876, 0
        %v947 = vsel %vm937, %v877, 0
        %v948 = vsel %vm938, %v878, 0
        %v949 = vsel %vm937, %v879, 0
        %v950 = vsel %vm938, %v880, 0
        %v951 = vsel %vm937, %v881, 0
        %v952 = vsel %vm938, %v882, 0
        %v953 = vsel %vm937, %v883, 0
        %v954 = vsel %vm938, %v884, 0
        %v955 = vsel %vm937, %v885, 0
        %v956 = vsel %vm938, %v886, 0
        %v957 = vsel %vm937, %v887, 0
        %v958 = vsel %vm938, %v888, 0
        %v959 = vsel %vm937, %v889, 0
        %v960 = vsel %vm938, %v890, 0
        %v961 = vsel %vm937, %v891, 0
        %v962 = vsel %vm938, %v892, 0
        %v963 = vsel %vm937, %v893, 0
        %v964 = vsel %vm938, %v894, 0
        %v965 = vsel %vm937, %v895, 0
        %v966 = vsel %vm938, %v896, 0
        %v967 = vsel %vm937, %v897, 0
        %v968 = vsel %vm938, %v898, 0
        %v969 = vsel %vm937, %v899, 0
        %v970 = vsel %vm938, %v900, 0
        %v971 = vsel %vm937, %v901, 0
        %v972 = vsel %vm939, %v902, 0
        %v973 = vld [vmem:[#allocation2 + $0x84] sm:$0x1]
        %vm974 = vcmp.lt.s32.totalorder %v868, 15
        %vm975 = vcmp.lt.s32.totalorder %v869, 15
        %v976 = vsel %vm974, 1, 0
        %v977 = vsel %vm975, 1, 0
        %vm978 = vcmp.eq.s32.totalorder %v976, 1
        %vm979 = vcmp.eq.s32.totalorder %v977, 1
        %vm980 = vmpackc.low %vm978, %vm978
        %vm981 = vmpackc.low %vm979, %vm979
        %v982 = vsel %vm980, 65537, 0
        %v983 = vsel %vm981, 65537, 0
        %vm984 = vsmask.f32 256
        %vm985 = vsmask.f32 4368
        %vm986 = vmor %vm984, %vm985
        %v988 = vshrl.u32 %v982, 16
        %v990 = vrot.slane %v988, 7
        %v991 = vshll.u32 %v982, 16
        %v993 = vor.u32 %v990, %v991
        %v994 = vrot.slane %v990, 4
        %v996 = vshrl.u32 %v983, 16
        %v998 = vrot.slane %v996, 7
        %v999 = vshll.u32 %v983, 16
        %v1001 = vor.u32 %v998, %v999
        %v1002 = vsel %vm986, %v994, %v1001
        %v1003 = vrot.slane %v998, 4
        %v1004 = vsel %vm986, %v1003, %v993
        %vm1005 = vcmp.ne.s16.totalorder %v993, 0
        %vm1006 = vcmp.ne.s16.totalorder %v1002, 0
        %vm1007 = vcmp.ne.s16.totalorder %v1004, 0
        %vm1008 = vcmp.ne.s16.totalorder %v1003, 0
        %v1009 = vsel %vm1005, %v871, 0
        %v1010 = vsel %vm1006, %v872, 0
        %v1011 = vsel %vm1007, %v873, 0
        %v1012 = vsel %vm1006, %v874, 0
        %v1013 = vsel %vm1007, %v875, 0
        %v1014 = vsel %vm1006, %v876, 0
        %v1015 = vsel %vm1007, %v877, 0
        %v1016 = vsel %vm1006, %v878, 0
        %v1017 = vsel %vm1007, %v879, 0
        %v1018 = vsel %vm1006, %v880, 0
        %v1019 = vsel %vm1007, %v881, 0
        %v1020 = vsel %vm1006, %v882, 0
        %v1021 = vsel %vm1007, %v883, 0
        %v1022 = vsel %vm1006, %v884, 0
        %v1023 = vsel %vm1007, %v885, 0
        %v1024 = vsel %vm1006, %v886, 0
        %v1025 = vsel %vm1007, %v887, 0
        %v1026 = vsel %vm1006, %v888, 0
        %v1027 = vsel %vm1007, %v889, 0
        %v1028 = vsel %vm1006, %v890, 0
        %v1029 = vsel %vm1007, %v891, 0
        %v1030 = vsel %vm1006, %v892, 0
        %v1031 = vsel %vm1007, %v893, 0
        %v1032 = vsel %vm1006, %v894, 0
        %v1033 = vsel %vm1007, %v895, 0
        %v1034 = vsel %vm1006, %v896, 0
        %v1035 = vsel %vm1007, %v897, 0
        %v1036 = vsel %vm1006, %v898, 0
        %v1037 = vsel %vm1007, %v899, 0
        %v1038 = vsel %vm1006, %v900, 0
        %v1039 = vsel %vm1007, %v901, 0
        %v1040 = vsel %vm1006, %v902, 0
        %v1041 = vsel %vm1008, %v973, 0
        %v1042 = vld [vmem:[#allocation2 + $0x8] sm:$0x8]
        %v1043 = vld [vmem:[#allocation2 + $0x84] sm:$0xf]
        %v1044 = vld [vmem:[#allocation2 + $0x88] sm:$0xf]
        %v1045 = vsel %vm936, %v1042, 0
        %v1046 = vsel %vm938, %v902, 0
        %v1047 = vsel %vm937, %v1043, 0
        %v1048 = vsel %vm939, %v1044, 0
        %v1049 = vld [vmem:[#allocation2 + $0x8c] sm:$0x1]
        %v1050 = vsel %vm1005, %v873, 0
        %v1051 = vsel %vm1007, %v1043, 0
        %v1052 = vsel %vm1006, %v1044, 0
        %v1053 = vsel %vm1008, %v1049, 0
        %v1054 = vld [vmem:[#allocation2 + $0x10] sm:$0x8]
        %v1055 = vld [vmem:[#allocation2 + $0x8c] sm:$0xf]
        %v1056 = vld [vmem:[#allocation2 + $0x90] sm:$0xf]
        %v1057 = vsel %vm936, %v1054, 0
        %v1058 = vsel %vm938, %v1044, 0
        %v1059 = vsel %vm937, %v1055, 0
        %v1060 = vsel %vm939, %v1056, 0
        %v1061 = vld [vmem:[#allocation2 + $0x94] sm:$0x1]
        %v1062 = vsel %vm1005, %v875, 0
        %v1063 = vsel %vm1007, %v1055, 0
        %v1064 = vsel %vm1006, %v1056, 0
        %v1065 = vsel %vm1008, %v1061, 0
        %v1099 = vunpack.c.l.b16 %v940
        %v1100 = vunpack.c.l.b16 %v941
        %v1101 = vunpack.c.l.b16 %v942
        %v1102 = vunpack.c.l.b16 %v943
        %v1103 = vunpack.c.l.b16 %v944
        %v1104 = vunpack.c.l.b16 %v945
        %v1105 = vunpack.c.l.b16 %v946
        %v1106 = vunpack.c.l.b16 %v947
        %v1107 = vunpack.c.l.b16 %v948
        %v1108 = vunpack.c.l.b16 %v949
        %v1109 = vunpack.c.l.b16 %v950
        %v1110 = vunpack.c.l.b16 %v951
        %v1111 = vunpack.c.l.b16 %v952
        %v1112 = vunpack.c.l.b16 %v953
        %v1113 = vunpack.c.l.b16 %v954
        %v1114 = vunpack.c.l.b16 %v955
        %v1115 = vunpack.c.l.b16 %v956
        %v1116 = vunpack.c.l.b16 %v957
        %v1117 = vunpack.c.l.b16 %v958
        %v1118 = vunpack.c.l.b16 %v959
        %v1119 = vunpack.c.l.b16 %v960
        %v1120 = vunpack.c.l.b16 %v961
        %v1121 = vunpack.c.l.b16 %v962
        %v1122 = vunpack.c.l.b16 %v963
        %v1123 = vunpack.c.l.b16 %v964
        %v1124 = vunpack.c.l.b16 %v965
        %v1125 = vunpack.c.l.b16 %v966
        %v1126 = vunpack.c.l.b16 %v967
        %v1127 = vunpack.c.l.b16 %v968
        %v1128 = vunpack.c.l.b16 %v969
        %v1129 = vunpack.c.l.b16 %v970
        %v1130 = vunpack.c.l.b16 %v971
        %v1131 = vunpack.c.l.b16 %v972
        %v1132 = vpack.c.b16 %v1100, %v1099
        %v1133 = vpack.c.b16 %v1102, %v1101
        %v1134 = vpack.c.b16 %v1104, %v1103
        %v1135 = vpack.c.b16 %v1106, %v1105
        %v1136 = vpack.c.b16 %v1108, %v1107
        %v1137 = vpack.c.b16 %v1110, %v1109
        %v1138 = vpack.c.b16 %v1112, %v1111
        %v1139 = vpack.c.b16 %v1114, %v1113
        %v1140 = vpack.c.b16 %v1116, %v1115
        %v1141 = vpack.c.b16 %v1118, %v1117
        %v1142 = vpack.c.b16 %v1120, %v1119
        %v1143 = vpack.c.b16 %v1122, %v1121
        %v1144 = vpack.c.b16 %v1124, %v1123
        %v1145 = vpack.c.b16 %v1126, %v1125
        %v1146 = vpack.c.b16 %v1128, %v1127
        %v1147 = vpack.c.b16 %v1130, %v1129
        %v1148 = vpack.c.b16 %v1131, %v1131
        %v1181 = vunpack.c.l.b16 %v871
        %v1182 = vunpack.c.l.b16 %v872
        %v1183 = vunpack.c.l.b16 %v873
        %v1184 = vunpack.c.l.b16 %v874
        %v1185 = vunpack.c.l.b16 %v875
        %v1186 = vunpack.c.l.b16 %v876
        %v1187 = vunpack.c.l.b16 %v877
        %v1188 = vunpack.c.l.b16 %v878
        %v1189 = vunpack.c.l.b16 %v879
        %v1190 = vunpack.c.l.b16 %v880
        %v1191 = vunpack.c.l.b16 %v881
        %v1192 = vunpack.c.l.b16 %v882
        %v1193 = vunpack.c.l.b16 %v883
        %v1194 = vunpack.c.l.b16 %v884
        %v1195 = vunpack.c.l.b16 %v885
        %v1196 = vunpack.c.l.b16 %v886
        %v1197 = vunpack.c.l.b16 %v887
        %v1198 = vunpack.c.l.b16 %v888
        %v1199 = vunpack.c.l.b16 %v889
        %v1200 = vunpack.c.l.b16 %v890
        %v1201 = vunpack.c.l.b16 %v891
        %v1202 = vunpack.c.l.b16 %v892
        %v1203 = vunpack.c.l.b16 %v893
        %v1204 = vunpack.c.l.b16 %v894
        %v1205 = vunpack.c.l.b16 %v895
        %v1206 = vunpack.c.l.b16 %v896
        %v1207 = vunpack.c.l.b16 %v897
        %v1208 = vunpack.c.l.b16 %v898
        %v1209 = vunpack.c.l.b16 %v899
        %v1210 = vunpack.c.l.b16 %v900
        %v1211 = vunpack.c.l.b16 %v901
        %v1212 = vunpack.c.l.b16 %v902
        %v1213 = vpack.c.b16 %v1182, %v1181
        %v1214 = vpack.c.b16 %v1184, %v1183
        %v1215 = vpack.c.b16 %v1186, %v1185
        %v1216 = vpack.c.b16 %v1188, %v1187
        %v1217 = vpack.c.b16 %v1190, %v1189
        %v1218 = vpack.c.b16 %v1192, %v1191
        %v1219 = vpack.c.b16 %v1194, %v1193
        %v1220 = vpack.c.b16 %v1196, %v1195
        %v1221 = vpack.c.b16 %v1198, %v1197
        %v1222 = vpack.c.b16 %v1200, %v1199
        %v1223 = vpack.c.b16 %v1202, %v1201
        %v1224 = vpack.c.b16 %v1204, %v1203
        %v1225 = vpack.c.b16 %v1206, %v1205
        %v1226 = vpack.c.b16 %v1208, %v1207
        %v1227 = vpack.c.b16 %v1210, %v1209
        %v1228 = vpack.c.b16 %v1212, %v1211
        %v1230 = vshrl.u32 %v1213, 16
        %v1232 = vrot.slane %v1230, 4
        %v1233 = vshll.u32 %v1213, 16
        %v1235 = vrot.slane %v1233, 5
        %v1236 = vor.u32 %v1232, %v1235
        %v1238 = vshrl.u32 %v1214, 16
        %v1240 = vrot.slane %v1238, 4
        %v1241 = vshll.u32 %v1214, 16
        %v1243 = vrot.slane %v1241, 5
        %v1244 = vor.u32 %v1240, %v1243
        %v1245 = vsel %vm913, %v1236, %v1244
        %v1247 = vshrl.u32 %v1215, 16
        %v1249 = vrot.slane %v1247, 4
        %v1250 = vshll.u32 %v1215, 16
        %v1252 = vrot.slane %v1250, 5
        %v1253 = vor.u32 %v1249, %v1252
        %v1254 = vsel %vm913, %v1244, %v1253
        %v1256 = vshrl.u32 %v1216, 16
        %v1258 = vrot.slane %v1256, 4
        %v1259 = vshll.u32 %v1216, 16
        %v1261 = vrot.slane %v1259, 5
        %v1262 = vor.u32 %v1258, %v1261
        %v1263 = vsel %vm913, %v1253, %v1262
        %v1265 = vshrl.u32 %v1217, 16
        %v1267 = vrot.slane %v1265, 4
        %v1268 = vshll.u32 %v1217, 16
        %v1270 = vrot.slane %v1268, 5
        %v1271 = vor.u32 %v1267, %v1270
        %v1272 = vsel %vm913, %v1262, %v1271
        %v1274 = vshrl.u32 %v1218, 16
        %v1276 = vrot.slane %v1274, 4
        %v1277 = vshll.u32 %v1218, 16
        %v1279 = vrot.slane %v1277, 5
        %v1280 = vor.u32 %v1276, %v1279
        %v1281 = vsel %vm913, %v1271, %v1280
        %v1283 = vshrl.u32 %v1219, 16
        %v1285 = vrot.slane %v1283, 4
        %v1286 = vshll.u32 %v1219, 16
        %v1288 = vrot.slane %v1286, 5
        %v1289 = vor.u32 %v1285, %v1288
        %v1290 = vsel %vm913, %v1280, %v1289
        %v1292 = vshrl.u32 %v1220, 16
        %v1294 = vrot.slane %v1292, 4
        %v1295 = vshll.u32 %v1220, 16
        %v1297 = vrot.slane %v1295, 5
        %v1298 = vor.u32 %v1294, %v1297
        %v1299 = vsel %vm913, %v1289, %v1298
        %v1301 = vshrl.u32 %v1221, 16
        %v1303 = vrot.slane %v1301, 4
        %v1304 = vshll.u32 %v1221, 16
        %v1306 = vrot.slane %v1304, 5
        %v1307 = vor.u32 %v1303, %v1306
        %v1308 = vsel %vm913, %v1298, %v1307
        %v1310 = vshrl.u32 %v1222, 16
        %v1312 = vrot.slane %v1310, 4
        %v1313 = vshll.u32 %v1222, 16
        %v1315 = vrot.slane %v1313, 5
        %v1316 = vor.u32 %v1312, %v1315
        %v1317 = vsel %vm913, %v1307, %v1316
        %v1319 = vshrl.u32 %v1223, 16
        %v1321 = vrot.slane %v1319, 4
        %v1322 = vshll.u32 %v1223, 16
        %v1324 = vrot.slane %v1322, 5
        %v1325 = vor.u32 %v1321, %v1324
        %v1326 = vsel %vm913, %v1316, %v1325
        %v1328 = vshrl.u32 %v1224, 16
        %v1330 = vrot.slane %v1328, 4
        %v1331 = vshll.u32 %v1224, 16
        %v1333 = vrot.slane %v1331, 5
        %v1334 = vor.u32 %v1330, %v1333
        %v1335 = vsel %vm913, %v1325, %v1334
        %v1337 = vshrl.u32 %v1225, 16
        %v1339 = vrot.slane %v1337, 4
        %v1340 = vshll.u32 %v1225, 16
        %v1342 = vrot.slane %v1340, 5
        %v1343 = vor.u32 %v1339, %v1342
        %v1344 = vsel %vm913, %v1334, %v1343
        %v1346 = vshrl.u32 %v1226, 16
        %v1348 = vrot.slane %v1346, 4
        %v1349 = vshll.u32 %v1226, 16
        %v1351 = vrot.slane %v1349, 5
        %v1352 = vor.u32 %v1348, %v1351
        %v1353 = vsel %vm913, %v1343, %v1352
        %v1355 = vshrl.u32 %v1227, 16
        %v1357 = vrot.slane %v1355, 4
        %v1358 = vshll.u32 %v1227, 16
        %v1360 = vrot.slane %v1358, 5
        %v1361 = vor.u32 %v1357, %v1360
        %v1362 = vsel %vm913, %v1352, %v1361
        %v1364 = vshrl.u32 %v1228, 16
        %v1366 = vrot.slane %v1364, 4
        %v1367 = vshll.u32 %v1228, 16
        %v1369 = vrot.slane %v1367, 5
        %v1370 = vor.u32 %v1366, %v1369
        %v1371 = vsel %vm913, %v1361, %v1370
        %1372 = vrot.lane.b32.xlu0 %v1236, 4
        %v1373 = vpop.permute.xlu0 %1372
        %1374 = vrot.lane.b32.xlu0 %v1245, 4
        %v1375 = vpop.permute.xlu0 %1374
        %1376 = vrot.lane.b32.xlu0 %v1254, 4
        %v1377 = vpop.permute.xlu0 %1376
        %1378 = vrot.lane.b32.xlu0 %v1263, 4
        %v1379 = vpop.permute.xlu0 %1378
        %1380 = vrot.lane.b32.xlu0 %v1272, 4
        %v1381 = vpop.permute.xlu0 %1380
        %1382 = vrot.lane.b32.xlu0 %v1281, 4
        %v1383 = vpop.permute.xlu0 %1382
        %1384 = vrot.lane.b32.xlu0 %v1290, 4
        %v1385 = vpop.permute.xlu0 %1384
        %1386 = vrot.lane.b32.xlu0 %v1299, 4
        %v1387 = vpop.permute.xlu0 %1386
        %1388 = vrot.lane.b32.xlu0 %v1308, 4
        %v1389 = vpop.permute.xlu0 %1388
        %1390 = vrot.lane.b32.xlu0 %v1317, 4
        %v1391 = vpop.permute.xlu0 %1390
        %1392 = vrot.lane.b32.xlu0 %v1326, 4
        %v1393 = vpop.permute.xlu0 %1392
        %1394 = vrot.lane.b32.xlu0 %v1335, 4
        %v1395 = vpop.permute.xlu0 %1394
        %1396 = vrot.lane.b32.xlu0 %v1344, 4
        %v1397 = vpop.permute.xlu0 %1396
        %1398 = vrot.lane.b32.xlu0 %v1353, 4
        %v1399 = vpop.permute.xlu0 %1398
        %1400 = vrot.lane.b32.xlu0 %v1362, 4
        %v1401 = vpop.permute.xlu0 %1400
        %1402 = vrot.lane.b32.xlu0 %v1371, 4
        %v1403 = vpop.permute.xlu0 %1402
        %1404 = vrot.lane.b32.xlu0 %v1370, 4
        %v1405 = vpop.permute.xlu0 %1404
        %v1439 = vunpack.c.l.b16 %v1009
        %v1440 = vunpack.c.l.b16 %v1010
        %v1441 = vunpack.c.l.b16 %v1011
        %v1442 = vunpack.c.l.b16 %v1012
        %v1443 = vunpack.c.l.b16 %v1013
        %v1444 = vunpack.c.l.b16 %v1014
        %v1445 = vunpack.c.l.b16 %v1015
        %v1446 = vunpack.c.l.b16 %v1016
        %v1447 = vunpack.c.l.b16 %v1017
        %v1448 = vunpack.c.l.b16 %v1018
        %v1449 = vunpack.c.l.b16 %v1019
        %v1450 = vunpack.c.l.b16 %v1020
        %v1451 = vunpack.c.l.b16 %v1021
        %v1452 = vunpack.c.l.b16 %v1022
        %v1453 = vunpack.c.l.b16 %v1023
        %v1454 = vunpack.c.l.b16 %v1024
        %v1455 = vunpack.c.l.b16 %v1025
        %v1456 = vunpack.c.l.b16 %v1026
        %v1457 = vunpack.c.l.b16 %v1027
        %v1458 = vunpack.c.l.b16 %v1028
        %v1459 = vunpack.c.l.b16 %v1029
        %v1460 = vunpack.c.l.b16 %v1030
        %v1461 = vunpack.c.l.b16 %v1031
        %v1462 = vunpack.c.l.b16 %v1032
        %v1463 = vunpack.c.l.b16 %v1033
        %v1464 = vunpack.c.l.b16 %v1034
        %v1465 = vunpack.c.l.b16 %v1035
        %v1466 = vunpack.c.l.b16 %v1036
        %v1467 = vunpack.c.l.b16 %v1037
        %v1468 = vunpack.c.l.b16 %v1038
        %v1469 = vunpack.c.l.b16 %v1039
        %v1470 = vunpack.c.l.b16 %v1040
        %v1471 = vunpack.c.l.b16 %v1041
        %v1472 = vpack.c.b16 %v1440, %v1439
        %v1473 = vpack.c.b16 %v1442, %v1441
        %v1474 = vpack.c.b16 %v1444, %v1443
        %v1475 = vpack.c.b16 %v1446, %v1445
        %v1476 = vpack.c.b16 %v1448, %v1447
        %v1477 = vpack.c.b16 %v1450, %v1449
        %v1478 = vpack.c.b16 %v1452, %v1451
        %v1479 = vpack.c.b16 %v1454, %v1453
        %v1480 = vpack.c.b16 %v1456, %v1455
        %v1481 = vpack.c.b16 %v1458, %v1457
        %v1482 = vpack.c.b16 %v1460, %v1459
        %v1483 = vpack.c.b16 %v1462, %v1461
        %v1484 = vpack.c.b16 %v1464, %v1463
        %v1485 = vpack.c.b16 %v1466, %v1465
        %v1486 = vpack.c.b16 %v1468, %v1467
        %v1487 = vpack.c.b16 %v1470, %v1469
        %v1488 = vpack.c.b16 %v1471, %v1471
        %vm1489 = vcmask 1042432
        %v1490 = vrot.slane %v1472, 5
        %v1491 = vrot.slane %v1473, 5
        %v1492 = vsel %vm1489, %v1490, %v1491
        %v1493 = vrot.slane %v1474, 5
        %v1494 = vsel %vm1489, %v1491, %v1493
        %v1495 = vrot.slane %v1475, 5
        %v1496 = vsel %vm1489, %v1493, %v1495
        %v1497 = vrot.slane %v1476, 5
        %v1498 = vsel %vm1489, %v1495, %v1497
        %v1499 = vrot.slane %v1477, 5
        %v1500 = vsel %vm1489, %v1497, %v1499
        %v1501 = vrot.slane %v1478, 5
        %v1502 = vsel %vm1489, %v1499, %v1501
        %v1503 = vrot.slane %v1479, 5
        %v1504 = vsel %vm1489, %v1501, %v1503
        %v1505 = vrot.slane %v1480, 5
        %v1506 = vsel %vm1489, %v1503, %v1505
        %v1507 = vrot.slane %v1481, 5
        %v1508 = vsel %vm1489, %v1505, %v1507
        %v1509 = vrot.slane %v1482, 5
        %v1510 = vsel %vm1489, %v1507, %v1509
        %v1511 = vrot.slane %v1483, 5
        %v1512 = vsel %vm1489, %v1509, %v1511
        %v1513 = vrot.slane %v1484, 5
        %v1514 = vsel %vm1489, %v1511, %v1513
        %v1515 = vrot.slane %v1485, 5
        %v1516 = vsel %vm1489, %v1513, %v1515
        %v1517 = vrot.slane %v1486, 5
        %v1518 = vsel %vm1489, %v1515, %v1517
        %v1519 = vrot.slane %v1487, 5
        %v1520 = vsel %vm1489, %v1517, %v1519
        %v1521 = vrot.slane %v1488, 5
        %v1522 = vsel %vm1489, %v1519, %v1521
        %1523 = vrot.lane.b32.xlu0 %v1490, 8
        %v1524 = vpop.permute.xlu0 %1523
        %1525 = vrot.lane.b32.xlu0 %v1492, 8
        %v1526 = vpop.permute.xlu0 %1525
        %1527 = vrot.lane.b32.xlu0 %v1494, 8
        %v1528 = vpop.permute.xlu0 %1527
        %1529 = vrot.lane.b32.xlu0 %v1496, 8
        %v1530 = vpop.permute.xlu0 %1529
        %1531 = vrot.lane.b32.xlu0 %v1498, 8
        %v1532 = vpop.permute.xlu0 %1531
        %1533 = vrot.lane.b32.xlu0 %v1500, 8
        %v1534 = vpop.permute.xlu0 %1533
        %1535 = vrot.lane.b32.xlu0 %v1502, 8
        %v1536 = vpop.permute.xlu0 %1535
        %1537 = vrot.lane.b32.xlu0 %v1504, 8
        %v1538 = vpop.permute.xlu0 %1537
        %1539 = vrot.lane.b32.xlu0 %v1506, 8
        %v1540 = vpop.permute.xlu0 %1539
        %1541 = vrot.lane.b32.xlu0 %v1508, 8
        %v1542 = vpop.permute.xlu0 %1541
        %1543 = vrot.lane.b32.xlu0 %v1510, 8
        %v1544 = vpop.permute.xlu0 %1543
        %1545 = vrot.lane.b32.xlu0 %v1512, 8
        %v1546 = vpop.permute.xlu0 %1545
        %1547 = vrot.lane.b32.xlu0 %v1514, 8
        %v1548 = vpop.permute.xlu0 %1547
        %1549 = vrot.lane.b32.xlu0 %v1516, 8
        %v1550 = vpop.permute.xlu0 %1549
        %1551 = vrot.lane.b32.xlu0 %v1518, 8
        %v1552 = vpop.permute.xlu0 %1551
        %1553 = vrot.lane.b32.xlu0 %v1520, 8
        %v1554 = vpop.permute.xlu0 %1553
        %1555 = vrot.lane.b32.xlu0 %v1522, 8
        %v1556 = vpop.permute.xlu0 %1555
        %v1561 = vunpack.c.l.b16 %v1045
        %v1562 = vunpack.c.l.b16 %v1046
        %v1563 = vunpack.c.l.b16 %v1047
        %v1564 = vunpack.c.l.b16 %v1048
        %v1565 = vpack.c.b16 %v1102, %v1561
        %v1566 = vpack.c.b16 %v1563, %v1562
        %v1567 = vpack.c.b16 %v1564, %v1564
        %1568 = vrot.lane.b32.xlu0 %v1565, 12
        %v1569 = vpop.permute.xlu0 %1568
        %1570 = vrot.lane.b32.xlu0 %v1134, 12
        %v1571 = vpop.permute.xlu0 %1570
        %1572 = vrot.lane.b32.xlu0 %v1135, 12
        %v1573 = vpop.permute.xlu0 %1572
        %1574 = vrot.lane.b32.xlu0 %v1136, 12
        %v1575 = vpop.permute.xlu0 %1574
        %1576 = vrot.lane.b32.xlu0 %v1137, 12
        %v1577 = vpop.permute.xlu0 %1576
        %1578 = vrot.lane.b32.xlu0 %v1138, 12
        %v1579 = vpop.permute.xlu0 %1578
        %1580 = vrot.lane.b32.xlu0 %v1139, 12
        %v1581 = vpop.permute.xlu0 %1580
        %1582 = vrot.lane.b32.xlu0 %v1140, 12
        %v1583 = vpop.permute.xlu0 %1582
        %1584 = vrot.lane.b32.xlu0 %v1141, 12
        %v1585 = vpop.permute.xlu0 %1584
        %1586 = vrot.lane.b32.xlu0 %v1142, 12
        %v1587 = vpop.permute.xlu0 %1586
        %1588 = vrot.lane.b32.xlu0 %v1143, 12
        %v1589 = vpop.permute.xlu0 %1588
        %1590 = vrot.lane.b32.xlu0 %v1144, 12
        %v1591 = vpop.permute.xlu0 %1590
        %1592 = vrot.lane.b32.xlu0 %v1145, 12
        %v1593 = vpop.permute.xlu0 %1592
        %1594 = vrot.lane.b32.xlu0 %v1146, 12
        %v1595 = vpop.permute.xlu0 %1594
        %1596 = vrot.lane.b32.xlu0 %v1147, 12
        %v1597 = vpop.permute.xlu0 %1596
        %1598 = vrot.lane.b32.xlu0 %v1566, 12
        %v1599 = vpop.permute.xlu0 %1598
        %1600 = vrot.lane.b32.xlu0 %v1567, 12
        %v1601 = vpop.permute.xlu0 %1600
        %v1603 = vshrl.u32 %v700, 16
        %v1605 = vrot.slane %v1603, 4
        %v1606 = vshll.u32 %v700, 16
        %v1608 = vrot.slane %v1606, 5
        %v1609 = vor.u32 %v1605, %v1608
        %v1611 = vshrl.u32 %v701, 16
        %v1613 = vrot.slane %v1611, 4
        %v1614 = vshll.u32 %v701, 16
        %v1616 = vrot.slane %v1614, 5
        %v1617 = vor.u32 %v1613, %v1616
        %v1618 = vsel %vm913, %v1609, %v1617
        %v1620 = vshrl.u32 %v702, 16
        %v1622 = vrot.slane %v1620, 4
        %v1623 = vshll.u32 %v702, 16
        %v1625 = vrot.slane %v1623, 5
        %v1626 = vor.u32 %v1622, %v1625
        %v1627 = vsel %vm913, %v1617, %v1626
        %v1629 = vshrl.u32 %v703, 16
        %v1631 = vrot.slane %v1629, 4
        %v1632 = vshll.u32 %v703, 16
        %v1634 = vrot.slane %v1632, 5
        %v1635 = vor.u32 %v1631, %v1634
        %v1636 = vsel %vm913, %v1626, %v1635
        %v1638 = vshrl.u32 %v704, 16
        %v1640 = vrot.slane %v1638, 4
        %v1641 = vshll.u32 %v704, 16
        %v1643 = vrot.slane %v1641, 5
        %v1644 = vor.u32 %v1640, %v1643
        %v1645 = vsel %vm913, %v1635, %v1644
        %v1647 = vshrl.u32 %v705, 16
        %v1649 = vrot.slane %v1647, 4
        %v1650 = vshll.u32 %v705, 16
        %v1652 = vrot.slane %v1650, 5
        %v1653 = vor.u32 %v1649, %v1652
        %v1654 = vsel %vm913, %v1644, %v1653
        %v1656 = vshrl.u32 %v706, 16
        %v1658 = vrot.slane %v1656, 4
        %v1659 = vshll.u32 %v706, 16
        %v1661 = vrot.slane %v1659, 5
        %v1662 = vor.u32 %v1658, %v1661
        %v1663 = vsel %vm913, %v1653, %v1662
        %v1665 = vshrl.u32 %v707, 16
        %v1667 = vrot.slane %v1665, 4
        %v1668 = vshll.u32 %v707, 16
        %v1670 = vrot.slane %v1668, 5
        %v1671 = vor.u32 %v1667, %v1670
        %v1672 = vsel %vm913, %v1662, %v1671
        %v1674 = vshrl.u32 %v708, 16
        %v1676 = vrot.slane %v1674, 4
        %v1677 = vshll.u32 %v708, 16
        %v1679 = vrot.slane %v1677, 5
        %v1680 = vor.u32 %v1676, %v1679
        %v1681 = vsel %vm913, %v1671, %v1680
        %v1683 = vshrl.u32 %v709, 16
        %v1685 = vrot.slane %v1683, 4
        %v1686 = vshll.u32 %v709, 16
        %v1688 = vrot.slane %v1686, 5
        %v1689 = vor.u32 %v1685, %v1688
        %v1690 = vsel %vm913, %v1680, %v1689
        %v1692 = vshrl.u32 %v710, 16
        %v1694 = vrot.slane %v1692, 4
        %v1695 = vshll.u32 %v710, 16
        %v1697 = vrot.slane %v1695, 5
        %v1698 = vor.u32 %v1694, %v1697
        %v1699 = vsel %vm913, %v1689, %v1698
        %v1701 = vshrl.u32 %v711, 16
        %v1703 = vrot.slane %v1701, 4
        %v1704 = vshll.u32 %v711, 16
        %v1706 = vrot.slane %v1704, 5
        %v1707 = vor.u32 %v1703, %v1706
        %v1708 = vsel %vm913, %v1698, %v1707
        %v1710 = vshrl.u32 %v712, 16
        %v1712 = vrot.slane %v1710, 4
        %v1713 = vshll.u32 %v712, 16
        %v1715 = vrot.slane %v1713, 5
        %v1716 = vor.u32 %v1712, %v1715
        %v1717 = vsel %vm913, %v1707, %v1716
        %v1719 = vshrl.u32 %v713, 16
        %v1721 = vrot.slane %v1719, 4
        %v1722 = vshll.u32 %v713, 16
        %v1724 = vrot.slane %v1722, 5
        %v1725 = vor.u32 %v1721, %v1724
        %v1726 = vsel %vm913, %v1716, %v1725
        %v1728 = vshrl.u32 %v714, 16
        %v1730 = vrot.slane %v1728, 4
        %v1731 = vshll.u32 %v714, 16
        %v1733 = vrot.slane %v1731, 5
        %v1734 = vor.u32 %v1730, %v1733
        %v1735 = vsel %vm913, %v1725, %v1734
        %v1737 = vshrl.u32 %v715, 16
        %v1739 = vrot.slane %v1737, 4
        %v1740 = vshll.u32 %v715, 16
        %v1742 = vrot.slane %v1740, 5
        %v1743 = vor.u32 %v1739, %v1742
        %v1744 = vsel %vm913, %v1734, %v1743
        %1745 = vrot.lane.b32.xlu0 %v1609, 16
        %v1746 = vpop.permute.xlu0 %1745
        %1747 = vrot.lane.b32.xlu0 %v1618, 16
        %v1748 = vpop.permute.xlu0 %1747
        %1749 = vrot.lane.b32.xlu0 %v1627, 16
        %v1750 = vpop.permute.xlu0 %1749
        %1751 = vrot.lane.b32.xlu0 %v1636, 16
        %v1752 = vpop.permute.xlu0 %1751
        %1753 = vrot.lane.b32.xlu0 %v1645, 16
        %v1754 = vpop.permute.xlu0 %1753
        %1755 = vrot.lane.b32.xlu0 %v1654, 16
        %v1756 = vpop.permute.xlu0 %1755
        %1757 = vrot.lane.b32.xlu0 %v1663, 16
        %v1758 = vpop.permute.xlu0 %1757
        %1759 = vrot.lane.b32.xlu0 %v1672, 16
        %v1760 = vpop.permute.xlu0 %1759
        %1761 = vrot.lane.b32.xlu0 %v1681, 16
        %v1762 = vpop.permute.xlu0 %1761
        %1763 = vrot.lane.b32.xlu0 %v1690, 16
        %v1764 = vpop.permute.xlu0 %1763
        %1765 = vrot.lane.b32.xlu0 %v1699, 16
        %v1766 = vpop.permute.xlu0 %1765
        %1767 = vrot.lane.b32.xlu0 %v1708, 16
        %v1768 = vpop.permute.xlu0 %1767
        %1769 = vrot.lane.b32.xlu0 %v1717, 16
        %v1770 = vpop.permute.xlu0 %1769
        %1771 = vrot.lane.b32.xlu0 %v1726, 16
        %v1772 = vpop.permute.xlu0 %1771
        %1773 = vrot.lane.b32.xlu0 %v1735, 16
        %v1774 = vpop.permute.xlu0 %1773
        %1775 = vrot.lane.b32.xlu0 %v1744, 16
        %v1776 = vpop.permute.xlu0 %1775
        %1777 = vrot.lane.b32.xlu0 %v1743, 16
        %v1778 = vpop.permute.xlu0 %1777
        %v1783 = vunpack.c.l.b16 %v1050
        %v1784 = vunpack.c.l.b16 %v1051
        %v1785 = vunpack.c.l.b16 %v1052
        %v1786 = vunpack.c.l.b16 %v1053
        %v1787 = vpack.c.b16 %v1442, %v1783
        %v1788 = vpack.c.b16 %v1785, %v1784
        %v1789 = vpack.c.b16 %v1786, %v1786
        %v1790 = vrot.slane %v1787, 5
        %v1791 = vsel %vm1489, %v1790, %v1493
        %v1792 = vrot.slane %v1788, 5
        %v1793 = vsel %vm1489, %v1519, %v1792
        %v1794 = vrot.slane %v1789, 5
        %v1795 = vsel %vm1489, %v1792, %v1794
        %1796 = vrot.lane.b32.xlu0 %v1790, 20
        %v1797 = vpop.permute.xlu0 %1796
        %1798 = vrot.lane.b32.xlu0 %v1791, 20
        %v1799 = vpop.permute.xlu0 %1798
        %1800 = vrot.lane.b32.xlu0 %v1496, 20
        %v1801 = vpop.permute.xlu0 %1800
        %1802 = vrot.lane.b32.xlu0 %v1498, 20
        %v1803 = vpop.permute.xlu0 %1802
        %1804 = vrot.lane.b32.xlu0 %v1500, 20
        %v1805 = vpop.permute.xlu0 %1804
        %1806 = vrot.lane.b32.xlu0 %v1502, 20
        %v1807 = vpop.permute.xlu0 %1806
        %1808 = vrot.lane.b32.xlu0 %v1504, 20
        %v1809 = vpop.permute.xlu0 %1808
        %1810 = vrot.lane.b32.xlu0 %v1506, 20
        %v1811 = vpop.permute.xlu0 %1810
        %1812 = vrot.lane.b32.xlu0 %v1508, 20
        %v1813 = vpop.permute.xlu0 %1812
        %1814 = vrot.lane.b32.xlu0 %v1510, 20
        %v1815 = vpop.permute.xlu0 %1814
        %1816 = vrot.lane.b32.xlu0 %v1512, 20
        %v1817 = vpop.permute.xlu0 %1816
        %1818 = vrot.lane.b32.xlu0 %v1514, 20
        %v1819 = vpop.permute.xlu0 %1818
        %1820 = vrot.lane.b32.xlu0 %v1516, 20
        %v1821 = vpop.permute.xlu0 %1820
        %1822 = vrot.lane.b32.xlu0 %v1518, 20
        %v1823 = vpop.permute.xlu0 %1822
        %1824 = vrot.lane.b32.xlu0 %v1520, 20
        %v1825 = vpop.permute.xlu0 %1824
        %1826 = vrot.lane.b32.xlu0 %v1793, 20
        %v1827 = vpop.permute.xlu0 %1826
        %1828 = vrot.lane.b32.xlu0 %v1795, 20
        %v1829 = vpop.permute.xlu0 %1828
        %v1834 = vunpack.c.l.b16 %v1057
        %v1835 = vunpack.c.l.b16 %v1058
        %v1836 = vunpack.c.l.b16 %v1059
        %v1837 = vunpack.c.l.b16 %v1060
        %v1838 = vpack.c.b16 %v1104, %v1834
        %v1839 = vpack.c.b16 %v1836, %v1835
        %v1840 = vpack.c.b16 %v1837, %v1837
        %1841 = vrot.lane.b32.xlu0 %v1838, 24
        %v1842 = vpop.permute.xlu0 %1841
        %1843 = vrot.lane.b32.xlu0 %v1135, 24
        %v1844 = vpop.permute.xlu0 %1843
        %1845 = vrot.lane.b32.xlu0 %v1136, 24
        %v1846 = vpop.permute.xlu0 %1845
        %1847 = vrot.lane.b32.xlu0 %v1137, 24
        %v1848 = vpop.permute.xlu0 %1847
        %1849 = vrot.lane.b32.xlu0 %v1138, 24
        %v1850 = vpop.permute.xlu0 %1849
        %1851 = vrot.lane.b32.xlu0 %v1139, 24
        %v1852 = vpop.permute.xlu0 %1851
        %1853 = vrot.lane.b32.xlu0 %v1140, 24
        %v1854 = vpop.permute.xlu0 %1853
        %1855 = vrot.lane.b32.xlu0 %v1141, 24
        %v1856 = vpop.permute.xlu0 %1855
        %1857 = vrot.lane.b32.xlu0 %v1142, 24
        %v1858 = vpop.permute.xlu0 %1857
        %1859 = vrot.lane.b32.xlu0 %v1143, 24
        %v1860 = vpop.permute.xlu0 %1859
        %1861 = vrot.lane.b32.xlu0 %v1144, 24
        %v1862 = vpop.permute.xlu0 %1861
        %1863 = vrot.lane.b32.xlu0 %v1145, 24
        %v1864 = vpop.permute.xlu0 %1863
        %1865 = vrot.lane.b32.xlu0 %v1146, 24
        %v1866 = vpop.permute.xlu0 %1865
        %1867 = vrot.lane.b32.xlu0 %v1147, 24
        %v1868 = vpop.permute.xlu0 %1867
        %1869 = vrot.lane.b32.xlu0 %v1566, 24
        %v1870 = vpop.permute.xlu0 %1869
        %1871 = vrot.lane.b32.xlu0 %v1839, 24
        %v1872 = vpop.permute.xlu0 %1871
        %1873 = vrot.lane.b32.xlu0 %v1840, 24
        %v1874 = vpop.permute.xlu0 %1873
        %v1879 = vunpack.c.l.b16 %v1043
        %v1880 = vunpack.c.l.b16 %v1044
        %v1881 = vunpack.c.l.b16 %v1055
        %v1882 = vunpack.c.l.b16 %v1056
        %v1883 = vpack.c.b16 %v1880, %v1879
        %v1884 = vpack.c.b16 %v1882, %v1881
        %v1886 = vshrl.u32 %v1883, 16
        %v1888 = vrot.slane %v1886, 4
        %v1889 = vshll.u32 %v1883, 16
        %v1891 = vrot.slane %v1889, 5
        %v1892 = vor.u32 %v1888, %v1891
        %v1893 = vsel %vm913, %v1370, %v1892
        %v1895 = vshrl.u32 %v1884, 16
        %v1897 = vrot.slane %v1895, 4
        %v1898 = vshll.u32 %v1884, 16
        %v1900 = vrot.slane %v1898, 5
        %v1901 = vor.u32 %v1897, %v1900
        %v1902 = vsel %vm913, %v1892, %v1901
        %1903 = vrot.lane.b32.xlu0 %v1253, 28
        %v1904 = vpop.permute.xlu0 %1903
        %1905 = vrot.lane.b32.xlu0 %v1263, 28
        %v1906 = vpop.permute.xlu0 %1905
        %1907 = vrot.lane.b32.xlu0 %v1272, 28
        %v1908 = vpop.permute.xlu0 %1907
        %1909 = vrot.lane.b32.xlu0 %v1281, 28
        %v1910 = vpop.permute.xlu0 %1909
        %1911 = vrot.lane.b32.xlu0 %v1290, 28
        %v1912 = vpop.permute.xlu0 %1911
        %1913 = vrot.lane.b32.xlu0 %v1299, 28
        %v1914 = vpop.permute.xlu0 %1913
        %1915 = vrot.lane.b32.xlu0 %v1308, 28
        %v1916 = vpop.permute.xlu0 %1915
        %1917 = vrot.lane.b32.xlu0 %v1317, 28
        %v1918 = vpop.permute.xlu0 %1917
        %1919 = vrot.lane.b32.xlu0 %v1326, 28
        %v1920 = vpop.permute.xlu0 %1919
        %1921 = vrot.lane.b32.xlu0 %v1335, 28
        %v1922 = vpop.permute.xlu0 %1921
        %1923 = vrot.lane.b32.xlu0 %v1344, 28
        %v1924 = vpop.permute.xlu0 %1923
        %1925 = vrot.lane.b32.xlu0 %v1353, 28
        %v1926 = vpop.permute.xlu0 %1925
        %1927 = vrot.lane.b32.xlu0 %v1362, 28
        %v1928 = vpop.permute.xlu0 %1927
        %1929 = vrot.lane.b32.xlu0 %v1371, 28
        %v1930 = vpop.permute.xlu0 %1929
        %1931 = vrot.lane.b32.xlu0 %v1893, 28
        %v1932 = vpop.permute.xlu0 %1931
        %1933 = vrot.lane.b32.xlu0 %v1902, 28
        %v1934 = vpop.permute.xlu0 %1933
        %1935 = vrot.lane.b32.xlu0 %v1901, 28
        %v1936 = vpop.permute.xlu0 %1935
        %v1941 = vunpack.c.l.b16 %v1062
        %v1942 = vunpack.c.l.b16 %v1063
        %v1943 = vunpack.c.l.b16 %v1064
        %v1944 = vunpack.c.l.b16 %v1065
        %v1945 = vpack.c.b16 %v1444, %v1941
        %v1946 = vpack.c.b16 %v1943, %v1942
        %v1947 = vpack.c.b16 %v1944, %v1944
        %v1948 = vrot.slane %v1945, 5
        %v1949 = vsel %vm1489, %v1948, %v1495
        %v1950 = vrot.slane %v1946, 5
        %v1951 = vsel %vm1489, %v1792, %v1950
        %v1952 = vrot.slane %v1947, 5
        %v1953 = vsel %vm1489, %v1950, %v1952
        %1954 = vrot.lane.b32.xlu0 %v1948, 32
        %v1955 = vpop.permute.xlu0 %1954
        %1956 = vrot.lane.b32.xlu0 %v1949, 32
        %v1957 = vpop.permute.xlu0 %1956
        %1958 = vrot.lane.b32.xlu0 %v1498, 32
        %v1959 = vpop.permute.xlu0 %1958
        %1960 = vrot.lane.b32.xlu0 %v1500, 32
        %v1961 = vpop.permute.xlu0 %1960
        %1962 = vrot.lane.b32.xlu0 %v1502, 32
        %v1963 = vpop.permute.xlu0 %1962
        %1964 = vrot.lane.b32.xlu0 %v1504, 32
        %v1965 = vpop.permute.xlu0 %1964
        %1966 = vrot.lane.b32.xlu0 %v1506, 32
        %v1967 = vpop.permute.xlu0 %1966
        %1968 = vrot.lane.b32.xlu0 %v1508, 32
        %v1969 = vpop.permute.xlu0 %1968
        %1970 = vrot.lane.b32.xlu0 %v1510, 32
        %v1971 = vpop.permute.xlu0 %1970
        %1972 = vrot.lane.b32.xlu0 %v1512, 32
        %v1973 = vpop.permute.xlu0 %1972
        %1974 = vrot.lane.b32.xlu0 %v1514, 32
        %v1975 = vpop.permute.xlu0 %1974
        %1976 = vrot.lane.b32.xlu0 %v1516, 32
        %v1977 = vpop.permute.xlu0 %1976
        %1978 = vrot.lane.b32.xlu0 %v1518, 32
        %v1979 = vpop.permute.xlu0 %1978
        %1980 = vrot.lane.b32.xlu0 %v1520, 32
        %v1981 = vpop.permute.xlu0 %1980
        %1982 = vrot.lane.b32.xlu0 %v1793, 32
        %v1983 = vpop.permute.xlu0 %1982
        %1984 = vrot.lane.b32.xlu0 %v1951, 32
        %v1985 = vpop.permute.xlu0 %1984
        %1986 = vrot.lane.b32.xlu0 %v1953, 32
        %v1987 = vpop.permute.xlu0 %1986
        %v1990 = vsel %vm454, %v1132, %v1373
        %v1993 = vsel %vm454, %v1133, %v1375
        %v1996 = vsel %vm454, %v1134, %v1377
        %v1999 = vsel %vm454, %v1135, %v1379
        %v2002 = vsel %vm454, %v1136, %v1381
        %v2005 = vsel %vm454, %v1137, %v1383
        %v2008 = vsel %vm454, %v1138, %v1385
        %v2011 = vsel %vm454, %v1139, %v1387
        %v2014 = vsel %vm454, %v1140, %v1389
        %v2017 = vsel %vm454, %v1141, %v1391
        %v2020 = vsel %vm454, %v1142, %v1393
        %v2023 = vsel %vm454, %v1143, %v1395
        %v2026 = vsel %vm454, %v1144, %v1397
        %v2029 = vsel %vm454, %v1145, %v1399
        %v2032 = vsel %vm454, %v1146, %v1401
        %v2035 = vsel %vm454, %v1147, %v1403
        %v2038 = vsel %vm454, %v1148, %v1405
        %vm2039 = vcmask 64512
        %v2041 = vsel %vm2039, %v1990, %v1524
        %v2043 = vsel %vm2039, %v1993, %v1526
        %v2045 = vsel %vm2039, %v1996, %v1528
        %v2047 = vsel %vm2039, %v1999, %v1530
        %v2049 = vsel %vm2039, %v2002, %v1532
        %v2051 = vsel %vm2039, %v2005, %v1534
        %v2053 = vsel %vm2039, %v2008, %v1536
        %v2055 = vsel %vm2039, %v2011, %v1538
        %v2057 = vsel %vm2039, %v2014, %v1540
        %v2059 = vsel %vm2039, %v2017, %v1542
        %v2061 = vsel %vm2039, %v2020, %v1544
        %v2063 = vsel %vm2039, %v2023, %v1546
        %v2065 = vsel %vm2039, %v2026, %v1548
        %v2067 = vsel %vm2039, %v2029, %v1550
        %v2069 = vsel %vm2039, %v2032, %v1552
        %v2071 = vsel %vm2039, %v2035, %v1554
        %v2073 = vsel %vm2039, %v2038, %v1556
        %vm2074 = vcmask 97280
        %v2076 = vsel %vm2074, %v2041, %v1569
        %v2078 = vsel %vm2074, %v2043, %v1571
        %v2080 = vsel %vm2074, %v2045, %v1573
        %v2082 = vsel %vm2074, %v2047, %v1575
        %v2084 = vsel %vm2074, %v2049, %v1577
        %v2086 = vsel %vm2074, %v2051, %v1579
        %v2088 = vsel %vm2074, %v2053, %v1581
        %v2090 = vsel %vm2074, %v2055, %v1583
        %v2092 = vsel %vm2074, %v2057, %v1585
        %v2094 = vsel %vm2074, %v2059, %v1587
        %v2096 = vsel %vm2074, %v2061, %v1589
        %v2098 = vsel %vm2074, %v2063, %v1591
        %v2100 = vsel %vm2074, %v2065, %v1593
        %v2102 = vsel %vm2074, %v2067, %v1595
        %v2104 = vsel %vm2074, %v2069, %v1597
        %v2106 = vsel %vm2074, %v2071, %v1599
        %v2108 = vsel %vm2074, %v2073, %v1601
        %vm2109 = vcmask 130048
        %v2111 = vsel %vm2109, %v2076, %v1746
        %v2113 = vsel %vm2109, %v2078, %v1748
        %v2115 = vsel %vm2109, %v2080, %v1750
        %v2117 = vsel %vm2109, %v2082, %v1752
        %v2119 = vsel %vm2109, %v2084, %v1754
        %v2121 = vsel %vm2109, %v2086, %v1756
        %v2123 = vsel %vm2109, %v2088, %v1758
        %v2125 = vsel %vm2109, %v2090, %v1760
        %v2127 = vsel %vm2109, %v2092, %v1762
        %v2129 = vsel %vm2109, %v2094, %v1764
        %v2131 = vsel %vm2109, %v2096, %v1766
        %v2133 = vsel %vm2109, %v2098, %v1768
        %v2135 = vsel %vm2109, %v2100, %v1770
        %v2137 = vsel %vm2109, %v2102, %v1772
        %v2139 = vsel %vm2109, %v2104, %v1774
        %v2141 = vsel %vm2109, %v2106, %v1776
        %v2143 = vsel %vm2109, %v2108, %v1778
        %vm2144 = vcmask 162816
        %v2146 = vsel %vm2144, %v2111, %v1797
        %v2148 = vsel %vm2144, %v2113, %v1799
        %v2150 = vsel %vm2144, %v2115, %v1801
        %v2152 = vsel %vm2144, %v2117, %v1803
        %v2154 = vsel %vm2144, %v2119, %v1805
        %v2156 = vsel %vm2144, %v2121, %v1807
        %v2158 = vsel %vm2144, %v2123, %v1809
        %v2160 = vsel %vm2144, %v2125, %v1811
        %v2162 = vsel %vm2144, %v2127, %v1813
        %v2164 = vsel %vm2144, %v2129, %v1815
        %v2166 = vsel %vm2144, %v2131, %v1817
        %v2168 = vsel %vm2144, %v2133, %v1819
        %v2170 = vsel %vm2144, %v2135, %v1821
        %v2172 = vsel %vm2144, %v2137, %v1823
        %v2174 = vsel %vm2144, %v2139, %v1825
        %v2176 = vsel %vm2144, %v2141, %v1827
        %v2178 = vsel %vm2144, %v2143, %v1829
        %vm2179 = vcmask 195584
        %v2181 = vsel %vm2179, %v2146, %v1842
        %v2183 = vsel %vm2179, %v2148, %v1844
        %v2185 = vsel %vm2179, %v2150, %v1846
        %v2187 = vsel %vm2179, %v2152, %v1848
        %v2189 = vsel %vm2179, %v2154, %v1850
        %v2191 = vsel %vm2179, %v2156, %v1852
        %v2193 = vsel %vm2179, %v2158, %v1854
        %v2195 = vsel %vm2179, %v2160, %v1856
        %v2197 = vsel %vm2179, %v2162, %v1858
        %v2199 = vsel %vm2179, %v2164, %v1860
        %v2201 = vsel %vm2179, %v2166, %v1862
        %v2203 = vsel %vm2179, %v2168, %v1864
        %v2205 = vsel %vm2179, %v2170, %v1866
        %v2207 = vsel %vm2179, %v2172, %v1868
        %v2209 = vsel %vm2179, %v2174, %v1870
        %v2211 = vsel %vm2179, %v2176, %v1872
        %v2213 = vsel %vm2179, %v2178, %v1874
        %vm2214 = vcmask 228352
        %v2216 = vsel %vm2214, %v2181, %v1904
        %v2218 = vsel %vm2214, %v2183, %v1906
        %v2220 = vsel %vm2214, %v2185, %v1908
        %v2222 = vsel %vm2214, %v2187, %v1910
        %v2224 = vsel %vm2214, %v2189, %v1912
        %v2226 = vsel %vm2214, %v2191, %v1914
        %v2228 = vsel %vm2214, %v2193, %v1916
        %v2230 = vsel %vm2214, %v2195, %v1918
        %v2232 = vsel %vm2214, %v2197, %v1920
        %v2234 = vsel %vm2214, %v2199, %v1922
        %v2236 = vsel %vm2214, %v2201, %v1924
        %v2238 = vsel %vm2214, %v2203, %v1926
        %v2240 = vsel %vm2214, %v2205, %v1928
        %v2242 = vsel %vm2214, %v2207, %v1930
        %v2244 = vsel %vm2214, %v2209, %v1932
        %v2246 = vsel %vm2214, %v2211, %v1934
        %v2248 = vsel %vm2214, %v2213, %v1936
        %vm2249 = vcmask 261120
        %v2251 = vsel %vm2249, %v2216, %v1955
        %v2253 = vsel %vm2249, %v2218, %v1957
        %v2255 = vsel %vm2249, %v2220, %v1959
        %v2257 = vsel %vm2249, %v2222, %v1961
        %v2259 = vsel %vm2249, %v2224, %v1963
        %v2261 = vsel %vm2249, %v2226, %v1965
        %v2263 = vsel %vm2249, %v2228, %v1967
        %v2265 = vsel %vm2249, %v2230, %v1969
        %v2267 = vsel %vm2249, %v2232, %v1971
        %v2269 = vsel %vm2249, %v2234, %v1973
        %v2271 = vsel %vm2249, %v2236, %v1975
        %v2273 = vsel %vm2249, %v2238, %v1977
        %v2275 = vsel %vm2249, %v2240, %v1979
        %v2277 = vsel %vm2249, %v2242, %v1981
        %v2279 = vsel %vm2249, %v2244, %v1983
        %v2281 = vsel %vm2249, %v2246, %v1985
        %v2283 = vsel %vm2249, %v2248, %v1987
        %v2284 = vld [vmem:[%s3] sm:$0xf]
        %v2285 = vld [vmem:[%s3 + $0x4] sm:$0xf]
        %v2286 = vld [vmem:[%s3 + $0x8] sm:$0xf]
        %v2287 = vld [vmem:[%s3 + $0xc] sm:$0xf]
        %v2288 = vld [vmem:[%s3 + $0x10] sm:$0x3]
        %v2289 = vld [vmem:[%s4] sm:$0x1]
        %v2291 = vlaneseq
        %v2292 = vshrl.u32 %v2291, 7
        %v2293 = vsub.s32 0, %v2292
        %v2294 = vrot.slane %v2289, %v2293
        %vm2296 = vsmask.f32 4352
        %v2297 = vshrl.u32 %v2251, 16
        %v2299 = vrot.slane %v2297, 3
        %v2300 = vshll.u32 %v2251, 16
        %v2302 = vrot.slane %v2300, 4
        %v2303 = vor.u32 %v2299, %v2302
        %v2304 = vshrl.u32 %v2253, 16
        %v2306 = vrot.slane %v2304, 3
        %v2307 = vshll.u32 %v2253, 16
        %v2309 = vrot.slane %v2307, 4
        %v2310 = vor.u32 %v2306, %v2309
        %v2311 = vsel %vm2296, %v2303, %v2310
        %v2312 = vshrl.u32 %v2255, 16
        %v2314 = vrot.slane %v2312, 3
        %v2315 = vshll.u32 %v2255, 16
        %v2317 = vrot.slane %v2315, 4
        %v2318 = vor.u32 %v2314, %v2317
        %v2319 = vsel %vm2296, %v2310, %v2318
        %v2320 = vshrl.u32 %v2257, 16
        %v2322 = vrot.slane %v2320, 3
        %v2323 = vshll.u32 %v2257, 16
        %v2325 = vrot.slane %v2323, 4
        %v2326 = vor.u32 %v2322, %v2325
        %v2327 = vsel %vm2296, %v2318, %v2326
        %v2328 = vshrl.u32 %v2259, 16
        %v2330 = vrot.slane %v2328, 3
        %v2331 = vshll.u32 %v2259, 16
        %v2333 = vrot.slane %v2331, 4
        %v2334 = vor.u32 %v2330, %v2333
        %v2335 = vsel %vm2296, %v2326, %v2334
        %v2336 = vshrl.u32 %v2261, 16
        %v2338 = vrot.slane %v2336, 3
        %v2339 = vshll.u32 %v2261, 16
        %v2341 = vrot.slane %v2339, 4
        %v2342 = vor.u32 %v2338, %v2341
        %v2343 = vsel %vm2296, %v2334, %v2342
        %v2344 = vshrl.u32 %v2263, 16
        %v2346 = vrot.slane %v2344, 3
        %v2347 = vshll.u32 %v2263, 16
        %v2349 = vrot.slane %v2347, 4
        %v2350 = vor.u32 %v2346, %v2349
        %v2351 = vsel %vm2296, %v2342, %v2350
        %v2352 = vshrl.u32 %v2265, 16
        %v2354 = vrot.slane %v2352, 3
        %v2355 = vshll.u32 %v2265, 16
        %v2357 = vrot.slane %v2355, 4
        %v2358 = vor.u32 %v2354, %v2357
        %v2359 = vsel %vm2296, %v2350, %v2358
        %v2360 = vshrl.u32 %v2267, 16
        %v2362 = vrot.slane %v2360, 3
        %v2363 = vshll.u32 %v2267, 16
        %v2365 = vrot.slane %v2363, 4
        %v2366 = vor.u32 %v2362, %v2365
        %v2367 = vsel %vm2296, %v2358, %v2366
        %v2368 = vshrl.u32 %v2269, 16
        %v2370 = vrot.slane %v2368, 3
        %v2371 = vshll.u32 %v2269, 16
        %v2373 = vrot.slane %v2371, 4
        %v2374 = vor.u32 %v2370, %v2373
        %v2375 = vsel %vm2296, %v2366, %v2374
        %v2376 = vshrl.u32 %v2271, 16
        %v2378 = vrot.slane %v2376, 3
        %v2379 = vshll.u32 %v2271, 16
        %v2381 = vrot.slane %v2379, 4
        %v2382 = vor.u32 %v2378, %v2381
        %v2383 = vsel %vm2296, %v2374, %v2382
        %v2384 = vshrl.u32 %v2273, 16
        %v2386 = vrot.slane %v2384, 3
        %v2387 = vshll.u32 %v2273, 16
        %v2389 = vrot.slane %v2387, 4
        %v2390 = vor.u32 %v2386, %v2389
        %v2391 = vsel %vm2296, %v2382, %v2390
        %v2392 = vshrl.u32 %v2275, 16
        %v2394 = vrot.slane %v2392, 3
        %v2395 = vshll.u32 %v2275, 16
        %v2397 = vrot.slane %v2395, 4
        %v2398 = vor.u32 %v2394, %v2397
        %v2399 = vsel %vm2296, %v2390, %v2398
        %v2400 = vshrl.u32 %v2277, 16
        %v2402 = vrot.slane %v2400, 3
        %v2403 = vshll.u32 %v2277, 16
        %v2405 = vrot.slane %v2403, 4
        %v2406 = vor.u32 %v2402, %v2405
        %v2407 = vsel %vm2296, %v2398, %v2406
        %v2408 = vshrl.u32 %v2279, 16
        %v2410 = vrot.slane %v2408, 3
        %v2411 = vshll.u32 %v2279, 16
        %v2413 = vrot.slane %v2411, 4
        %v2414 = vor.u32 %v2410, %v2413
        %v2415 = vsel %vm2296, %v2406, %v2414
        %v2416 = vshrl.u32 %v2281, 16
        %v2418 = vrot.slane %v2416, 3
        %v2419 = vshll.u32 %v2281, 16
        %v2421 = vrot.slane %v2419, 4
        %v2422 = vor.u32 %v2418, %v2421
        %v2423 = vsel %vm2296, %v2414, %v2422
        %v2424 = vshrl.u32 %v2283, 16
        %v2426 = vrot.slane %v2424, 3
        %v2427 = vshll.u32 %v2283, 16
        %v2429 = vrot.slane %v2427, 4
        %v2430 = vor.u32 %v2426, %v2429
        %v2431 = vsel %vm2296, %v2422, %v2430
        %v2437 = vunpack.c.l.b16 %v2284
        %v2438 = vunpack.c.l.b16 %v2285
        %v2439 = vunpack.c.l.b16 %v2286
        %v2440 = vunpack.c.l.b16 %v2287
        %v2441 = vunpack.c.l.b16 %v2288
        %v2442 = vpack.c.b16 %v2438, %v2437
        %v2443 = vpack.c.b16 %v2440, %v2439
        %v2444 = vpack.c.b16 %v2441, %v2441
        %vm2447 = vcmask 293888
        %v2449 = vsel %vm2447, %v2311, 0
        %v2452 = vsel %vm2447, %v2319, 0
        %v2455 = vsel %vm2447, %v2327, 0
        %v2458 = vsel %vm2447, %v2335, 0
        %v2461 = vsel %vm2447, %v2343, 0
        %v2464 = vsel %vm2447, %v2351, 0
        %v2467 = vsel %vm2447, %v2359, 0
        %v2470 = vsel %vm2447, %v2367, 0
        %v2473 = vsel %vm2447, %v2375, 0
        %v2476 = vsel %vm2447, %v2383, 0
        %v2479 = vsel %vm2447, %v2391, 0
        %v2482 = vsel %vm2447, %v2399, 0
        %v2485 = vsel %vm2447, %v2407, 0
        %v2488 = vsel %vm2447, %v2415, 0
        %v2491 = vsel %vm2447, %v2423, 0
        %v2494 = vsel %vm2447, %v2431, 0
        %v2497 = vsel %vm503, %v2444, 0
        %2499 = vmatprep.subr.bf16.mxu0 0
        %2500 = vmatpush1.bf16.msra.mxu0 0
        %2501 = vmatprep.subr.bf16.mxu0 0
        %2502 = vmatpush1.bf16.msra.mxu0 0
        %2503 = vmatprep.subr.bf16.mxu0 0
        %2504 = vmatpush1.bf16.msra.mxu0 0
        %2505 = vmatprep.subr.bf16.mxu0 0
        %2506 = vmatpush1.bf16.msra.mxu0 0
        %2507 = vmatprep.subr.bf16.mxu0 0
        %2508 = vmatpush1.bf16.msra.mxu0 0
        %2509 = vmatprep.subr.bf16.mxu0 0
        %2510 = vmatpush1.bf16.msra.mxu0 %v2497
        %2511 = vmatprep.subr.bf16.mxu0 0
        %2512 = vmatpush1.bf16.msra.mxu0 %v2443
        %2513 = vmatprep.subr.bf16.mxu0 0
        %2514 = vmatpush1.bf16.msra.mxu0 %v2442
        %2515 = vmatprep.subr.bf16.mxu0 0
        %2516 = vmatpush2.bf16.msra.mxu0 0
        %2517 = vmatprep.subr.bf16.mxu0 0
        %2518 = vmatpush2.bf16.msra.mxu0 0
        %2519 = vmatprep.subr.bf16.mxu0 0
        %2520 = vmatpush2.bf16.msra.mxu0 0
        %2521 = vmatprep.subr.bf16.mxu0 0
        %2522 = vmatpush2.bf16.msra.mxu0 0
        %2523 = vmatprep.subr.bf16.mxu0 0
        %2524 = vmatpush2.bf16.msra.mxu0 0
        %2525 = vmatprep.subr.bf16.mxu0 0
        %2526 = vmatpush2.bf16.msra.mxu0 0
        %2527 = vmatprep.subr.bf16.mxu0 0
        %2528 = vmatpush2.bf16.msra.mxu0 0
        %2529 = vmatprep.subr.bf16.mxu0 0
        %2530 = vmatpush2.bf16.msra.mxu0 0
        %2531 = vmatprep.mubr.bf16.mxu0 0
        %2532 = vmatmul.mubr.bf16.gmra.mxu0 %v2449
        %v2533 = vpop.f32.mrf.mxu0
        %v2534 = vadd.f32 %v2294, %v2533
        %v2535 = vpop.f32.mrf.mxu0
        %v2536 = vpop.f32.mrf.mxu0
        %v2537 = vadd.f32 %v2294, %v2536
        %v2538 = vpop.f32.mrf.mxu0
        %2539 = vmatprep.mubr.bf16.mxu0 0
        %2540 = vmatmul.mubr.bf16.gmra.mxu0 %v2452
        %v2541 = vpop.f32.mrf.mxu0
        %v2542 = vadd.f32 %v2294, %v2541
        %v2543 = vpop.f32.mrf.mxu0
        %v2544 = vpop.f32.mrf.mxu0
        %v2545 = vadd.f32 %v2294, %v2544
        %v2546 = vpop.f32.mrf.mxu0
        %2547 = vmatprep.mubr.bf16.mxu0 0
        %2548 = vmatmul.mubr.bf16.gmra.mxu0 %v2455
        %v2549 = vpop.f32.mrf.mxu0
        %v2550 = vadd.f32 %v2294, %v2549
        %v2551 = vpop.f32.mrf.mxu0
        %v2552 = vpop.f32.mrf.mxu0
        %v2553 = vadd.f32 %v2294, %v2552
        %v2554 = vpop.f32.mrf.mxu0
        %2555 = vmatprep.mubr.bf16.mxu0 0
        %2556 = vmatmul.mubr.bf16.gmra.mxu0 %v2458
        %v2557 = vpop.f32.mrf.mxu0
        %v2558 = vadd.f32 %v2294, %v2557
        %v2559 = vpop.f32.mrf.mxu0
        %v2560 = vpop.f32.mrf.mxu0
        %v2561 = vadd.f32 %v2294, %v2560
        %v2562 = vpop.f32.mrf.mxu0
        %2563 = vmatprep.mubr.bf16.mxu0 0
        %2564 = vmatmul.mubr.bf16.gmra.mxu0 %v2461
        %v2565 = vpop.f32.mrf.mxu0
        %v2566 = vadd.f32 %v2294, %v2565
        %v2567 = vpop.f32.mrf.mxu0
        %v2568 = vpop.f32.mrf.mxu0
        %v2569 = vadd.f32 %v2294, %v2568
        %v2570 = vpop.f32.mrf.mxu0
        %2571 = vmatprep.mubr.bf16.mxu0 0
        %2572 = vmatmul.mubr.bf16.gmra.mxu0 %v2464
        %v2573 = vpop.f32.mrf.mxu0
        %v2574 = vadd.f32 %v2294, %v2573
        %v2575 = vpop.f32.mrf.mxu0
        %v2576 = vpop.f32.mrf.mxu0
        %v2577 = vadd.f32 %v2294, %v2576
        %v2578 = vpop.f32.mrf.mxu0
        %2579 = vmatprep.mubr.bf16.mxu0 0
        %2580 = vmatmul.mubr.bf16.gmra.mxu0 %v2467
        %v2581 = vpop.f32.mrf.mxu0
        %v2582 = vadd.f32 %v2294, %v2581
        %v2583 = vpop.f32.mrf.mxu0
        %v2584 = vpop.f32.mrf.mxu0
        %v2585 = vadd.f32 %v2294, %v2584
        %v2586 = vpop.f32.mrf.mxu0
        %2587 = vmatprep.mubr.bf16.mxu0 0
        %2588 = vmatmul.mubr.bf16.gmra.mxu0 %v2470
        %v2589 = vpop.f32.mrf.mxu0
        %v2590 = vadd.f32 %v2294, %v2589
        %v2591 = vpop.f32.mrf.mxu0
        %v2592 = vpop.f32.mrf.mxu0
        %v2593 = vadd.f32 %v2294, %v2592
        %v2594 = vpop.f32.mrf.mxu0
        %2595 = vmatprep.mubr.bf16.mxu0 0
        %2596 = vmatmul.mubr.bf16.gmra.mxu0 %v2473
        %v2597 = vpop.f32.mrf.mxu0
        %v2598 = vadd.f32 %v2294, %v2597
        %v2599 = vpop.f32.mrf.mxu0
        %v2600 = vpop.f32.mrf.mxu0
        %v2601 = vadd.f32 %v2294, %v2600
        %v2602 = vpop.f32.mrf.mxu0
        %2603 = vmatprep.mubr.bf16.mxu0 0
        %2604 = vmatmul.mubr.bf16.gmra.mxu0 %v2476
        %v2605 = vpop.f32.mrf.mxu0
        %v2606 = vadd.f32 %v2294, %v2605
        %v2607 = vpop.f32.mrf.mxu0
        %v2608 = vpop.f32.mrf.mxu0
        %v2609 = vadd.f32 %v2294, %v2608
        %v2610 = vpop.f32.mrf.mxu0
        %2611 = vmatprep.mubr.bf16.mxu0 0
        %2612 = vmatmul.mubr.bf16.gmra.mxu0 %v2479
        %v2613 = vpop.f32.mrf.mxu0
        %v2614 = vadd.f32 %v2294, %v2613
        %v2615 = vpop.f32.mrf.mxu0
        %v2616 = vpop.f32.mrf.mxu0
        %v2617 = vadd.f32 %v2294, %v2616
        %v2618 = vpop.f32.mrf.mxu0
        %2619 = vmatprep.mubr.bf16.mxu0 0
        %2620 = vmatmul.mubr.bf16.gmra.mxu0 %v2482
        %v2621 = vpop.f32.mrf.mxu0
        %v2622 = vadd.f32 %v2294, %v2621
        %v2623 = vpop.f32.mrf.mxu0
        %v2624 = vpop.f32.mrf.mxu0
        %v2625 = vadd.f32 %v2294, %v2624
        %v2626 = vpop.f32.mrf.mxu0
        %2627 = vmatprep.mubr.bf16.mxu0 0
        %2628 = vmatmul.mubr.bf16.gmra.mxu0 %v2485
        %v2629 = vpop.f32.mrf.mxu0
        %v2630 = vadd.f32 %v2294, %v2629
        %v2631 = vpop.f32.mrf.mxu0
        %v2632 = vpop.f32.mrf.mxu0
        %v2633 = vadd.f32 %v2294, %v2632
        %v2634 = vpop.f32.mrf.mxu0
        %2635 = vmatprep.mubr.bf16.mxu0 0
        %2636 = vmatmul.mubr.bf16.gmra.mxu0 %v2488
        %v2637 = vpop.f32.mrf.mxu0
        %v2638 = vadd.f32 %v2294, %v2637
        %v2639 = vpop.f32.mrf.mxu0
        %v2640 = vpop.f32.mrf.mxu0
        %v2641 = vadd.f32 %v2294, %v2640
        %v2642 = vpop.f32.mrf.mxu0
        %2643 = vmatprep.mubr.bf16.mxu0 0
        %2644 = vmatmul.mubr.bf16.gmra.mxu0 %v2491
        %v2645 = vpop.f32.mrf.mxu0
        %v2646 = vadd.f32 %v2294, %v2645
        %v2647 = vpop.f32.mrf.mxu0
        %v2648 = vpop.f32.mrf.mxu0
        %v2649 = vadd.f32 %v2294, %v2648
        %v2650 = vpop.f32.mrf.mxu0
        %2651 = vmatprep.mubr.bf16.mxu0 0
        %2652 = vmatmul.mubr.bf16.gmra.mxu0 %v2494
        %v2653 = vpop.f32.mrf.mxu0
        %v2654 = vadd.f32 %v2294, %v2653
        %v2655 = vpop.f32.mrf.mxu0
        %v2656 = vpop.f32.mrf.mxu0
        %v2657 = vadd.f32 %v2294, %v2656
        %v2658 = vpop.f32.mrf.mxu0
        %2659 = vdwg.mxu0
        %v2660 = vmax.f32 %v2534, 0.0
        %v2661 = vmax.f32 %v2537, 0.0
        %v2662 = vmax.f32 %v2542, 0.0
        %v2663 = vmax.f32 %v2545, 0.0
        %v2664 = vmax.f32 %v2550, 0.0
        %v2665 = vmax.f32 %v2553, 0.0
        %v2666 = vmax.f32 %v2558, 0.0
        %v2667 = vmax.f32 %v2561, 0.0
        %v2668 = vmax.f32 %v2566, 0.0
        %v2669 = vmax.f32 %v2569, 0.0
        %v2670 = vmax.f32 %v2574, 0.0
        %v2671 = vmax.f32 %v2577, 0.0
        %v2672 = vmax.f32 %v2582, 0.0
        %v2673 = vmax.f32 %v2585, 0.0
        %v2674 = vmax.f32 %v2590, 0.0
        %v2675 = vmax.f32 %v2593, 0.0
        %v2676 = vmax.f32 %v2598, 0.0
        %v2677 = vmax.f32 %v2601, 0.0
        %v2678 = vmax.f32 %v2606, 0.0
        %v2679 = vmax.f32 %v2609, 0.0
        %v2680 = vmax.f32 %v2614, 0.0
        %v2681 = vmax.f32 %v2617, 0.0
        %v2682 = vmax.f32 %v2622, 0.0
        %v2683 = vmax.f32 %v2625, 0.0
        %v2684 = vmax.f32 %v2630, 0.0
        %v2685 = vmax.f32 %v2633, 0.0
        %v2686 = vmax.f32 %v2638, 0.0
        %v2687 = vmax.f32 %v2641, 0.0
        %v2688 = vmax.f32 %v2646, 0.0
        %v2689 = vmax.f32 %v2649, 0.0
        %v2690 = vmax.f32 %v2654, 0.0
        %v2691 = vmax.f32 %v2657, 0.0
        %v2692 = vpack.c.bf16 %v2661, %v2660
        %v2693 = vpack.c.bf16 %v2663, %v2662
        %v2694 = vpack.c.bf16 %v2665, %v2664
        %v2695 = vpack.c.bf16 %v2667, %v2666
        %v2696 = vpack.c.bf16 %v2669, %v2668
        %v2697 = vpack.c.bf16 %v2671, %v2670
        %v2698 = vpack.c.bf16 %v2673, %v2672
        %v2699 = vpack.c.bf16 %v2675, %v2674
        %v2700 = vpack.c.bf16 %v2677, %v2676
        %v2701 = vpack.c.bf16 %v2679, %v2678
        %v2702 = vpack.c.bf16 %v2681, %v2680
        %v2703 = vpack.c.bf16 %v2683, %v2682
        %v2704 = vpack.c.bf16 %v2685, %v2684
        %v2705 = vpack.c.bf16 %v2687, %v2686
        %v2706 = vpack.c.bf16 %v2689, %v2688
        %v2707 = vpack.c.bf16 %v2691, %v2690
        %v2708 = vld [vmem:[%s5] sm:$0x3]
        %v2709 = vld [vmem:[%s6] sm:$0x1]
        %v2711 = vlaneseq
        %v2712 = vshrl.u32 %v2711, 7
        %v2713 = vsub.s32 0, %v2712
        %v2714 = vrot.slane %v2709, %v2713
        %v2717 = vsel %vm454, %v2692, 0
        %v2720 = vsel %vm454, %v2693, 0
        %v2723 = vsel %vm454, %v2694, 0
        %v2726 = vsel %vm454, %v2695, 0
        %v2729 = vsel %vm454, %v2696, 0
        %v2732 = vsel %vm454, %v2697, 0
        %v2735 = vsel %vm454, %v2698, 0
        %v2738 = vsel %vm454, %v2699, 0
        %v2741 = vsel %vm454, %v2700, 0
        %v2744 = vsel %vm454, %v2701, 0
        %v2747 = vsel %vm454, %v2702, 0
        %v2750 = vsel %vm454, %v2703, 0
        %v2753 = vsel %vm454, %v2704, 0
        %v2756 = vsel %vm454, %v2705, 0
        %v2759 = vsel %vm454, %v2706, 0
        %v2762 = vsel %vm454, %v2707, 0
        %v2765 = vsel %vm503, %v2708, 0
        %2767 = vmatprep.subr.bf16.mxu0 0
        %2768 = vmatpush1.bf16.msra.mxu0 0
        %2769 = vmatprep.subr.bf16.mxu0 0
        %2770 = vmatpush1.bf16.msra.mxu0 0
        %2771 = vmatprep.subr.bf16.mxu0 0
        %2772 = vmatpush1.bf16.msra.mxu0 0
        %2773 = vmatprep.subr.bf16.mxu0 0
        %2774 = vmatpush1.bf16.msra.mxu0 0
        %2775 = vmatprep.subr.bf16.mxu0 0
        %2776 = vmatpush1.bf16.msra.mxu0 0
        %2777 = vmatprep.subr.bf16.mxu0 0
        %2778 = vmatpush1.bf16.msra.mxu0 0
        %2779 = vmatprep.subr.bf16.mxu0 0
        %2780 = vmatpush1.bf16.msra.mxu0 0
        %2781 = vmatprep.subr.bf16.mxu0 0
        %2782 = vmatpush1.bf16.msra.mxu0 %v2765
        %2783 = vmatprep.subr.bf16.mxu0 0
        %2784 = vmatpush2.bf16.msra.mxu0 0
        %2785 = vmatprep.subr.bf16.mxu0 0
        %2786 = vmatpush2.bf16.msra.mxu0 0
        %2787 = vmatprep.subr.bf16.mxu0 0
        %2788 = vmatpush2.bf16.msra.mxu0 0
        %2789 = vmatprep.subr.bf16.mxu0 0
        %2790 = vmatpush2.bf16.msra.mxu0 0
        %2791 = vmatprep.subr.bf16.mxu0 0
        %2792 = vmatpush2.bf16.msra.mxu0 0
        %2793 = vmatprep.subr.bf16.mxu0 0
        %2794 = vmatpush2.bf16.msra.mxu0 0
        %2795 = vmatprep.subr.bf16.mxu0 0
        %2796 = vmatpush2.bf16.msra.mxu0 0
        %2797 = vmatprep.subr.bf16.mxu0 0
        %2798 = vmatpush2.bf16.msra.mxu0 0
        %2799 = vmatprep.mubr.bf16.mxu0 0
        %2800 = vmatmul.mubr.bf16.gmra.mxu0 %v2717
        %v2801 = vpop.f32.mrf.mxu0
        %v2802 = vadd.f32 %v2714, %v2801
        %v2803 = vpop.f32.mrf.mxu0
        %v2804 = vpop.f32.mrf.mxu0
        %v2805 = vadd.f32 %v2714, %v2804
        %v2806 = vpop.f32.mrf.mxu0
        %2807 = vmatprep.mubr.bf16.mxu0 0
        %2808 = vmatmul.mubr.bf16.gmra.mxu0 %v2720
        %v2809 = vpop.f32.mrf.mxu0
        %v2810 = vadd.f32 %v2714, %v2809
        %v2811 = vpop.f32.mrf.mxu0
        %v2812 = vpop.f32.mrf.mxu0
        %v2813 = vadd.f32 %v2714, %v2812
        %v2814 = vpop.f32.mrf.mxu0
        %2815 = vmatprep.mubr.bf16.mxu0 0
        %2816 = vmatmul.mubr.bf16.gmra.mxu0 %v2723
        %v2817 = vpop.f32.mrf.mxu0
        %v2818 = vadd.f32 %v2714, %v2817
        %v2819 = vpop.f32.mrf.mxu0
        %v2820 = vpop.f32.mrf.mxu0
        %v2821 = vadd.f32 %v2714, %v2820
        %v2822 = vpop.f32.mrf.mxu0
        %2823 = vmatprep.mubr.bf16.mxu0 0
        %2824 = vmatmul.mubr.bf16.gmra.mxu0 %v2726
        %v2825 = vpop.f32.mrf.mxu0
        %v2826 = vadd.f32 %v2714, %v2825
        %v2827 = vpop.f32.mrf.mxu0
        %v2828 = vpop.f32.mrf.mxu0
        %v2829 = vadd.f32 %v2714, %v2828
        %v2830 = vpop.f32.mrf.mxu0
        %2831 = vmatprep.mubr.bf16.mxu0 0
        %2832 = vmatmul.mubr.bf16.gmra.mxu0 %v2729
        %v2833 = vpop.f32.mrf.mxu0
        %v2834 = vadd.f32 %v2714, %v2833
        %v2835 = vpop.f32.mrf.mxu0
        %v2836 = vpop.f32.mrf.mxu0
        %v2837 = vadd.f32 %v2714, %v2836
        %v2838 = vpop.f32.mrf.mxu0
        %2839 = vmatprep.mubr.bf16.mxu0 0
        %2840 = vmatmul.mubr.bf16.gmra.mxu0 %v2732
        %v2841 = vpop.f32.mrf.mxu0
        %v2842 = vadd.f32 %v2714, %v2841
        %v2843 = vpop.f32.mrf.mxu0
        %v2844 = vpop.f32.mrf.mxu0
        %v2845 = vadd.f32 %v2714, %v2844
        %v2846 = vpop.f32.mrf.mxu0
        %2847 = vmatprep.mubr.bf16.mxu0 0
        %2848 = vmatmul.mubr.bf16.gmra.mxu0 %v2735
        %v2849 = vpop.f32.mrf.mxu0
        %v2850 = vadd.f32 %v2714, %v2849
        %v2851 = vpop.f32.mrf.mxu0
        %v2852 = vpop.f32.mrf.mxu0
        %v2853 = vadd.f32 %v2714, %v2852
        %v2854 = vpop.f32.mrf.mxu0
        %2855 = vmatprep.mubr.bf16.mxu0 0
        %2856 = vmatmul.mubr.bf16.gmra.mxu0 %v2738
        %v2857 = vpop.f32.mrf.mxu0
        %v2858 = vadd.f32 %v2714, %v2857
        %v2859 = vpop.f32.mrf.mxu0
        %v2860 = vpop.f32.mrf.mxu0
        %v2861 = vadd.f32 %v2714, %v2860
        %v2862 = vpop.f32.mrf.mxu0
        %2863 = vmatprep.mubr.bf16.mxu0 0
        %2864 = vmatmul.mubr.bf16.gmra.mxu0 %v2741
        %v2865 = vpop.f32.mrf.mxu0
        %v2866 = vadd.f32 %v2714, %v2865
        %v2867 = vpop.f32.mrf.mxu0
        %v2868 = vpop.f32.mrf.mxu0
        %v2869 = vadd.f32 %v2714, %v2868
        %v2870 = vpop.f32.mrf.mxu0
        %2871 = vmatprep.mubr.bf16.mxu0 0
        %2872 = vmatmul.mubr.bf16.gmra.mxu0 %v2744
        %v2873 = vpop.f32.mrf.mxu0
        %v2874 = vadd.f32 %v2714, %v2873
        %v2875 = vpop.f32.mrf.mxu0
        %v2876 = vpop.f32.mrf.mxu0
        %v2877 = vadd.f32 %v2714, %v2876
        %v2878 = vpop.f32.mrf.mxu0
        %2879 = vmatprep.mubr.bf16.mxu0 0
        %2880 = vmatmul.mubr.bf16.gmra.mxu0 %v2747
        %v2881 = vpop.f32.mrf.mxu0
        %v2882 = vadd.f32 %v2714, %v2881
        %v2883 = vpop.f32.mrf.mxu0
        %v2884 = vpop.f32.mrf.mxu0
        %v2885 = vadd.f32 %v2714, %v2884
        %v2886 = vpop.f32.mrf.mxu0
        %2887 = vmatprep.mubr.bf16.mxu0 0
        %2888 = vmatmul.mubr.bf16.gmra.mxu0 %v2750
        %v2889 = vpop.f32.mrf.mxu0
        %v2890 = vadd.f32 %v2714, %v2889
        %v2891 = vpop.f32.mrf.mxu0
        %v2892 = vpop.f32.mrf.mxu0
        %v2893 = vadd.f32 %v2714, %v2892
        %v2894 = vpop.f32.mrf.mxu0
        %2895 = vmatprep.mubr.bf16.mxu0 0
        %2896 = vmatmul.mubr.bf16.gmra.mxu0 %v2753
        %v2897 = vpop.f32.mrf.mxu0
        %v2898 = vadd.f32 %v2714, %v2897
        %v2899 = vpop.f32.mrf.mxu0
        %v2900 = vpop.f32.mrf.mxu0
        %v2901 = vadd.f32 %v2714, %v2900
        %v2902 = vpop.f32.mrf.mxu0
        %2903 = vmatprep.mubr.bf16.mxu0 0
        %2904 = vmatmul.mubr.bf16.gmra.mxu0 %v2756
        %v2905 = vpop.f32.mrf.mxu0
        %v2906 = vadd.f32 %v2714, %v2905
        %v2907 = vpop.f32.mrf.mxu0
        %v2908 = vpop.f32.mrf.mxu0
        %v2909 = vadd.f32 %v2714, %v2908
        %v2910 = vpop.f32.mrf.mxu0
        %2911 = vmatprep.mubr.bf16.mxu0 0
        %2912 = vmatmul.mubr.bf16.gmra.mxu0 %v2759
        %v2913 = vpop.f32.mrf.mxu0
        %v2914 = vadd.f32 %v2714, %v2913
        %v2915 = vpop.f32.mrf.mxu0
        %v2916 = vpop.f32.mrf.mxu0
        %v2917 = vadd.f32 %v2714, %v2916
        %v2918 = vpop.f32.mrf.mxu0
        %2919 = vmatprep.mubr.bf16.mxu0 0
        %2920 = vmatmul.mubr.bf16.gmra.mxu0 %v2762
        %v2921 = vpop.f32.mrf.mxu0
        %v2922 = vadd.f32 %v2714, %v2921
        %v2923 = vpop.f32.mrf.mxu0
        %v2924 = vpop.f32.mrf.mxu0
        %v2925 = vadd.f32 %v2714, %v2924
        %v2926 = vpop.f32.mrf.mxu0
        %2927 = vdwg.mxu0
        %v2928 = vld [vmem:[%s330] sm:$0xf]
        %v2929 = vld [vmem:[%s330 + $0x4] sm:$0xf]
        %v2930 = vld [vmem:[%s330 + $0x8] sm:$0xf]
        %v2931 = vld [vmem:[%s330 + $0xc] sm:$0xf]
        %v2932 = vld [vmem:[%s330 + $0x10] sm:$0xf]
        %v2933 = vld [vmem:[%s330 + $0x14] sm:$0xf]
        %v2934 = vld [vmem:[%s330 + $0x18] sm:$0xf]
        %v2935 = vld [vmem:[%s330 + $0x1c] sm:$0xf]
        %v2936 = vld [vmem:[%s330 + $0x20] sm:$0xf]
        %v2937 = vld [vmem:[%s330 + $0x24] sm:$0xf]
        %v2938 = vld [vmem:[%s330 + $0x28] sm:$0xf]
        %v2939 = vld [vmem:[%s330 + $0x2c] sm:$0xf]
        %v2940 = vld [vmem:[%s330 + $0x30] sm:$0xf]
        %v2941 = vld [vmem:[%s330 + $0x34] sm:$0xf]
        %v2942 = vld [vmem:[%s330 + $0x38] sm:$0xf]
        %v2943 = vld [vmem:[%s330 + $0x3c] sm:$0xf]
        %v2944 = vld [vmem:[%s330 + $0x40] sm:$0xf]
        %v2945 = vld [vmem:[%s330 + $0x44] sm:$0xf]
        %v2946 = vld [vmem:[%s330 + $0x48] sm:$0xf]
        %v2947 = vld [vmem:[%s330 + $0x4c] sm:$0xf]
        %v2948 = vld [vmem:[%s330 + $0x50] sm:$0xf]
        %v2949 = vld [vmem:[%s330 + $0x54] sm:$0xf]
        %v2950 = vld [vmem:[%s330 + $0x58] sm:$0xf]
        %v2951 = vld [vmem:[%s330 + $0x5c] sm:$0xf]
        %v2952 = vld [vmem:[%s330 + $0x60] sm:$0xf]
        %v2953 = vld [vmem:[%s330 + $0x64] sm:$0xf]
        %v2954 = vld [vmem:[%s330 + $0x68] sm:$0xf]
        %v2955 = vld [vmem:[%s330 + $0x6c] sm:$0xf]
        %v2956 = vld [vmem:[%s330 + $0x70] sm:$0xf]
        %v2957 = vld [vmem:[%s330 + $0x74] sm:$0xf]
        %v2958 = vld [vmem:[%s330 + $0x78] sm:$0xf]
        %v2959 = vld [vmem:[%s330 + $0x7c] sm:$0xf]
        %v2960 = vld [vmem:[%s7] sm:$0x3]
        %v2961 = vld [vmem:[%s8] sm:$0x1]
        %v2963 = vlaneseq
        %v2964 = vshrl.u32 %v2963, 7
        %v2965 = vsub.s32 0, %v2964
        %v2966 = vrot.slane %v2961, %v2965
        %v3000 = vunpack.c.l.b16 %v2928
        %v3001 = vunpack.c.l.b16 %v2929
        %v3002 = vunpack.c.l.b16 %v2930
        %v3003 = vunpack.c.l.b16 %v2931
        %v3004 = vunpack.c.l.b16 %v2932
        %v3005 = vunpack.c.l.b16 %v2933
        %v3006 = vunpack.c.l.b16 %v2934
        %v3007 = vunpack.c.l.b16 %v2935
        %v3008 = vunpack.c.l.b16 %v2936
        %v3009 = vunpack.c.l.b16 %v2937
        %v3010 = vunpack.c.l.b16 %v2938
        %v3011 = vunpack.c.l.b16 %v2939
        %v3012 = vunpack.c.l.b16 %v2940
        %v3013 = vunpack.c.l.b16 %v2941
        %v3014 = vunpack.c.l.b16 %v2942
        %v3015 = vunpack.c.l.b16 %v2943
        %v3016 = vunpack.c.l.b16 %v2944
        %v3017 = vunpack.c.l.b16 %v2945
        %v3018 = vunpack.c.l.b16 %v2946
        %v3019 = vunpack.c.l.b16 %v2947
        %v3020 = vunpack.c.l.b16 %v2948
        %v3021 = vunpack.c.l.b16 %v2949
        %v3022 = vunpack.c.l.b16 %v2950
        %v3023 = vunpack.c.l.b16 %v2951
        %v3024 = vunpack.c.l.b16 %v2952
        %v3025 = vunpack.c.l.b16 %v2953
        %v3026 = vunpack.c.l.b16 %v2954
        %v3027 = vunpack.c.l.b16 %v2955
        %v3028 = vunpack.c.l.b16 %v2956
        %v3029 = vunpack.c.l.b16 %v2957
        %v3030 = vunpack.c.l.b16 %v2958
        %v3031 = vunpack.c.l.b16 %v2959
        %v3032 = vpack.c.b16 %v3001, %v3000
        %v3033 = vpack.c.b16 %v3003, %v3002
        %v3034 = vpack.c.b16 %v3005, %v3004
        %v3035 = vpack.c.b16 %v3007, %v3006
        %v3036 = vpack.c.b16 %v3009, %v3008
        %v3037 = vpack.c.b16 %v3011, %v3010
        %v3038 = vpack.c.b16 %v3013, %v3012
        %v3039 = vpack.c.b16 %v3015, %v3014
        %v3040 = vpack.c.b16 %v3017, %v3016
        %v3041 = vpack.c.b16 %v3019, %v3018
        %v3042 = vpack.c.b16 %v3021, %v3020
        %v3043 = vpack.c.b16 %v3023, %v3022
        %v3044 = vpack.c.b16 %v3025, %v3024
        %v3045 = vpack.c.b16 %v3027, %v3026
        %v3046 = vpack.c.b16 %v3029, %v3028
        %v3047 = vpack.c.b16 %v3031, %v3030
        %v3049 = vsel %vm454, %v3032, 0
        %v3052 = vsel %vm454, %v3033, 0
        %v3055 = vsel %vm454, %v3034, 0
        %v3058 = vsel %vm454, %v3035, 0
        %v3061 = vsel %vm454, %v3036, 0
        %v3064 = vsel %vm454, %v3037, 0
        %v3067 = vsel %vm454, %v3038, 0
        %v3070 = vsel %vm454, %v3039, 0
        %v3073 = vsel %vm454, %v3040, 0
        %v3076 = vsel %vm454, %v3041, 0
        %v3079 = vsel %vm454, %v3042, 0
        %v3082 = vsel %vm454, %v3043, 0
        %v3085 = vsel %vm454, %v3044, 0
        %v3088 = vsel %vm454, %v3045, 0
        %v3091 = vsel %vm454, %v3046, 0
        %v3094 = vsel %vm454, %v3047, 0
        %v3097 = vsel %vm503, %v2960, 0
        %3099 = vmatprep.subr.bf16.mxu0 0
        %3100 = vmatpush1.bf16.msra.mxu0 0
        %3101 = vmatprep.subr.bf16.mxu0 0
        %3102 = vmatpush1.bf16.msra.mxu0 0
        %3103 = vmatprep.subr.bf16.mxu0 0
        %3104 = vmatpush1.bf16.msra.mxu0 0
        %3105 = vmatprep.subr.bf16.mxu0 0
        %3106 = vmatpush1.bf16.msra.mxu0 0
        %3107 = vmatprep.subr.bf16.mxu0 0
        %3108 = vmatpush1.bf16.msra.mxu0 0
        %3109 = vmatprep.subr.bf16.mxu0 0
        %3110 = vmatpush1.bf16.msra.mxu0 0
        %3111 = vmatprep.subr.bf16.mxu0 0
        %3112 = vmatpush1.bf16.msra.mxu0 0
        %3113 = vmatprep.subr.bf16.mxu0 0
        %3114 = vmatpush1.bf16.msra.mxu0 %v3097
        %3115 = vmatprep.subr.bf16.mxu0 0
        %3116 = vmatpush2.bf16.msra.mxu0 0
        %3117 = vmatprep.subr.bf16.mxu0 0
        %3118 = vmatpush2.bf16.msra.mxu0 0
        %3119 = vmatprep.subr.bf16.mxu0 0
        %3120 = vmatpush2.bf16.msra.mxu0 0
        %3121 = vmatprep.subr.bf16.mxu0 0
        %3122 = vmatpush2.bf16.msra.mxu0 0
        %3123 = vmatprep.subr.bf16.mxu0 0
        %3124 = vmatpush2.bf16.msra.mxu0 0
        %3125 = vmatprep.subr.bf16.mxu0 0
        %3126 = vmatpush2.bf16.msra.mxu0 0
        %3127 = vmatprep.subr.bf16.mxu0 0
        %3128 = vmatpush2.bf16.msra.mxu0 0
        %3129 = vmatprep.subr.bf16.mxu0 0
        %3130 = vmatpush2.bf16.msra.mxu0 0
        %3131 = vmatprep.mubr.bf16.mxu0 0
        %3132 = vmatmul.mubr.bf16.gmra.mxu0 %v3049
        %v3133 = vpop.f32.mrf.mxu0
        %v3134 = vadd.f32 %v2966, %v3133
        %v3135 = vpop.f32.mrf.mxu0
        %v3136 = vpop.f32.mrf.mxu0
        %v3137 = vadd.f32 %v2966, %v3136
        %v3138 = vpop.f32.mrf.mxu0
        %3139 = vmatprep.mubr.bf16.mxu0 0
        %3140 = vmatmul.mubr.bf16.gmra.mxu0 %v3052
        %v3141 = vpop.f32.mrf.mxu0
        %v3142 = vadd.f32 %v2966, %v3141
        %v3143 = vpop.f32.mrf.mxu0
        %v3144 = vpop.f32.mrf.mxu0
        %v3145 = vadd.f32 %v2966, %v3144
        %v3146 = vpop.f32.mrf.mxu0
        %3147 = vmatprep.mubr.bf16.mxu0 0
        %3148 = vmatmul.mubr.bf16.gmra.mxu0 %v3055
        %v3149 = vpop.f32.mrf.mxu0
        %v3150 = vadd.f32 %v2966, %v3149
        %v3151 = vpop.f32.mrf.mxu0
        %v3152 = vpop.f32.mrf.mxu0
        %v3153 = vadd.f32 %v2966, %v3152
        %v3154 = vpop.f32.mrf.mxu0
        %3155 = vmatprep.mubr.bf16.mxu0 0
        %3156 = vmatmul.mubr.bf16.gmra.mxu0 %v3058
        %v3157 = vpop.f32.mrf.mxu0
        %v3158 = vadd.f32 %v2966, %v3157
        %v3159 = vpop.f32.mrf.mxu0
        %v3160 = vpop.f32.mrf.mxu0
        %v3161 = vadd.f32 %v2966, %v3160
        %v3162 = vpop.f32.mrf.mxu0
        %3163 = vmatprep.mubr.bf16.mxu0 0
        %3164 = vmatmul.mubr.bf16.gmra.mxu0 %v3061
        %v3165 = vpop.f32.mrf.mxu0
        %v3166 = vadd.f32 %v2966, %v3165
        %v3167 = vpop.f32.mrf.mxu0
        %v3168 = vpop.f32.mrf.mxu0
        %v3169 = vadd.f32 %v2966, %v3168
        %v3170 = vpop.f32.mrf.mxu0
        %3171 = vmatprep.mubr.bf16.mxu0 0
        %3172 = vmatmul.mubr.bf16.gmra.mxu0 %v3064
        %v3173 = vpop.f32.mrf.mxu0
        %v3174 = vadd.f32 %v2966, %v3173
        %v3175 = vpop.f32.mrf.mxu0
        %v3176 = vpop.f32.mrf.mxu0
        %v3177 = vadd.f32 %v2966, %v3176
        %v3178 = vpop.f32.mrf.mxu0
        %3179 = vmatprep.mubr.bf16.mxu0 0
        %3180 = vmatmul.mubr.bf16.gmra.mxu0 %v3067
        %v3181 = vpop.f32.mrf.mxu0
        %v3182 = vadd.f32 %v2966, %v3181
        %v3183 = vpop.f32.mrf.mxu0
        %v3184 = vpop.f32.mrf.mxu0
        %v3185 = vadd.f32 %v2966, %v3184
        %v3186 = vpop.f32.mrf.mxu0
        %3187 = vmatprep.mubr.bf16.mxu0 0
        %3188 = vmatmul.mubr.bf16.gmra.mxu0 %v3070
        %v3189 = vpop.f32.mrf.mxu0
        %v3190 = vadd.f32 %v2966, %v3189
        %v3191 = vpop.f32.mrf.mxu0
        %v3192 = vpop.f32.mrf.mxu0
        %v3193 = vadd.f32 %v2966, %v3192
        %v3194 = vpop.f32.mrf.mxu0
        %3195 = vmatprep.mubr.bf16.mxu0 0
        %3196 = vmatmul.mubr.bf16.gmra.mxu0 %v3073
        %v3197 = vpop.f32.mrf.mxu0
        %v3198 = vadd.f32 %v2966, %v3197
        %v3199 = vpop.f32.mrf.mxu0
        %v3200 = vpop.f32.mrf.mxu0
        %v3201 = vadd.f32 %v2966, %v3200
        %v3202 = vpop.f32.mrf.mxu0
        %3203 = vmatprep.mubr.bf16.mxu0 0
        %3204 = vmatmul.mubr.bf16.gmra.mxu0 %v3076
        %v3205 = vpop.f32.mrf.mxu0
        %v3206 = vadd.f32 %v2966, %v3205
        %v3207 = vpop.f32.mrf.mxu0
        %v3208 = vpop.f32.mrf.mxu0
        %v3209 = vadd.f32 %v2966, %v3208
        %v3210 = vpop.f32.mrf.mxu0
        %3211 = vmatprep.mubr.bf16.mxu0 0
        %3212 = vmatmul.mubr.bf16.gmra.mxu0 %v3079
        %v3213 = vpop.f32.mrf.mxu0
        %v3214 = vadd.f32 %v2966, %v3213
        %v3215 = vpop.f32.mrf.mxu0
        %v3216 = vpop.f32.mrf.mxu0
        %v3217 = vadd.f32 %v2966, %v3216
        %v3218 = vpop.f32.mrf.mxu0
        %3219 = vmatprep.mubr.bf16.mxu0 0
        %3220 = vmatmul.mubr.bf16.gmra.mxu0 %v3082
        %v3221 = vpop.f32.mrf.mxu0
        %v3222 = vadd.f32 %v2966, %v3221
        %v3223 = vpop.f32.mrf.mxu0
        %v3224 = vpop.f32.mrf.mxu0
        %v3225 = vadd.f32 %v2966, %v3224
        %v3226 = vpop.f32.mrf.mxu0
        %3227 = vmatprep.mubr.bf16.mxu0 0
        %3228 = vmatmul.mubr.bf16.gmra.mxu0 %v3085
        %v3229 = vpop.f32.mrf.mxu0
        %v3230 = vadd.f32 %v2966, %v3229
        %v3231 = vpop.f32.mrf.mxu0
        %v3232 = vpop.f32.mrf.mxu0
        %v3233 = vadd.f32 %v2966, %v3232
        %v3234 = vpop.f32.mrf.mxu0
        %3235 = vmatprep.mubr.bf16.mxu0 0
        %3236 = vmatmul.mubr.bf16.gmra.mxu0 %v3088
        %v3237 = vpop.f32.mrf.mxu0
        %v3238 = vadd.f32 %v2966, %v3237
        %v3239 = vpop.f32.mrf.mxu0
        %v3240 = vpop.f32.mrf.mxu0
        %v3241 = vadd.f32 %v2966, %v3240
        %v3242 = vpop.f32.mrf.mxu0
        %3243 = vmatprep.mubr.bf16.mxu0 0
        %3244 = vmatmul.mubr.bf16.gmra.mxu0 %v3091
        %v3245 = vpop.f32.mrf.mxu0
        %v3246 = vadd.f32 %v2966, %v3245
        %v3247 = vpop.f32.mrf.mxu0
        %v3248 = vpop.f32.mrf.mxu0
        %v3249 = vadd.f32 %v2966, %v3248
        %v3250 = vpop.f32.mrf.mxu0
        %3251 = vmatprep.mubr.bf16.mxu0 0
        %3252 = vmatmul.mubr.bf16.gmra.mxu0 %v3094
        %v3253 = vpop.f32.mrf.mxu0
        %v3254 = vadd.f32 %v2966, %v3253
        %v3255 = vpop.f32.mrf.mxu0
        %v3256 = vpop.f32.mrf.mxu0
        %v3257 = vadd.f32 %v2966, %v3256
        %v3258 = vpop.f32.mrf.mxu0
        %3259 = vdwg.mxu0
        %v3260 = vadd.f32 %v2802, %v3134
        %v3261 = vadd.f32 %v2805, %v3137
        %v3262 = vadd.f32 %v2810, %v3142
        %v3263 = vadd.f32 %v2813, %v3145
        %v3264 = vadd.f32 %v2818, %v3150
        %v3265 = vadd.f32 %v2821, %v3153
        %v3266 = vadd.f32 %v2826, %v3158
        %v3267 = vadd.f32 %v2829, %v3161
        %v3268 = vadd.f32 %v2834, %v3166
        %v3269 = vadd.f32 %v2837, %v3169
        %v3270 = vadd.f32 %v2842, %v3174
        %v3271 = vadd.f32 %v2845, %v3177
        %v3272 = vadd.f32 %v2850, %v3182
        %v3273 = vadd.f32 %v2853, %v3185
        %v3274 = vadd.f32 %v2858, %v3190
        %v3275 = vadd.f32 %v2861, %v3193
        %v3276 = vadd.f32 %v2866, %v3198
        %v3277 = vadd.f32 %v2869, %v3201
        %v3278 = vadd.f32 %v2874, %v3206
        %v3279 = vadd.f32 %v2877, %v3209
        %v3280 = vadd.f32 %v2882, %v3214
        %v3281 = vadd.f32 %v2885, %v3217
        %v3282 = vadd.f32 %v2890, %v3222
        %v3283 = vadd.f32 %v2893, %v3225
        %v3284 = vadd.f32 %v2898, %v3230
        %v3285 = vadd.f32 %v2901, %v3233
        %v3286 = vadd.f32 %v2906, %v3238
        %v3287 = vadd.f32 %v2909, %v3241
        %v3288 = vadd.f32 %v2914, %v3246
        %v3289 = vadd.f32 %v2917, %v3249
        %v3290 = vadd.f32 %v2922, %v3254
        %v3291 = vadd.f32 %v2925, %v3257
        %v3292 = vmax.f32 %v3260, 0.0
        %v3293 = vmax.f32 %v3261, 0.0
        %v3294 = vmax.f32 %v3262, 0.0
        %v3295 = vmax.f32 %v3263, 0.0
        %v3296 = vmax.f32 %v3264, 0.0
        %v3297 = vmax.f32 %v3265, 0.0
        %v3298 = vmax.f32 %v3266, 0.0
        %v3299 = vmax.f32 %v3267, 0.0
        %v3300 = vmax.f32 %v3268, 0.0
        %v3301 = vmax.f32 %v3269, 0.0
        %v3302 = vmax.f32 %v3270, 0.0
        %v3303 = vmax.f32 %v3271, 0.0
        %v3304 = vmax.f32 %v3272, 0.0
        %v3305 = vmax.f32 %v3273, 0.0
        %v3306 = vmax.f32 %v3274, 0.0
        %v3307 = vmax.f32 %v3275, 0.0
        %v3308 = vmax.f32 %v3276, 0.0
        %v3309 = vmax.f32 %v3277, 0.0
        %v3310 = vmax.f32 %v3278, 0.0
        %v3311 = vmax.f32 %v3279, 0.0
        %v3312 = vmax.f32 %v3280, 0.0
        %v3313 = vmax.f32 %v3281, 0.0
        %v3314 = vmax.f32 %v3282, 0.0
        %v3315 = vmax.f32 %v3283, 0.0
        %v3316 = vmax.f32 %v3284, 0.0
        %v3317 = vmax.f32 %v3285, 0.0
        %v3318 = vmax.f32 %v3286, 0.0
        %v3319 = vmax.f32 %v3287, 0.0
        %v3320 = vmax.f32 %v3288, 0.0
        %v3321 = vmax.f32 %v3289, 0.0
        %v3322 = vmax.f32 %v3290, 0.0
        %v3323 = vmax.f32 %v3291, 0.0
        %v3324 = vpack.c.bf16 %v3293, %v3292
        %v3325 = vpack.c.bf16 %v3295, %v3294
        %v3326 = vpack.c.bf16 %v3297, %v3296
        %v3327 = vpack.c.bf16 %v3299, %v3298
        %v3328 = vpack.c.bf16 %v3301, %v3300
        %v3329 = vpack.c.bf16 %v3303, %v3302
        %v3330 = vpack.c.bf16 %v3305, %v3304
        %v3331 = vpack.c.bf16 %v3307, %v3306
        %v3332 = vpack.c.bf16 %v3309, %v3308
        %v3333 = vpack.c.bf16 %v3311, %v3310
        %v3334 = vpack.c.bf16 %v3313, %v3312
        %v3335 = vpack.c.bf16 %v3315, %v3314
        %v3336 = vpack.c.bf16 %v3317, %v3316
        %v3337 = vpack.c.bf16 %v3319, %v3318
        %v3338 = vpack.c.bf16 %v3321, %v3320
        %v3339 = vpack.c.bf16 %v3323, %v3322
        %v3356 = vunpack.c.l.b16 %v3324
        %v3357 = vunpack.c.h.b16 %v3324
        %v3358 = vunpack.c.l.b16 %v3325
        %v3359 = vunpack.c.h.b16 %v3325
        %v3360 = vunpack.c.l.b16 %v3326
        %v3361 = vunpack.c.h.b16 %v3326
        %v3362 = vunpack.c.l.b16 %v3327
        %v3363 = vunpack.c.h.b16 %v3327
        %v3364 = vunpack.c.l.b16 %v3328
        %v3365 = vunpack.c.h.b16 %v3328
        %v3366 = vunpack.c.l.b16 %v3329
        %v3367 = vunpack.c.h.b16 %v3329
        %v3368 = vunpack.c.l.b16 %v3330
        %v3369 = vunpack.c.h.b16 %v3330
        %v3370 = vunpack.c.l.b16 %v3331
        %v3371 = vunpack.c.h.b16 %v3331
        %v3372 = vunpack.c.l.b16 %v3332
        %v3373 = vunpack.c.h.b16 %v3332
        %v3374 = vunpack.c.l.b16 %v3333
        %v3375 = vunpack.c.h.b16 %v3333
        %v3376 = vunpack.c.l.b16 %v3334
        %v3377 = vunpack.c.h.b16 %v3334
        %v3378 = vunpack.c.l.b16 %v3335
        %v3379 = vunpack.c.h.b16 %v3335
        %v3380 = vunpack.c.l.b16 %v3336
        %v3381 = vunpack.c.h.b16 %v3336
        %v3382 = vunpack.c.l.b16 %v3337
        %v3383 = vunpack.c.h.b16 %v3337
        %v3384 = vunpack.c.l.b16 %v3338
        %v3385 = vunpack.c.h.b16 %v3338
        %v3386 = vunpack.c.l.b16 %v3339
        %v3387 = vunpack.c.h.b16 %v3339
        %v3388 = vpack.c.b16 %v3356, %v3356
        %v3389 = vpack.c.b16 %v3357, %v3357
        %v3390 = vpack.c.b16 %v3358, %v3358
        %v3391 = vpack.c.b16 %v3359, %v3359
        %v3392 = vpack.c.b16 %v3360, %v3360
        %v3393 = vpack.c.b16 %v3361, %v3361
        %v3394 = vpack.c.b16 %v3362, %v3362
        %v3395 = vpack.c.b16 %v3363, %v3363
        %v3396 = vpack.c.b16 %v3364, %v3364
        %v3397 = vpack.c.b16 %v3365, %v3365
        %v3398 = vpack.c.b16 %v3366, %v3366
        %v3399 = vpack.c.b16 %v3367, %v3367
        %v3400 = vpack.c.b16 %v3368, %v3368
        %v3401 = vpack.c.b16 %v3369, %v3369
        %v3402 = vpack.c.b16 %v3370, %v3370
        %v3403 = vpack.c.b16 %v3371, %v3371
        %v3404 = vpack.c.b16 %v3372, %v3372
        %v3405 = vpack.c.b16 %v3373, %v3373
        %v3406 = vpack.c.b16 %v3374, %v3374
        %v3407 = vpack.c.b16 %v3375, %v3375
        %v3408 = vpack.c.b16 %v3376, %v3376
        %v3409 = vpack.c.b16 %v3377, %v3377
        %v3410 = vpack.c.b16 %v3378, %v3378
        %v3411 = vpack.c.b16 %v3379, %v3379
        %v3412 = vpack.c.b16 %v3380, %v3380
        %v3413 = vpack.c.b16 %v3381, %v3381
        %v3414 = vpack.c.b16 %v3382, %v3382
        %v3415 = vpack.c.b16 %v3383, %v3383
        %v3416 = vpack.c.b16 %v3384, %v3384
        %v3417 = vpack.c.b16 %v3385, %v3385
        %v3418 = vpack.c.b16 %v3386, %v3386
        %v3419 = vpack.c.b16 %v3387, %v3387
        %vm3452 = vcmask 125952
        %3453 = vst.msk [vmem:[%s325] sm:$0xf] %vm3452, %v3388
        %3454 = vst.msk [vmem:[%s325 + $0x4] sm:$0xf] %vm3452, %v3389
        %3455 = vst.msk [vmem:[%s325 + $0x8] sm:$0xf] %vm3452, %v3390
        %3456 = vst.msk [vmem:[%s325 + $0xc] sm:$0xf] %vm3452, %v3391
        %3457 = vst.msk [vmem:[%s325 + $0x10] sm:$0xf] %vm3452, %v3392
        %3458 = vst.msk [vmem:[%s325 + $0x14] sm:$0xf] %vm3452, %v3393
        %3459 = vst.msk [vmem:[%s325 + $0x18] sm:$0xf] %vm3452, %v3394
        %3460 = vst.msk [vmem:[%s325 + $0x1c] sm:$0xf] %vm3452, %v3395
        %3461 = vst.msk [vmem:[%s325 + $0x20] sm:$0xf] %vm3452, %v3396
        %3462 = vst.msk [vmem:[%s325 + $0x24] sm:$0xf] %vm3452, %v3397
        %3463 = vst.msk [vmem:[%s325 + $0x28] sm:$0xf] %vm3452, %v3398
        %3464 = vst.msk [vmem:[%s325 + $0x2c] sm:$0xf] %vm3452, %v3399
        %3465 = vst.msk [vmem:[%s325 + $0x30] sm:$0xf] %vm3452, %v3400
        %3466 = vst.msk [vmem:[%s325 + $0x34] sm:$0xf] %vm3452, %v3401
        %3467 = vst.msk [vmem:[%s325 + $0x38] sm:$0xf] %vm3452, %v3402
        %3468 = vst.msk [vmem:[%s325 + $0x3c] sm:$0xf] %vm3452, %v3403
        %3469 = vst.msk [vmem:[%s325 + $0x40] sm:$0xf] %vm3452, %v3404
        %3470 = vst.msk [vmem:[%s325 + $0x44] sm:$0xf] %vm3452, %v3405
        %3471 = vst.msk [vmem:[%s325 + $0x48] sm:$0xf] %vm3452, %v3406
        %3472 = vst.msk [vmem:[%s325 + $0x4c] sm:$0xf] %vm3452, %v3407
        %3473 = vst.msk [vmem:[%s325 + $0x50] sm:$0xf] %vm3452, %v3408
        %3474 = vst.msk [vmem:[%s325 + $0x54] sm:$0xf] %vm3452, %v3409
        %3475 = vst.msk [vmem:[%s325 + $0x58] sm:$0xf] %vm3452, %v3410
        %3476 = vst.msk [vmem:[%s325 + $0x5c] sm:$0xf] %vm3452, %v3411
        %3477 = vst.msk [vmem:[%s325 + $0x60] sm:$0xf] %vm3452, %v3412
        %3478 = vst.msk [vmem:[%s325 + $0x64] sm:$0xf] %vm3452, %v3413
        %3479 = vst.msk [vmem:[%s325 + $0x68] sm:$0xf] %vm3452, %v3414
        %3480 = vst.msk [vmem:[%s325 + $0x6c] sm:$0xf] %vm3452, %v3415
        %3481 = vst.msk [vmem:[%s325 + $0x70] sm:$0xf] %vm3452, %v3416
        %3482 = vst.msk [vmem:[%s325 + $0x74] sm:$0xf] %vm3452, %v3417
        %3483 = vst.msk [vmem:[%s325 + $0x78] sm:$0xf] %vm3452, %v3418
        %3484 = vst.msk [vmem:[%s325 + $0x7c] sm:$0xf] %vm3452, %v3419
        %s3485 = sand.u32 %s225, 1
        %s3486 = scalar_lea.sflag [#allocation4], %s3485
        %s3487 = sand.u32 %s225, 1
        %s3488 = smul.addr %s3487, 128
        %s3489 = scalar_lea.vmem [#allocation3], %s3488
        // Predicated region
        $region57: #{tpu_custom_call.1} parent=55 // pred_check
          %p3490 = pneg %p235
        $region58: #{tpu_custom_call.1} parent=55 // pred_check_branch
          %3492 = sbr.rel (%p3490) target = $region60
        $region59: #{tpu_custom_call.1} parent=55 // pred_region
          %s3494 = ssub.s32 2048, 2048
          %3495 = vsyncadd %s3486, %s3494
          %s3496 = smul.addr %s23, 32
          %s3497 = smul.addr %s3496, 64
          %s3498 = scalar_lea.hbm %s9, %s3497
          %s3499 = sshll.u32 %s3489, 4
          %s3500 = int_to_ptr.vmem [resolvable:$true] %s3499
          %3505 = dma.vmem_to_hbm [thread:$0]  %s3500, 2048, %s3498, %s3486, 64, 64, 4
        $region60: #{tpu_custom_call.1} parent=55 // pred_fallthru
          _
      $region56: #{tpu_custom_call.1} parent=5 // pred_fallthru
        _
      %p3506 = scmp.le.s32.totalorder 2, %s18
      // Predicated region
      $region61: #{tpu_custom_call.1} parent=5 // pred_check
        %p3507 = pneg %p3506
      $region62: #{tpu_custom_call.1} parent=5 // pred_check_branch
        %3509 = sbr.rel (%p3507) target = $region64
      $region63: #{tpu_custom_call.1} parent=5 // pred_region
        %s3510 = ssub.s32 %s18, 2
        // Predicated region
        $region65: #{tpu_custom_call.1} parent=63 // pred_check
          %p3511 = pneg %p241
        $region66: #{tpu_custom_call.1} parent=63 // pred_check_branch
          %3513 = sbr.rel (%p3511) target = $region68
        $region67: #{tpu_custom_call.1} parent=63 // pred_region
          %s3514 = sand.u32 %s226, 1
          %s3515 = scalar_lea.sflag [#allocation4], %s3514
          %s3516 = sand.u32 %s226, 1
          %s3517 = smul.addr %s3516, 128
          %s3518 = scalar_lea.vmem [#allocation3], %s3517
          %3519 = dma.done %s3515, 2048
        $region68: #{tpu_custom_call.1} parent=63 // pred_fallthru
          _
      $region64: #{tpu_custom_call.1} parent=5 // pred_fallthru
        _
    $region6: #{tpu_custom_call.1} parent=1 // loop_footer
      %s22 = sadd.s32 1, %s18
    $region7: #{tpu_custom_call.1} parent=1 // loop_footer_branch
      %17 = sbr.rel target = $region3
    $region8: #{tpu_custom_call.1} parent=1 // loop_exit
      _
    %3520 = vsyncpa [#allocation4], 1
    %s3521 = scalar_lea.sflag [#allocation4], 1
    %3522 = vsyncpa %s3521, 1

</llo_original>
